<compile_context>
chip_gen: v7x
topology: tpu7x:2x2x1
jax: 0.10.0
libtpu: 0.0.40
codegen_flags: <defaults>
</compile_context>

<pallas_src>
import functools

import numpy as np
import jax
import jax.numpy as jnp
from jax.experimental import pallas as pl
from jax.experimental.pallas import tpu as pltpu

NEG_SLOPE = 0.01   # nn.LeakyReLU() default
BN_EPS = 1e-5
DILATIONS = (2, 4, 8)


def _leaky(y):
    return jnp.where(y >= 0, y, NEG_SLOPE * y)


def _conv_taps(dilation, D, H, W):
    """Static list of (kz, ky, kx, oz, oy, ox): 3x3x3 taps whose dilated window
    overlaps the valid (unpadded) volume.  All-padding taps are dropped."""
    taps = []
    for kz in range(3):
        for ky in range(3):
            for kx in range(3):
                oz = (kz - 1) * dilation
                oy = (ky - 1) * dilation
                ox = (kx - 1) * dilation
                if abs(oz) < D and abs(oy) < H and abs(ox) < W:
                    taps.append((kz, ky, kx, oz, oy, ox))
    return taps


def _tap_masks(taps, D, H, W):
    """(n_taps, D*H*W) f32 masks: 1.0 where the shifted read is in-bounds."""
    z, y, x = np.meshgrid(np.arange(D), np.arange(H), np.arange(W), indexing="ij")
    rows = []
    for (_, _, _, oz, oy, ox) in taps:
        m = ((z + oz >= 0) & (z + oz < D) &
             (y + oy >= 0) & (y + oy < H) &
             (x + ox >= 0) & (x + ox < W))
        rows.append(m.reshape(-1))
    return jnp.asarray(np.stack(rows, 0).astype(np.float32))


def _dilated_block_kernel(x_ref,
                          w1_ref, s1_ref, b1_ref, m1_ref,
                          w2_ref, s2_ref, b2_ref, m2_ref,
                          w3_ref, s3_ref, b3_ref, m3_ref,
                          o_ref, xcol_ref, *, dims, taps_per_layer):
    D, H, W, Ci = dims
    DHW = D * H * W
    x = x_ref[0]                           # (Ci, DHW), lane-dense

    def conv_bn_act(act, w_ref, s_ref, b_ref, m_ref, taps):
        # im2col: shifted + masked copies of `act`, stacked along sublanes.
        cols = []
        for t, (_, _, _, oz, oy, ox) in enumerate(taps):
            if oz == 0 and oy == 0 and ox == 0:
                cols.append(act)                       # center tap: no shift/mask
                continue
            shift = (-(oz * H * W + oy * W + ox)) % DHW
            rolled = pltpu.roll(act, shift, axis=1)    # XLU lane rotation
            cols.append(rolled * m_ref[t:t + 1, :])    # zero the padded reads
        if len(cols) == 1:
            xcol = cols[0]                             # (Ci, DHW)
        else:
            for t, c in enumerate(cols):               # build Xcol once in VMEM
                xcol_ref[t * Ci:(t + 1) * Ci, :] = c
            xcol = xcol_ref[:len(cols) * Ci, :]        # (K, DHW)
        # Single lane-dense GEMM on the MXU: (Co, K) @ (K, DHW) -> (Co, DHW).
        y = jnp.dot(w_ref[...], xcol, preferred_element_type=jnp.float32)
        y = y * s_ref[...] + b_ref[...]                # folded eval-mode BatchNorm
        return _leaky(y)

    h = conv_bn_act(x, w1_ref, s1_ref, b1_ref, m1_ref, taps_per_layer[0])
    h = conv_bn_act(h, w2_ref, s2_ref, b2_ref, m2_ref, taps_per_layer[1])
    h = conv_bn_act(h, w3_ref, s3_ref, b3_ref, m3_ref, taps_per_layer[2])
    o_ref[0] = _leaky(h + x).astype(o_ref.dtype)       # residual + final LeakyReLU


def fold_conv_bn(w_pt, b_conv, gamma, beta, run_mean, run_var, taps):
    """PyTorch conv weight (Co,Ci,3,3,3) + eval-mode BN -> packed GEMM params."""
    scale = gamma / jnp.sqrt(run_var + BN_EPS)
    bias = (b_conv - run_mean) * scale + beta
    wmat = jnp.concatenate(
        [w_pt[:, :, kz, ky, kx] for (kz, ky, kx, _, _, _) in taps], axis=1)
    return wmat, scale.reshape(-1, 1), bias.reshape(-1, 1)


def _full_spec(arr):
    nd = arr.ndim
    return pl.BlockSpec(arr.shape, lambda *_: (0,) * nd)


def dilated_block(x, params):
    """x: (N, C, D, H, W) float32 (PyTorch NCDHW).  params: 3x (wmat, scale, bias)."""
    N, C, D, H, W = x.shape
    DHW = D * H * W
    taps_per_layer = tuple(_conv_taps(d, D, H, W) for d in DILATIONS)
    masks = [_tap_masks(t, D, H, W) for t in taps_per_layer]
    max_k = max(len(t) for t in taps_per_layer) * C

    x2 = x.reshape(N, C, DHW)
    (w1, s1, b1), (w2, s2, b2), (w3, s3, b3) = params
    m1, m2, m3 = masks

    kernel = functools.partial(
        _dilated_block_kernel, dims=(D, H, W, C), taps_per_layer=taps_per_layer)

    out = pl.pallas_call(
        kernel,
        out_shape=jax.ShapeDtypeStruct((N, C, DHW), x.dtype),
        grid_spec=pltpu.PrefetchScalarGridSpec(
            num_scalar_prefetch=0,
            grid=(N,),
            in_specs=[
                pl.BlockSpec((1, C, DHW), lambda n: (n, 0, 0)),
                _full_spec(w1), _full_spec(s1), _full_spec(b1), _full_spec(m1),
                _full_spec(w2), _full_spec(s2), _full_spec(b2), _full_spec(m2),
                _full_spec(w3), _full_spec(s3), _full_spec(b3), _full_spec(m3),
            ],
            out_specs=pl.BlockSpec((1, C, DHW), lambda n: (n, 0, 0)),
            scratch_shapes=[pltpu.VMEM((max_k, DHW), jnp.float32)],   # im2col buffer
        ),
        compiler_params=pltpu.CompilerParams(
            dimension_semantics=("parallel",)),   # batch axis -> 2 TCs on v7x
    )(x2, w1, s1, b1, m1, w2, s2, b2, m2, w3, s3, b3, m3)
    return out.reshape(N, C, D, H, W)


# ----------------------------- reference (plain JAX) -------------------------
def _ref_conv_bn_act(x, w_pt, scale, bias, dilation):
    y = jax.lax.conv_general_dilated(
        x, w_pt, window_strides=(1, 1, 1),
        padding=[(dilation, dilation)] * 3,
        rhs_dilation=(dilation,) * 3,
        dimension_numbers=('NCDHW', 'OIDHW', 'NCDHW'),
        precision=jax.lax.Precision.HIGHEST)
    y = y * scale.reshape(1, -1, 1, 1, 1) + bias.reshape(1, -1, 1, 1, 1)
    return _leaky(y)


def dilated_block_ref(x, ref_params):
    identity = x
    out = _ref_conv_bn_act(x, *ref_params[0], dilation=2)
    out = _ref_conv_bn_act(out, *ref_params[1], dilation=4)
    out = _ref_conv_bn_act(out, *ref_params[2], dilation=8)
    return _leaky(identity + out)


# ----------------------------------- main ------------------------------------
def make_params(key, c_in, c_out, D, H, W):
    pallas_params, ref_params = [], []
    for i, d in enumerate(DILATIONS):
        ks = jax.random.split(jax.random.fold_in(key, i), 6)
        w_pt = 0.05 * jax.random.normal(ks[0], (c_out, c_in, 3, 3, 3), jnp.float32)
        b_conv = 0.05 * jax.random.normal(ks[1], (c_out,), jnp.float32)
        gamma = 1.0 + 0.1 * jax.random.normal(ks[2], (c_out,), jnp.float32)
        beta = 0.1 * jax.random.normal(ks[3], (c_out,), jnp.float32)
        run_mean = 0.1 * jax.random.normal(ks[4], (c_out,), jnp.float32)
        run_var = 1.0 + 0.1 * jax.random.uniform(ks[5], (c_out,), jnp.float32)
        taps = _conv_taps(d, D, H, W)
        pallas_params.append(
            fold_conv_bn(w_pt, b_conv, gamma, beta, run_mean, run_var, taps))
        scale = gamma / jnp.sqrt(run_var + BN_EPS)
        bias = (b_conv - run_mean) * scale + beta
        ref_params.append((w_pt, scale, bias))
    return pallas_params, ref_params


if __name__ == "__main__":
    key = jax.random.PRNGKey(0)
    k_x, k_p = jax.random.split(key)

    # PyTorch NCDHW input; residual requires C_in == C_out.
    N, C, D, H, W = 2, 8, 8, 8, 8
    x = jax.random.normal(k_x, (N, C, D, H, W), jnp.float32)
    pallas_params, ref_params = make_params(k_p, C, C, D, H, W)

    out = jax.block_until_ready(dilated_block(x, pallas_params))
    ref = jax.block_until_ready(dilated_block_ref(x, ref_params))

    assert out.shape == (N, C, D, H, W)
    err = float(jnp.max(jnp.abs(out - ref)))
    assert jnp.allclose(out, ref, atol=1e-2, rtol=1e-2), err
    print("KERNEL_OK")
</pallas_src>

<mosaic_0001>
module attributes {stable_mosaic.version = 11 : i64} {
  func.func @_dilated_block_kernel(%arg0: i32, %arg1: memref<1x8x512xf32, #tpu.memory_space<vmem>>, %arg2: memref<8x216xf32, #tpu.memory_space<vmem>>, %arg3: memref<8x1xf32, #tpu.memory_space<vmem>>, %arg4: memref<8x1xf32, #tpu.memory_space<vmem>>, %arg5: memref<27x512xf32, #tpu.memory_space<vmem>>, %arg6: memref<8x216xf32, #tpu.memory_space<vmem>>, %arg7: memref<8x1xf32, #tpu.memory_space<vmem>>, %arg8: memref<8x1xf32, #tpu.memory_space<vmem>>, %arg9: memref<27x512xf32, #tpu.memory_space<vmem>>, %arg10: memref<8x8xf32, #tpu.memory_space<vmem>>, %arg11: memref<8x1xf32, #tpu.memory_space<vmem>>, %arg12: memref<8x1xf32, #tpu.memory_space<vmem>>, %arg13: memref<1x512xf32, #tpu.memory_space<vmem>>, %arg14: memref<1x8x512xf32, #tpu.memory_space<vmem>>, %arg15: memref<216x512xf32, #tpu.memory_space<vmem>>) attributes {dimension_semantics = [#tpu.dimension_semantics<parallel>], iteration_bounds = array<i64: 2>, scalar_prefetch = 0 : i64, scratch_operands = 1 : i64, tpu.core_type = #tpu.core_type<tc>, window_params = [{transform_indices = @transform_0, window_bounds = array<i64: 1, 8, 512>}, {pipeline_mode = #tpu.pipeline_mode<synchronous>, transform_indices = @transform_1, window_bounds = array<i64: 8, 216>}, {pipeline_mode = #tpu.pipeline_mode<synchronous>, transform_indices = @transform_2, window_bounds = array<i64: 8, 1>}, {pipeline_mode = #tpu.pipeline_mode<synchronous>, transform_indices = @transform_3, window_bounds = array<i64: 8, 1>}, {pipeline_mode = #tpu.pipeline_mode<synchronous>, transform_indices = @transform_4, window_bounds = array<i64: 27, 512>}, {pipeline_mode = #tpu.pipeline_mode<synchronous>, transform_indices = @transform_5, window_bounds = array<i64: 8, 216>}, {pipeline_mode = #tpu.pipeline_mode<synchronous>, transform_indices = @transform_6, window_bounds = array<i64: 8, 1>}, {pipeline_mode = #tpu.pipeline_mode<synchronous>, transform_indices = @transform_7, window_bounds = array<i64: 8, 1>}, {pipeline_mode = #tpu.pipeline_mode<synchronous>, transform_indices = @transform_8, window_bounds = array<i64: 27, 512>}, {pipeline_mode = #tpu.pipeline_mode<synchronous>, transform_indices = @transform_9, window_bounds = array<i64: 8, 8>}, {pipeline_mode = #tpu.pipeline_mode<synchronous>, transform_indices = @transform_10, window_bounds = array<i64: 8, 1>}, {pipeline_mode = #tpu.pipeline_mode<synchronous>, transform_indices = @transform_11, window_bounds = array<i64: 8, 1>}, {pipeline_mode = #tpu.pipeline_mode<synchronous>, transform_indices = @transform_12, window_bounds = array<i64: 1, 512>}, {transform_indices = @transform_13, window_bounds = array<i64: 1, 8, 512>}]} {
    %c0 = arith.constant 0 : index
    %c0_0 = arith.constant 0 : index
    %c0_1 = arith.constant 0 : index
    %0 = vector.load %arg1[%c0, %c0_0, %c0_1] : memref<1x8x512xf32, #tpu.memory_space<vmem>>, vector<1x8x512xf32>
    %1 = vector.shape_cast %0 : vector<1x8x512xf32> to vector<8x512xf32>
    %c146_i32 = arith.constant 146 : i32
    %2 = tpu.dynamic_rotate %1 by %c146_i32 dim 1 : vector<8x512xf32>, i32 -> vector<8x512xf32>
    %c0_2 = arith.constant 0 : index
    %c0_3 = arith.constant 0 : index
    %3 = vector.load %arg5[%c0_2, %c0_3] : memref<27x512xf32, #tpu.memory_space<vmem>>, vector<1x512xf32>
    %4 = vector.broadcast %3 : vector<1x512xf32> to vector<8x512xf32>
    %5 = arith.mulf %2, %4 : vector<8x512xf32>
    %c144_i32 = arith.constant 144 : i32
    %6 = tpu.dynamic_rotate %1 by %c144_i32 dim 1 : vector<8x512xf32>, i32 -> vector<8x512xf32>
    %c1 = arith.constant 1 : index
    %c0_4 = arith.constant 0 : index
    %7 = vector.load %arg5[%c1, %c0_4] : memref<27x512xf32, #tpu.memory_space<vmem>>, vector<1x512xf32>
    %8 = vector.broadcast %7 : vector<1x512xf32> to vector<8x512xf32>
    %9 = arith.mulf %6, %8 : vector<8x512xf32>
    %c142_i32 = arith.constant 142 : i32
    %10 = tpu.dynamic_rotate %1 by %c142_i32 dim 1 : vector<8x512xf32>, i32 -> vector<8x512xf32>
    %c2 = arith.constant 2 : index
    %c0_5 = arith.constant 0 : index
    %11 = vector.load %arg5[%c2, %c0_5] : memref<27x512xf32, #tpu.memory_space<vmem>>, vector<1x512xf32>
    %12 = vector.broadcast %11 : vector<1x512xf32> to vector<8x512xf32>
    %13 = arith.mulf %10, %12 : vector<8x512xf32>
    %c130_i32 = arith.constant 130 : i32
    %14 = tpu.dynamic_rotate %1 by %c130_i32 dim 1 : vector<8x512xf32>, i32 -> vector<8x512xf32>
    %c3 = arith.constant 3 : index
    %c0_6 = arith.constant 0 : index
    %15 = vector.load %arg5[%c3, %c0_6] : memref<27x512xf32, #tpu.memory_space<vmem>>, vector<1x512xf32>
    %16 = vector.broadcast %15 : vector<1x512xf32> to vector<8x512xf32>
    %17 = arith.mulf %14, %16 : vector<8x512xf32>
    %c128_i32 = arith.constant 128 : i32
    %18 = tpu.dynamic_rotate %1 by %c128_i32 dim 1 : vector<8x512xf32>, i32 -> vector<8x512xf32>
    %c4 = arith.constant 4 : index
    %c0_7 = arith.constant 0 : index
    %19 = vector.load %arg5[%c4, %c0_7] : memref<27x512xf32, #tpu.memory_space<vmem>>, vector<1x512xf32>
    %20 = vector.broadcast %19 : vector<1x512xf32> to vector<8x512xf32>
    %21 = arith.mulf %18, %20 : vector<8x512xf32>
    %c126_i32 = arith.constant 126 : i32
    %22 = tpu.dynamic_rotate %1 by %c126_i32 dim 1 : vector<8x512xf32>, i32 -> vector<8x512xf32>
    %c5 = arith.constant 5 : index
    %c0_8 = arith.constant 0 : index
    %23 = vector.load %arg5[%c5, %c0_8] : memref<27x512xf32, #tpu.memory_space<vmem>>, vector<1x512xf32>
    %24 = vector.broadcast %23 : vector<1x512xf32> to vector<8x512xf32>
    %25 = arith.mulf %22, %24 : vector<8x512xf32>
    %c114_i32 = arith.constant 114 : i32
    %26 = tpu.dynamic_rotate %1 by %c114_i32 dim 1 : vector<8x512xf32>, i32 -> vector<8x512xf32>
    %c6 = arith.constant 6 : index
    %c0_9 = arith.constant 0 : index
    %27 = vector.load %arg5[%c6, %c0_9] : memref<27x512xf32, #tpu.memory_space<vmem>>, vector<1x512xf32>
    %28 = vector.broadcast %27 : vector<1x512xf32> to vector<8x512xf32>
    %29 = arith.mulf %26, %28 : vector<8x512xf32>
    %c112_i32 = arith.constant 112 : i32
    %30 = tpu.dynamic_rotate %1 by %c112_i32 dim 1 : vector<8x512xf32>, i32 -> vector<8x512xf32>
    %c7 = arith.constant 7 : index
    %c0_10 = arith.constant 0 : index
    %31 = vector.load %arg5[%c7, %c0_10] : memref<27x512xf32, #tpu.memory_space<vmem>>, vector<1x512xf32>
    %32 = vector.broadcast %31 : vector<1x512xf32> to vector<8x512xf32>
    %33 = arith.mulf %30, %32 : vector<8x512xf32>
    %c110_i32 = arith.constant 110 : i32
    %34 = tpu.dynamic_rotate %1 by %c110_i32 dim 1 : vector<8x512xf32>, i32 -> vector<8x512xf32>
    %c8 = arith.constant 8 : index
    %c0_11 = arith.constant 0 : index
    %35 = vector.load %arg5[%c8, %c0_11] : memref<27x512xf32, #tpu.memory_space<vmem>>, vector<1x512xf32>
    %36 = vector.broadcast %35 : vector<1x512xf32> to vector<8x512xf32>
    %37 = arith.mulf %34, %36 : vector<8x512xf32>
    %c18_i32 = arith.constant 18 : i32
    %38 = tpu.dynamic_rotate %1 by %c18_i32 dim 1 : vector<8x512xf32>, i32 -> vector<8x512xf32>
    %c9 = arith.constant 9 : index
    %c0_12 = arith.constant 0 : index
    %39 = vector.load %arg5[%c9, %c0_12] : memref<27x512xf32, #tpu.memory_space<vmem>>, vector<1x512xf32>
    %40 = vector.broadcast %39 : vector<1x512xf32> to vector<8x512xf32>
    %41 = arith.mulf %38, %40 : vector<8x512xf32>
    %c16_i32 = arith.constant 16 : i32
    %42 = tpu.dynamic_rotate %1 by %c16_i32 dim 1 : vector<8x512xf32>, i32 -> vector<8x512xf32>
    %c10 = arith.constant 10 : index
    %c0_13 = arith.constant 0 : index
    %43 = vector.load %arg5[%c10, %c0_13] : memref<27x512xf32, #tpu.memory_space<vmem>>, vector<1x512xf32>
    %44 = vector.broadcast %43 : vector<1x512xf32> to vector<8x512xf32>
    %45 = arith.mulf %42, %44 : vector<8x512xf32>
    %c14_i32 = arith.constant 14 : i32
    %46 = tpu.dynamic_rotate %1 by %c14_i32 dim 1 : vector<8x512xf32>, i32 -> vector<8x512xf32>
    %c11 = arith.constant 11 : index
    %c0_14 = arith.constant 0 : index
    %47 = vector.load %arg5[%c11, %c0_14] : memref<27x512xf32, #tpu.memory_space<vmem>>, vector<1x512xf32>
    %48 = vector.broadcast %47 : vector<1x512xf32> to vector<8x512xf32>
    %49 = arith.mulf %46, %48 : vector<8x512xf32>
    %c2_i32 = arith.constant 2 : i32
    %50 = tpu.dynamic_rotate %1 by %c2_i32 dim 1 : vector<8x512xf32>, i32 -> vector<8x512xf32>
    %c12 = arith.constant 12 : index
    %c0_15 = arith.constant 0 : index
    %51 = vector.load %arg5[%c12, %c0_15] : memref<27x512xf32, #tpu.memory_space<vmem>>, vector<1x512xf32>
    %52 = vector.broadcast %51 : vector<1x512xf32> to vector<8x512xf32>
    %53 = arith.mulf %50, %52 : vector<8x512xf32>
    %c510_i32 = arith.constant 510 : i32
    %54 = tpu.dynamic_rotate %1 by %c510_i32 dim 1 : vector<8x512xf32>, i32 -> vector<8x512xf32>
    %c14 = arith.constant 14 : index
    %c0_16 = arith.constant 0 : index
    %55 = vector.load %arg5[%c14, %c0_16] : memref<27x512xf32, #tpu.memory_space<vmem>>, vector<1x512xf32>
    %56 = vector.broadcast %55 : vector<1x512xf32> to vector<8x512xf32>
    %57 = arith.mulf %54, %56 : vector<8x512xf32>
    %c498_i32 = arith.constant 498 : i32
    %58 = tpu.dynamic_rotate %1 by %c498_i32 dim 1 : vector<8x512xf32>, i32 -> vector<8x512xf32>
    %c15 = arith.constant 15 : index
    %c0_17 = arith.constant 0 : index
    %59 = vector.load %arg5[%c15, %c0_17] : memref<27x512xf32, #tpu.memory_space<vmem>>, vector<1x512xf32>
    %60 = vector.broadcast %59 : vector<1x512xf32> to vector<8x512xf32>
    %61 = arith.mulf %58, %60 : vector<8x512xf32>
    %c496_i32 = arith.constant 496 : i32
    %62 = tpu.dynamic_rotate %1 by %c496_i32 dim 1 : vector<8x512xf32>, i32 -> vector<8x512xf32>
    %c16 = arith.constant 16 : index
    %c0_18 = arith.constant 0 : index
    %63 = vector.load %arg5[%c16, %c0_18] : memref<27x512xf32, #tpu.memory_space<vmem>>, vector<1x512xf32>
    %64 = vector.broadcast %63 : vector<1x512xf32> to vector<8x512xf32>
    %65 = arith.mulf %62, %64 : vector<8x512xf32>
    %c494_i32 = arith.constant 494 : i32
    %66 = tpu.dynamic_rotate %1 by %c494_i32 dim 1 : vector<8x512xf32>, i32 -> vector<8x512xf32>
    %c17 = arith.constant 17 : index
    %c0_19 = arith.constant 0 : index
    %67 = vector.load %arg5[%c17, %c0_19] : memref<27x512xf32, #tpu.memory_space<vmem>>, vector<1x512xf32>
    %68 = vector.broadcast %67 : vector<1x512xf32> to vector<8x512xf32>
    %69 = arith.mulf %66, %68 : vector<8x512xf32>
    %c402_i32 = arith.constant 402 : i32
    %70 = tpu.dynamic_rotate %1 by %c402_i32 dim 1 : vector<8x512xf32>, i32 -> vector<8x512xf32>
    %c18 = arith.constant 18 : index
    %c0_20 = arith.constant 0 : index
    %71 = vector.load %arg5[%c18, %c0_20] : memref<27x512xf32, #tpu.memory_space<vmem>>, vector<1x512xf32>
    %72 = vector.broadcast %71 : vector<1x512xf32> to vector<8x512xf32>
    %73 = arith.mulf %70, %72 : vector<8x512xf32>
    %c400_i32 = arith.constant 400 : i32
    %74 = tpu.dynamic_rotate %1 by %c400_i32 dim 1 : vector<8x512xf32>, i32 -> vector<8x512xf32>
    %c19 = arith.constant 19 : index
    %c0_21 = arith.constant 0 : index
    %75 = vector.load %arg5[%c19, %c0_21] : memref<27x512xf32, #tpu.memory_space<vmem>>, vector<1x512xf32>
    %76 = vector.broadcast %75 : vector<1x512xf32> to vector<8x512xf32>
    %77 = arith.mulf %74, %76 : vector<8x512xf32>
    %c398_i32 = arith.constant 398 : i32
    %78 = tpu.dynamic_rotate %1 by %c398_i32 dim 1 : vector<8x512xf32>, i32 -> vector<8x512xf32>
    %c20 = arith.constant 20 : index
    %c0_22 = arith.constant 0 : index
    %79 = vector.load %arg5[%c20, %c0_22] : memref<27x512xf32, #tpu.memory_space<vmem>>, vector<1x512xf32>
    %80 = vector.broadcast %79 : vector<1x512xf32> to vector<8x512xf32>
    %81 = arith.mulf %78, %80 : vector<8x512xf32>
    %c386_i32 = arith.constant 386 : i32
    %82 = tpu.dynamic_rotate %1 by %c386_i32 dim 1 : vector<8x512xf32>, i32 -> vector<8x512xf32>
    %c21 = arith.constant 21 : index
    %c0_23 = arith.constant 0 : index
    %83 = vector.load %arg5[%c21, %c0_23] : memref<27x512xf32, #tpu.memory_space<vmem>>, vector<1x512xf32>
    %84 = vector.broadcast %83 : vector<1x512xf32> to vector<8x512xf32>
    %85 = arith.mulf %82, %84 : vector<8x512xf32>
    %c384_i32 = arith.constant 384 : i32
    %86 = tpu.dynamic_rotate %1 by %c384_i32 dim 1 : vector<8x512xf32>, i32 -> vector<8x512xf32>
    %c22 = arith.constant 22 : index
    %c0_24 = arith.constant 0 : index
    %87 = vector.load %arg5[%c22, %c0_24] : memref<27x512xf32, #tpu.memory_space<vmem>>, vector<1x512xf32>
    %88 = vector.broadcast %87 : vector<1x512xf32> to vector<8x512xf32>
    %89 = arith.mulf %86, %88 : vector<8x512xf32>
    %c382_i32 = arith.constant 382 : i32
    %90 = tpu.dynamic_rotate %1 by %c382_i32 dim 1 : vector<8x512xf32>, i32 -> vector<8x512xf32>
    %c23 = arith.constant 23 : index
    %c0_25 = arith.constant 0 : index
    %91 = vector.load %arg5[%c23, %c0_25] : memref<27x512xf32, #tpu.memory_space<vmem>>, vector<1x512xf32>
    %92 = vector.broadcast %91 : vector<1x512xf32> to vector<8x512xf32>
    %93 = arith.mulf %90, %92 : vector<8x512xf32>
    %c370_i32 = arith.constant 370 : i32
    %94 = tpu.dynamic_rotate %1 by %c370_i32 dim 1 : vector<8x512xf32>, i32 -> vector<8x512xf32>
    %c24 = arith.constant 24 : index
    %c0_26 = arith.constant 0 : index
    %95 = vector.load %arg5[%c24, %c0_26] : memref<27x512xf32, #tpu.memory_space<vmem>>, vector<1x512xf32>
    %96 = vector.broadcast %95 : vector<1x512xf32> to vector<8x512xf32>
    %97 = arith.mulf %94, %96 : vector<8x512xf32>
    %c368_i32 = arith.constant 368 : i32
    %98 = tpu.dynamic_rotate %1 by %c368_i32 dim 1 : vector<8x512xf32>, i32 -> vector<8x512xf32>
    %c25 = arith.constant 25 : index
    %c0_27 = arith.constant 0 : index
    %99 = vector.load %arg5[%c25, %c0_27] : memref<27x512xf32, #tpu.memory_space<vmem>>, vector<1x512xf32>
    %100 = vector.broadcast %99 : vector<1x512xf32> to vector<8x512xf32>
    %101 = arith.mulf %98, %100 : vector<8x512xf32>
    %c366_i32 = arith.constant 366 : i32
    %102 = tpu.dynamic_rotate %1 by %c366_i32 dim 1 : vector<8x512xf32>, i32 -> vector<8x512xf32>
    %c26 = arith.constant 26 : index
    %c0_28 = arith.constant 0 : index
    %103 = vector.load %arg5[%c26, %c0_28] : memref<27x512xf32, #tpu.memory_space<vmem>>, vector<1x512xf32>
    %104 = vector.broadcast %103 : vector<1x512xf32> to vector<8x512xf32>
    %105 = arith.mulf %102, %104 : vector<8x512xf32>
    %c0_29 = arith.constant 0 : index
    %c0_30 = arith.constant 0 : index
    %106 = vector.load %arg15[%c0_29, %c0_30] : memref<216x512xf32, #tpu.memory_space<vmem>>, vector<8x512xf32>
    tpu.vector_store %arg15[%c0_29, %c0_30], %5 {strides = array<i32>} : memref<216x512xf32, #tpu.memory_space<vmem>>, vector<8x512xf32>,
    %c8_31 = arith.constant 8 : index
    %c0_32 = arith.constant 0 : index
    %107 = vector.load %arg15[%c8_31, %c0_32] : memref<216x512xf32, #tpu.memory_space<vmem>>, vector<8x512xf32>
    tpu.vector_store %arg15[%c8_31, %c0_32], %9 {strides = array<i32>} : memref<216x512xf32, #tpu.memory_space<vmem>>, vector<8x512xf32>,
    %c16_33 = arith.constant 16 : index
    %c0_34 = arith.constant 0 : index
    %108 = vector.load %arg15[%c16_33, %c0_34] : memref<216x512xf32, #tpu.memory_space<vmem>>, vector<8x512xf32>
    tpu.vector_store %arg15[%c16_33, %c0_34], %13 {strides = array<i32>} : memref<216x512xf32, #tpu.memory_space<vmem>>, vector<8x512xf32>,
    %c24_35 = arith.constant 24 : index
    %c0_36 = arith.constant 0 : index
    %109 = vector.load %arg15[%c24_35, %c0_36] : memref<216x512xf32, #tpu.memory_space<vmem>>, vector<8x512xf32>
    tpu.vector_store %arg15[%c24_35, %c0_36], %17 {strides = array<i32>} : memref<216x512xf32, #tpu.memory_space<vmem>>, vector<8x512xf32>,
    %c32 = arith.constant 32 : index
    %c0_37 = arith.constant 0 : index
    %110 = vector.load %arg15[%c32, %c0_37] : memref<216x512xf32, #tpu.memory_space<vmem>>, vector<8x512xf32>
    tpu.vector_store %arg15[%c32, %c0_37], %21 {strides = array<i32>} : memref<216x512xf32, #tpu.memory_space<vmem>>, vector<8x512xf32>,
    %c40 = arith.constant 40 : index
    %c0_38 = arith.constant 0 : index
    %111 = vector.load %arg15[%c40, %c0_38] : memref<216x512xf32, #tpu.memory_space<vmem>>, vector<8x512xf32>
    tpu.vector_store %arg15[%c40, %c0_38], %25 {strides = array<i32>} : memref<216x512xf32, #tpu.memory_space<vmem>>, vector<8x512xf32>,
    %c48 = arith.constant 48 : index
    %c0_39 = arith.constant 0 : index
    %112 = vector.load %arg15[%c48, %c0_39] : memref<216x512xf32, #tpu.memory_space<vmem>>, vector<8x512xf32>
    tpu.vector_store %arg15[%c48, %c0_39], %29 {strides = array<i32>} : memref<216x512xf32, #tpu.memory_space<vmem>>, vector<8x512xf32>,
    %c56 = arith.constant 56 : index
    %c0_40 = arith.constant 0 : index
    %113 = vector.load %arg15[%c56, %c0_40] : memref<216x512xf32, #tpu.memory_space<vmem>>, vector<8x512xf32>
    tpu.vector_store %arg15[%c56, %c0_40], %33 {strides = array<i32>} : memref<216x512xf32, #tpu.memory_space<vmem>>, vector<8x512xf32>,
    %c64 = arith.constant 64 : index
    %c0_41 = arith.constant 0 : index
    %114 = vector.load %arg15[%c64, %c0_41] : memref<216x512xf32, #tpu.memory_space<vmem>>, vector<8x512xf32>
    tpu.vector_store %arg15[%c64, %c0_41], %37 {strides = array<i32>} : memref<216x512xf32, #tpu.memory_space<vmem>>, vector<8x512xf32>,
    %c72 = arith.constant 72 : index
    %c0_42 = arith.constant 0 : index
    %115 = vector.load %arg15[%c72, %c0_42] : memref<216x512xf32, #tpu.memory_space<vmem>>, vector<8x512xf32>
    tpu.vector_store %arg15[%c72, %c0_42], %41 {strides = array<i32>} : memref<216x512xf32, #tpu.memory_space<vmem>>, vector<8x512xf32>,
    %c80 = arith.constant 80 : index
    %c0_43 = arith.constant 0 : index
    %116 = vector.load %arg15[%c80, %c0_43] : memref<216x512xf32, #tpu.memory_space<vmem>>, vector<8x512xf32>
    tpu.vector_store %arg15[%c80, %c0_43], %45 {strides = array<i32>} : memref<216x512xf32, #tpu.memory_space<vmem>>, vector<8x512xf32>,
    %c88 = arith.constant 88 : index
    %c0_44 = arith.constant 0 : index
    %117 = vector.load %arg15[%c88, %c0_44] : memref<216x512xf32, #tpu.memory_space<vmem>>, vector<8x512xf32>
    tpu.vector_store %arg15[%c88, %c0_44], %49 {strides = array<i32>} : memref<216x512xf32, #tpu.memory_space<vmem>>, vector<8x512xf32>,
    %c96 = arith.constant 96 : index
    %c0_45 = arith.constant 0 : index
    %118 = vector.load %arg15[%c96, %c0_45] : memref<216x512xf32, #tpu.memory_space<vmem>>, vector<8x512xf32>
    tpu.vector_store %arg15[%c96, %c0_45], %53 {strides = array<i32>} : memref<216x512xf32, #tpu.memory_space<vmem>>, vector<8x512xf32>,
    %c104 = arith.constant 104 : index
    %c0_46 = arith.constant 0 : index
    %119 = vector.load %arg15[%c104, %c0_46] : memref<216x512xf32, #tpu.memory_space<vmem>>, vector<8x512xf32>
    tpu.vector_store %arg15[%c104, %c0_46], %1 {strides = array<i32>} : memref<216x512xf32, #tpu.memory_space<vmem>>, vector<8x512xf32>,
    %c112 = arith.constant 112 : index
    %c0_47 = arith.constant 0 : index
    %120 = vector.load %arg15[%c112, %c0_47] : memref<216x512xf32, #tpu.memory_space<vmem>>, vector<8x512xf32>
    tpu.vector_store %arg15[%c112, %c0_47], %57 {strides = array<i32>} : memref<216x512xf32, #tpu.memory_space<vmem>>, vector<8x512xf32>,
    %c120 = arith.constant 120 : index
    %c0_48 = arith.constant 0 : index
    %121 = vector.load %arg15[%c120, %c0_48] : memref<216x512xf32, #tpu.memory_space<vmem>>, vector<8x512xf32>
    tpu.vector_store %arg15[%c120, %c0_48], %61 {strides = array<i32>} : memref<216x512xf32, #tpu.memory_space<vmem>>, vector<8x512xf32>,
    %c128 = arith.constant 128 : index
    %c0_49 = arith.constant 0 : index
    %122 = vector.load %arg15[%c128, %c0_49] : memref<216x512xf32, #tpu.memory_space<vmem>>, vector<8x512xf32>
    tpu.vector_store %arg15[%c128, %c0_49], %65 {strides = array<i32>} : memref<216x512xf32, #tpu.memory_space<vmem>>, vector<8x512xf32>,
    %c136 = arith.constant 136 : index
    %c0_50 = arith.constant 0 : index
    %123 = vector.load %arg15[%c136, %c0_50] : memref<216x512xf32, #tpu.memory_space<vmem>>, vector<8x512xf32>
    tpu.vector_store %arg15[%c136, %c0_50], %69 {strides = array<i32>} : memref<216x512xf32, #tpu.memory_space<vmem>>, vector<8x512xf32>,
    %c144 = arith.constant 144 : index
    %c0_51 = arith.constant 0 : index
    %124 = vector.load %arg15[%c144, %c0_51] : memref<216x512xf32, #tpu.memory_space<vmem>>, vector<8x512xf32>
    tpu.vector_store %arg15[%c144, %c0_51], %73 {strides = array<i32>} : memref<216x512xf32, #tpu.memory_space<vmem>>, vector<8x512xf32>,
    %c152 = arith.constant 152 : index
    %c0_52 = arith.constant 0 : index
    %125 = vector.load %arg15[%c152, %c0_52] : memref<216x512xf32, #tpu.memory_space<vmem>>, vector<8x512xf32>
    tpu.vector_store %arg15[%c152, %c0_52], %77 {strides = array<i32>} : memref<216x512xf32, #tpu.memory_space<vmem>>, vector<8x512xf32>,
    %c160 = arith.constant 160 : index
    %c0_53 = arith.constant 0 : index
    %126 = vector.load %arg15[%c160, %c0_53] : memref<216x512xf32, #tpu.memory_space<vmem>>, vector<8x512xf32>
    tpu.vector_store %arg15[%c160, %c0_53], %81 {strides = array<i32>} : memref<216x512xf32, #tpu.memory_space<vmem>>, vector<8x512xf32>,
    %c168 = arith.constant 168 : index
    %c0_54 = arith.constant 0 : index
    %127 = vector.load %arg15[%c168, %c0_54] : memref<216x512xf32, #tpu.memory_space<vmem>>, vector<8x512xf32>
    tpu.vector_store %arg15[%c168, %c0_54], %85 {strides = array<i32>} : memref<216x512xf32, #tpu.memory_space<vmem>>, vector<8x512xf32>,
    %c176 = arith.constant 176 : index
    %c0_55 = arith.constant 0 : index
    %128 = vector.load %arg15[%c176, %c0_55] : memref<216x512xf32, #tpu.memory_space<vmem>>, vector<8x512xf32>
    tpu.vector_store %arg15[%c176, %c0_55], %89 {strides = array<i32>} : memref<216x512xf32, #tpu.memory_space<vmem>>, vector<8x512xf32>,
    %c184 = arith.constant 184 : index
    %c0_56 = arith.constant 0 : index
    %129 = vector.load %arg15[%c184, %c0_56] : memref<216x512xf32, #tpu.memory_space<vmem>>, vector<8x512xf32>
    tpu.vector_store %arg15[%c184, %c0_56], %93 {strides = array<i32>} : memref<216x512xf32, #tpu.memory_space<vmem>>, vector<8x512xf32>,
    %c192 = arith.constant 192 : index
    %c0_57 = arith.constant 0 : index
    %130 = vector.load %arg15[%c192, %c0_57] : memref<216x512xf32, #tpu.memory_space<vmem>>, vector<8x512xf32>
    tpu.vector_store %arg15[%c192, %c0_57], %97 {strides = array<i32>} : memref<216x512xf32, #tpu.memory_space<vmem>>, vector<8x512xf32>,
    %c200 = arith.constant 200 : index
    %c0_58 = arith.constant 0 : index
    %131 = vector.load %arg15[%c200, %c0_58] : memref<216x512xf32, #tpu.memory_space<vmem>>, vector<8x512xf32>
    tpu.vector_store %arg15[%c200, %c0_58], %101 {strides = array<i32>} : memref<216x512xf32, #tpu.memory_space<vmem>>, vector<8x512xf32>,
    %c208 = arith.constant 208 : index
    %c0_59 = arith.constant 0 : index
    %132 = vector.load %arg15[%c208, %c0_59] : memref<216x512xf32, #tpu.memory_space<vmem>>, vector<8x512xf32>
    tpu.vector_store %arg15[%c208, %c0_59], %105 {strides = array<i32>} : memref<216x512xf32, #tpu.memory_space<vmem>>, vector<8x512xf32>,
    %c0_60 = arith.constant 0 : index
    %c0_61 = arith.constant 0 : index
    %133 = vector.load %arg15[%c0_60, %c0_61] : memref<216x512xf32, #tpu.memory_space<vmem>>, vector<216x512xf32>
    %c0_62 = arith.constant 0 : index
    %c0_63 = arith.constant 0 : index
    %134 = vector.load %arg2[%c0_62, %c0_63] : memref<8x216xf32, #tpu.memory_space<vmem>>, vector<8x216xf32>
    %cst = arith.constant dense<0.000000e+00> : vector<8x512xf32>
    %135 = tpu.matmul %134, %133, %cst {dimension_numbers = #tpu.dot_dimension_numbers<[1], [0], [0], [1], [0, 0, 1, 1], [], []>} : vector<8x216xf32>, vector<216x512xf32>, vector<8x512xf32> -> vector<8x512xf32>
    %c0_64 = arith.constant 0 : index
    %c0_65 = arith.constant 0 : index
    %136 = vector.load %arg3[%c0_64, %c0_65] : memref<8x1xf32, #tpu.memory_space<vmem>>, vector<8x1xf32>
    %137 = vector.broadcast %136 : vector<8x1xf32> to vector<8x512xf32>
    %138 = arith.mulf %135, %137 : vector<8x512xf32>
    %c0_66 = arith.constant 0 : index
    %c0_67 = arith.constant 0 : index
    %139 = vector.load %arg4[%c0_66, %c0_67] : memref<8x1xf32, #tpu.memory_space<vmem>>, vector<8x1xf32>
    %140 = vector.broadcast %139 : vector<8x1xf32> to vector<8x512xf32>
    %141 = arith.addf %138, %140 : vector<8x512xf32>
    %cst_68 = arith.constant 0.000000e+00 : f32
    %142 = vector.broadcast %cst_68 : f32 to vector<8x512xf32>
    %143 = arith.cmpf oge, %141, %142 : vector<8x512xf32>
    %cst_69 = arith.constant 0.00999999977 : f32
    %144 = vector.broadcast %cst_69 : f32 to vector<8x512xf32>
    %145 = arith.mulf %144, %141 : vector<8x512xf32>
    %146 = arith.select %143, %141, %145 : vector<8x512xi1>, vector<8x512xf32>
    %c292_i32 = arith.constant 292 : i32
    %147 = tpu.dynamic_rotate %146 by %c292_i32 dim 1 : vector<8x512xf32>, i32 -> vector<8x512xf32>
    %c0_70 = arith.constant 0 : index
    %c0_71 = arith.constant 0 : index
    %148 = vector.load %arg9[%c0_70, %c0_71] : memref<27x512xf32, #tpu.memory_space<vmem>>, vector<1x512xf32>
    %149 = vector.broadcast %148 : vector<1x512xf32> to vector<8x512xf32>
    %150 = arith.mulf %147, %149 : vector<8x512xf32>
    %c288_i32 = arith.constant 288 : i32
    %151 = tpu.dynamic_rotate %146 by %c288_i32 dim 1 : vector<8x512xf32>, i32 -> vector<8x512xf32>
    %c1_72 = arith.constant 1 : index
    %c0_73 = arith.constant 0 : index
    %152 = vector.load %arg9[%c1_72, %c0_73] : memref<27x512xf32, #tpu.memory_space<vmem>>, vector<1x512xf32>
    %153 = vector.broadcast %152 : vector<1x512xf32> to vector<8x512xf32>
    %154 = arith.mulf %151, %153 : vector<8x512xf32>
    %c284_i32 = arith.constant 284 : i32
    %155 = tpu.dynamic_rotate %146 by %c284_i32 dim 1 : vector<8x512xf32>, i32 -> vector<8x512xf32>
    %c2_74 = arith.constant 2 : index
    %c0_75 = arith.constant 0 : index
    %156 = vector.load %arg9[%c2_74, %c0_75] : memref<27x512xf32, #tpu.memory_space<vmem>>, vector<1x512xf32>
    %157 = vector.broadcast %156 : vector<1x512xf32> to vector<8x512xf32>
    %158 = arith.mulf %155, %157 : vector<8x512xf32>
    %c260_i32 = arith.constant 260 : i32
    %159 = tpu.dynamic_rotate %146 by %c260_i32 dim 1 : vector<8x512xf32>, i32 -> vector<8x512xf32>
    %c3_76 = arith.constant 3 : index
    %c0_77 = arith.constant 0 : index
    %160 = vector.load %arg9[%c3_76, %c0_77] : memref<27x512xf32, #tpu.memory_space<vmem>>, vector<1x512xf32>
    %161 = vector.broadcast %160 : vector<1x512xf32> to vector<8x512xf32>
    %162 = arith.mulf %159, %161 : vector<8x512xf32>
    %c256_i32 = arith.constant 256 : i32
    %163 = tpu.dynamic_rotate %146 by %c256_i32 dim 1 : vector<8x512xf32>, i32 -> vector<8x512xf32>
    %c4_78 = arith.constant 4 : index
    %c0_79 = arith.constant 0 : index
    %164 = vector.load %arg9[%c4_78, %c0_79] : memref<27x512xf32, #tpu.memory_space<vmem>>, vector<1x512xf32>
    %165 = vector.broadcast %164 : vector<1x512xf32> to vector<8x512xf32>
    %166 = arith.mulf %163, %165 : vector<8x512xf32>
    %c252_i32 = arith.constant 252 : i32
    %167 = tpu.dynamic_rotate %146 by %c252_i32 dim 1 : vector<8x512xf32>, i32 -> vector<8x512xf32>
    %c5_80 = arith.constant 5 : index
    %c0_81 = arith.constant 0 : index
    %168 = vector.load %arg9[%c5_80, %c0_81] : memref<27x512xf32, #tpu.memory_space<vmem>>, vector<1x512xf32>
    %169 = vector.broadcast %168 : vector<1x512xf32> to vector<8x512xf32>
    %170 = arith.mulf %167, %169 : vector<8x512xf32>
    %c228_i32 = arith.constant 228 : i32
    %171 = tpu.dynamic_rotate %146 by %c228_i32 dim 1 : vector<8x512xf32>, i32 -> vector<8x512xf32>
    %c6_82 = arith.constant 6 : index
    %c0_83 = arith.constant 0 : index
    %172 = vector.load %arg9[%c6_82, %c0_83] : memref<27x512xf32, #tpu.memory_space<vmem>>, vector<1x512xf32>
    %173 = vector.broadcast %172 : vector<1x512xf32> to vector<8x512xf32>
    %174 = arith.mulf %171, %173 : vector<8x512xf32>
    %c224_i32 = arith.constant 224 : i32
    %175 = tpu.dynamic_rotate %146 by %c224_i32 dim 1 : vector<8x512xf32>, i32 -> vector<8x512xf32>
    %c7_84 = arith.constant 7 : index
    %c0_85 = arith.constant 0 : index
    %176 = vector.load %arg9[%c7_84, %c0_85] : memref<27x512xf32, #tpu.memory_space<vmem>>, vector<1x512xf32>
    %177 = vector.broadcast %176 : vector<1x512xf32> to vector<8x512xf32>
    %178 = arith.mulf %175, %177 : vector<8x512xf32>
    %c220_i32 = arith.constant 220 : i32
    %179 = tpu.dynamic_rotate %146 by %c220_i32 dim 1 : vector<8x512xf32>, i32 -> vector<8x512xf32>
    %c8_86 = arith.constant 8 : index
    %c0_87 = arith.constant 0 : index
    %180 = vector.load %arg9[%c8_86, %c0_87] : memref<27x512xf32, #tpu.memory_space<vmem>>, vector<1x512xf32>
    %181 = vector.broadcast %180 : vector<1x512xf32> to vector<8x512xf32>
    %182 = arith.mulf %179, %181 : vector<8x512xf32>
    %c36_i32 = arith.constant 36 : i32
    %183 = tpu.dynamic_rotate %146 by %c36_i32 dim 1 : vector<8x512xf32>, i32 -> vector<8x512xf32>
    %c9_88 = arith.constant 9 : index
    %c0_89 = arith.constant 0 : index
    %184 = vector.load %arg9[%c9_88, %c0_89] : memref<27x512xf32, #tpu.memory_space<vmem>>, vector<1x512xf32>
    %185 = vector.broadcast %184 : vector<1x512xf32> to vector<8x512xf32>
    %186 = arith.mulf %183, %185 : vector<8x512xf32>
    %c32_i32 = arith.constant 32 : i32
    %187 = tpu.dynamic_rotate %146 by %c32_i32 dim 1 : vector<8x512xf32>, i32 -> vector<8x512xf32>
    %c10_90 = arith.constant 10 : index
    %c0_91 = arith.constant 0 : index
    %188 = vector.load %arg9[%c10_90, %c0_91] : memref<27x512xf32, #tpu.memory_space<vmem>>, vector<1x512xf32>
    %189 = vector.broadcast %188 : vector<1x512xf32> to vector<8x512xf32>
    %190 = arith.mulf %187, %189 : vector<8x512xf32>
    %c28_i32 = arith.constant 28 : i32
    %191 = tpu.dynamic_rotate %146 by %c28_i32 dim 1 : vector<8x512xf32>, i32 -> vector<8x512xf32>
    %c11_92 = arith.constant 11 : index
    %c0_93 = arith.constant 0 : index
    %192 = vector.load %arg9[%c11_92, %c0_93] : memref<27x512xf32, #tpu.memory_space<vmem>>, vector<1x512xf32>
    %193 = vector.broadcast %192 : vector<1x512xf32> to vector<8x512xf32>
    %194 = arith.mulf %191, %193 : vector<8x512xf32>
    %c4_i32 = arith.constant 4 : i32
    %195 = tpu.dynamic_rotate %146 by %c4_i32 dim 1 : vector<8x512xf32>, i32 -> vector<8x512xf32>
    %c12_94 = arith.constant 12 : index
    %c0_95 = arith.constant 0 : index
    %196 = vector.load %arg9[%c12_94, %c0_95] : memref<27x512xf32, #tpu.memory_space<vmem>>, vector<1x512xf32>
    %197 = vector.broadcast %196 : vector<1x512xf32> to vector<8x512xf32>
    %198 = arith.mulf %195, %197 : vector<8x512xf32>
    %c508_i32 = arith.constant 508 : i32
    %199 = tpu.dynamic_rotate %146 by %c508_i32 dim 1 : vector<8x512xf32>, i32 -> vector<8x512xf32>
    %c14_96 = arith.constant 14 : index
    %c0_97 = arith.constant 0 : index
    %200 = vector.load %arg9[%c14_96, %c0_97] : memref<27x512xf32, #tpu.memory_space<vmem>>, vector<1x512xf32>
    %201 = vector.broadcast %200 : vector<1x512xf32> to vector<8x512xf32>
    %202 = arith.mulf %199, %201 : vector<8x512xf32>
    %c484_i32 = arith.constant 484 : i32
    %203 = tpu.dynamic_rotate %146 by %c484_i32 dim 1 : vector<8x512xf32>, i32 -> vector<8x512xf32>
    %c15_98 = arith.constant 15 : index
    %c0_99 = arith.constant 0 : index
    %204 = vector.load %arg9[%c15_98, %c0_99] : memref<27x512xf32, #tpu.memory_space<vmem>>, vector<1x512xf32>
    %205 = vector.broadcast %204 : vector<1x512xf32> to vector<8x512xf32>
    %206 = arith.mulf %203, %205 : vector<8x512xf32>
    %c480_i32 = arith.constant 480 : i32
    %207 = tpu.dynamic_rotate %146 by %c480_i32 dim 1 : vector<8x512xf32>, i32 -> vector<8x512xf32>
    %c16_100 = arith.constant 16 : index
    %c0_101 = arith.constant 0 : index
    %208 = vector.load %arg9[%c16_100, %c0_101] : memref<27x512xf32, #tpu.memory_space<vmem>>, vector<1x512xf32>
    %209 = vector.broadcast %208 : vector<1x512xf32> to vector<8x512xf32>
    %210 = arith.mulf %207, %209 : vector<8x512xf32>
    %c476_i32 = arith.constant 476 : i32
    %211 = tpu.dynamic_rotate %146 by %c476_i32 dim 1 : vector<8x512xf32>, i32 -> vector<8x512xf32>
    %c17_102 = arith.constant 17 : index
    %c0_103 = arith.constant 0 : index
    %212 = vector.load %arg9[%c17_102, %c0_103] : memref<27x512xf32, #tpu.memory_space<vmem>>, vector<1x512xf32>
    %213 = vector.broadcast %212 : vector<1x512xf32> to vector<8x512xf32>
    %214 = arith.mulf %211, %213 : vector<8x512xf32>
    %c292_i32_104 = arith.constant 292 : i32
    %215 = tpu.dynamic_rotate %146 by %c292_i32_104 dim 1 : vector<8x512xf32>, i32 -> vector<8x512xf32>
    %c18_105 = arith.constant 18 : index
    %c0_106 = arith.constant 0 : index
    %216 = vector.load %arg9[%c18_105, %c0_106] : memref<27x512xf32, #tpu.memory_space<vmem>>, vector<1x512xf32>
    %217 = vector.broadcast %216 : vector<1x512xf32> to vector<8x512xf32>
    %218 = arith.mulf %215, %217 : vector<8x512xf32>
    %c288_i32_107 = arith.constant 288 : i32
    %219 = tpu.dynamic_rotate %146 by %c288_i32_107 dim 1 : vector<8x512xf32>, i32 -> vector<8x512xf32>
    %c19_108 = arith.constant 19 : index
    %c0_109 = arith.constant 0 : index
    %220 = vector.load %arg9[%c19_108, %c0_109] : memref<27x512xf32, #tpu.memory_space<vmem>>, vector<1x512xf32>
    %221 = vector.broadcast %220 : vector<1x512xf32> to vector<8x512xf32>
    %222 = arith.mulf %219, %221 : vector<8x512xf32>
    %c284_i32_110 = arith.constant 284 : i32
    %223 = tpu.dynamic_rotate %146 by %c284_i32_110 dim 1 : vector<8x512xf32>, i32 -> vector<8x512xf32>
    %c20_111 = arith.constant 20 : index
    %c0_112 = arith.constant 0 : index
    %224 = vector.load %arg9[%c20_111, %c0_112] : memref<27x512xf32, #tpu.memory_space<vmem>>, vector<1x512xf32>
    %225 = vector.broadcast %224 : vector<1x512xf32> to vector<8x512xf32>
    %226 = arith.mulf %223, %225 : vector<8x512xf32>
    %c260_i32_113 = arith.constant 260 : i32
    %227 = tpu.dynamic_rotate %146 by %c260_i32_113 dim 1 : vector<8x512xf32>, i32 -> vector<8x512xf32>
    %c21_114 = arith.constant 21 : index
    %c0_115 = arith.constant 0 : index
    %228 = vector.load %arg9[%c21_114, %c0_115] : memref<27x512xf32, #tpu.memory_space<vmem>>, vector<1x512xf32>
    %229 = vector.broadcast %228 : vector<1x512xf32> to vector<8x512xf32>
    %230 = arith.mulf %227, %229 : vector<8x512xf32>
    %c256_i32_116 = arith.constant 256 : i32
    %231 = tpu.dynamic_rotate %146 by %c256_i32_116 dim 1 : vector<8x512xf32>, i32 -> vector<8x512xf32>
    %c22_117 = arith.constant 22 : index
    %c0_118 = arith.constant 0 : index
    %232 = vector.load %arg9[%c22_117, %c0_118] : memref<27x512xf32, #tpu.memory_space<vmem>>, vector<1x512xf32>
    %233 = vector.broadcast %232 : vector<1x512xf32> to vector<8x512xf32>
    %234 = arith.mulf %231, %233 : vector<8x512xf32>
    %c252_i32_119 = arith.constant 252 : i32
    %235 = tpu.dynamic_rotate %146 by %c252_i32_119 dim 1 : vector<8x512xf32>, i32 -> vector<8x512xf32>
    %c23_120 = arith.constant 23 : index
    %c0_121 = arith.constant 0 : index
    %236 = vector.load %arg9[%c23_120, %c0_121] : memref<27x512xf32, #tpu.memory_space<vmem>>, vector<1x512xf32>
    %237 = vector.broadcast %236 : vector<1x512xf32> to vector<8x512xf32>
    %238 = arith.mulf %235, %237 : vector<8x512xf32>
    %c228_i32_122 = arith.constant 228 : i32
    %239 = tpu.dynamic_rotate %146 by %c228_i32_122 dim 1 : vector<8x512xf32>, i32 -> vector<8x512xf32>
    %c24_123 = arith.constant 24 : index
    %c0_124 = arith.constant 0 : index
    %240 = vector.load %arg9[%c24_123, %c0_124] : memref<27x512xf32, #tpu.memory_space<vmem>>, vector<1x512xf32>
    %241 = vector.broadcast %240 : vector<1x512xf32> to vector<8x512xf32>
    %242 = arith.mulf %239, %241 : vector<8x512xf32>
    %c224_i32_125 = arith.constant 224 : i32
    %243 = tpu.dynamic_rotate %146 by %c224_i32_125 dim 1 : vector<8x512xf32>, i32 -> vector<8x512xf32>
    %c25_126 = arith.constant 25 : index
    %c0_127 = arith.constant 0 : index
    %244 = vector.load %arg9[%c25_126, %c0_127] : memref<27x512xf32, #tpu.memory_space<vmem>>, vector<1x512xf32>
    %245 = vector.broadcast %244 : vector<1x512xf32> to vector<8x512xf32>
    %246 = arith.mulf %243, %245 : vector<8x512xf32>
    %c220_i32_128 = arith.constant 220 : i32
    %247 = tpu.dynamic_rotate %146 by %c220_i32_128 dim 1 : vector<8x512xf32>, i32 -> vector<8x512xf32>
    %c26_129 = arith.constant 26 : index
    %c0_130 = arith.constant 0 : index
    %248 = vector.load %arg9[%c26_129, %c0_130] : memref<27x512xf32, #tpu.memory_space<vmem>>, vector<1x512xf32>
    %249 = vector.broadcast %248 : vector<1x512xf32> to vector<8x512xf32>
    %250 = arith.mulf %247, %249 : vector<8x512xf32>
    %c0_131 = arith.constant 0 : index
    %c0_132 = arith.constant 0 : index
    %251 = vector.load %arg15[%c0_131, %c0_132] : memref<216x512xf32, #tpu.memory_space<vmem>>, vector<8x512xf32>
    tpu.vector_store %arg15[%c0_131, %c0_132], %150 {strides = array<i32>} : memref<216x512xf32, #tpu.memory_space<vmem>>, vector<8x512xf32>,
    %c8_133 = arith.constant 8 : index
    %c0_134 = arith.constant 0 : index
    %252 = vector.load %arg15[%c8_133, %c0_134] : memref<216x512xf32, #tpu.memory_space<vmem>>, vector<8x512xf32>
    tpu.vector_store %arg15[%c8_133, %c0_134], %154 {strides = array<i32>} : memref<216x512xf32, #tpu.memory_space<vmem>>, vector<8x512xf32>,
    %c16_135 = arith.constant 16 : index
    %c0_136 = arith.constant 0 : index
    %253 = vector.load %arg15[%c16_135, %c0_136] : memref<216x512xf32, #tpu.memory_space<vmem>>, vector<8x512xf32>
    tpu.vector_store %arg15[%c16_135, %c0_136], %158 {strides = array<i32>} : memref<216x512xf32, #tpu.memory_space<vmem>>, vector<8x512xf32>,
    %c24_137 = arith.constant 24 : index
    %c0_138 = arith.constant 0 : index
    %254 = vector.load %arg15[%c24_137, %c0_138] : memref<216x512xf32, #tpu.memory_space<vmem>>, vector<8x512xf32>
    tpu.vector_store %arg15[%c24_137, %c0_138], %162 {strides = array<i32>} : memref<216x512xf32, #tpu.memory_space<vmem>>, vector<8x512xf32>,
    %c32_139 = arith.constant 32 : index
    %c0_140 = arith.constant 0 : index
    %255 = vector.load %arg15[%c32_139, %c0_140] : memref<216x512xf32, #tpu.memory_space<vmem>>, vector<8x512xf32>
    tpu.vector_store %arg15[%c32_139, %c0_140], %166 {strides = array<i32>} : memref<216x512xf32, #tpu.memory_space<vmem>>, vector<8x512xf32>,
    %c40_141 = arith.constant 40 : index
    %c0_142 = arith.constant 0 : index
    %256 = vector.load %arg15[%c40_141, %c0_142] : memref<216x512xf32, #tpu.memory_space<vmem>>, vector<8x512xf32>
    tpu.vector_store %arg15[%c40_141, %c0_142], %170 {strides = array<i32>} : memref<216x512xf32, #tpu.memory_space<vmem>>, vector<8x512xf32>,
    %c48_143 = arith.constant 48 : index
    %c0_144 = arith.constant 0 : index
    %257 = vector.load %arg15[%c48_143, %c0_144] : memref<216x512xf32, #tpu.memory_space<vmem>>, vector<8x512xf32>
    tpu.vector_store %arg15[%c48_143, %c0_144], %174 {strides = array<i32>} : memref<216x512xf32, #tpu.memory_space<vmem>>, vector<8x512xf32>,
    %c56_145 = arith.constant 56 : index
    %c0_146 = arith.constant 0 : index
    %258 = vector.load %arg15[%c56_145, %c0_146] : memref<216x512xf32, #tpu.memory_space<vmem>>, vector<8x512xf32>
    tpu.vector_store %arg15[%c56_145, %c0_146], %178 {strides = array<i32>} : memref<216x512xf32, #tpu.memory_space<vmem>>, vector<8x512xf32>,
    %c64_147 = arith.constant 64 : index
    %c0_148 = arith.constant 0 : index
    %259 = vector.load %arg15[%c64_147, %c0_148] : memref<216x512xf32, #tpu.memory_space<vmem>>, vector<8x512xf32>
    tpu.vector_store %arg15[%c64_147, %c0_148], %182 {strides = array<i32>} : memref<216x512xf32, #tpu.memory_space<vmem>>, vector<8x512xf32>,
    %c72_149 = arith.constant 72 : index
    %c0_150 = arith.constant 0 : index
    %260 = vector.load %arg15[%c72_149, %c0_150] : memref<216x512xf32, #tpu.memory_space<vmem>>, vector<8x512xf32>
    tpu.vector_store %arg15[%c72_149, %c0_150], %186 {strides = array<i32>} : memref<216x512xf32, #tpu.memory_space<vmem>>, vector<8x512xf32>,
    %c80_151 = arith.constant 80 : index
    %c0_152 = arith.constant 0 : index
    %261 = vector.load %arg15[%c80_151, %c0_152] : memref<216x512xf32, #tpu.memory_space<vmem>>, vector<8x512xf32>
    tpu.vector_store %arg15[%c80_151, %c0_152], %190 {strides = array<i32>} : memref<216x512xf32, #tpu.memory_space<vmem>>, vector<8x512xf32>,
    %c88_153 = arith.constant 88 : index
    %c0_154 = arith.constant 0 : index
    %262 = vector.load %arg15[%c88_153, %c0_154] : memref<216x512xf32, #tpu.memory_space<vmem>>, vector<8x512xf32>
    tpu.vector_store %arg15[%c88_153, %c0_154], %194 {strides = array<i32>} : memref<216x512xf32, #tpu.memory_space<vmem>>, vector<8x512xf32>,
    %c96_155 = arith.constant 96 : index
    %c0_156 = arith.constant 0 : index
    %263 = vector.load %arg15[%c96_155, %c0_156] : memref<216x512xf32, #tpu.memory_space<vmem>>, vector<8x512xf32>
    tpu.vector_store %arg15[%c96_155, %c0_156], %198 {strides = array<i32>} : memref<216x512xf32, #tpu.memory_space<vmem>>, vector<8x512xf32>,
    %c104_157 = arith.constant 104 : index
    %c0_158 = arith.constant 0 : index
    %264 = vector.load %arg15[%c104_157, %c0_158] : memref<216x512xf32, #tpu.memory_space<vmem>>, vector<8x512xf32>
    tpu.vector_store %arg15[%c104_157, %c0_158], %146 {strides = array<i32>} : memref<216x512xf32, #tpu.memory_space<vmem>>, vector<8x512xf32>,
    %c112_159 = arith.constant 112 : index
    %c0_160 = arith.constant 0 : index
    %265 = vector.load %arg15[%c112_159, %c0_160] : memref<216x512xf32, #tpu.memory_space<vmem>>, vector<8x512xf32>
    tpu.vector_store %arg15[%c112_159, %c0_160], %202 {strides = array<i32>} : memref<216x512xf32, #tpu.memory_space<vmem>>, vector<8x512xf32>,
    %c120_161 = arith.constant 120 : index
    %c0_162 = arith.constant 0 : index
    %266 = vector.load %arg15[%c120_161, %c0_162] : memref<216x512xf32, #tpu.memory_space<vmem>>, vector<8x512xf32>
    tpu.vector_store %arg15[%c120_161, %c0_162], %206 {strides = array<i32>} : memref<216x512xf32, #tpu.memory_space<vmem>>, vector<8x512xf32>,
    %c128_163 = arith.constant 128 : index
    %c0_164 = arith.constant 0 : index
    %267 = vector.load %arg15[%c128_163, %c0_164] : memref<216x512xf32, #tpu.memory_space<vmem>>, vector<8x512xf32>
    tpu.vector_store %arg15[%c128_163, %c0_164], %210 {strides = array<i32>} : memref<216x512xf32, #tpu.memory_space<vmem>>, vector<8x512xf32>,
    %c136_165 = arith.constant 136 : index
    %c0_166 = arith.constant 0 : index
    %268 = vector.load %arg15[%c136_165, %c0_166] : memref<216x512xf32, #tpu.memory_space<vmem>>, vector<8x512xf32>
    tpu.vector_store %arg15[%c136_165, %c0_166], %214 {strides = array<i32>} : memref<216x512xf32, #tpu.memory_space<vmem>>, vector<8x512xf32>,
    %c144_167 = arith.constant 144 : index
    %c0_168 = arith.constant 0 : index
    %269 = vector.load %arg15[%c144_167, %c0_168] : memref<216x512xf32, #tpu.memory_space<vmem>>, vector<8x512xf32>
    tpu.vector_store %arg15[%c144_167, %c0_168], %218 {strides = array<i32>} : memref<216x512xf32, #tpu.memory_space<vmem>>, vector<8x512xf32>,
    %c152_169 = arith.constant 152 : index
    %c0_170 = arith.constant 0 : index
    %270 = vector.load %arg15[%c152_169, %c0_170] : memref<216x512xf32, #tpu.memory_space<vmem>>, vector<8x512xf32>
    tpu.vector_store %arg15[%c152_169, %c0_170], %222 {strides = array<i32>} : memref<216x512xf32, #tpu.memory_space<vmem>>, vector<8x512xf32>,
    %c160_171 = arith.constant 160 : index
    %c0_172 = arith.constant 0 : index
    %271 = vector.load %arg15[%c160_171, %c0_172] : memref<216x512xf32, #tpu.memory_space<vmem>>, vector<8x512xf32>
    tpu.vector_store %arg15[%c160_171, %c0_172], %226 {strides = array<i32>} : memref<216x512xf32, #tpu.memory_space<vmem>>, vector<8x512xf32>,
    %c168_173 = arith.constant 168 : index
    %c0_174 = arith.constant 0 : index
    %272 = vector.load %arg15[%c168_173, %c0_174] : memref<216x512xf32, #tpu.memory_space<vmem>>, vector<8x512xf32>
    tpu.vector_store %arg15[%c168_173, %c0_174], %230 {strides = array<i32>} : memref<216x512xf32, #tpu.memory_space<vmem>>, vector<8x512xf32>,
    %c176_175 = arith.constant 176 : index
    %c0_176 = arith.constant 0 : index
    %273 = vector.load %arg15[%c176_175, %c0_176] : memref<216x512xf32, #tpu.memory_space<vmem>>, vector<8x512xf32>
    tpu.vector_store %arg15[%c176_175, %c0_176], %234 {strides = array<i32>} : memref<216x512xf32, #tpu.memory_space<vmem>>, vector<8x512xf32>,
    %c184_177 = arith.constant 184 : index
    %c0_178 = arith.constant 0 : index
    %274 = vector.load %arg15[%c184_177, %c0_178] : memref<216x512xf32, #tpu.memory_space<vmem>>, vector<8x512xf32>
    tpu.vector_store %arg15[%c184_177, %c0_178], %238 {strides = array<i32>} : memref<216x512xf32, #tpu.memory_space<vmem>>, vector<8x512xf32>,
    %c192_179 = arith.constant 192 : index
    %c0_180 = arith.constant 0 : index
    %275 = vector.load %arg15[%c192_179, %c0_180] : memref<216x512xf32, #tpu.memory_space<vmem>>, vector<8x512xf32>
    tpu.vector_store %arg15[%c192_179, %c0_180], %242 {strides = array<i32>} : memref<216x512xf32, #tpu.memory_space<vmem>>, vector<8x512xf32>,
    %c200_181 = arith.constant 200 : index
    %c0_182 = arith.constant 0 : index
    %276 = vector.load %arg15[%c200_181, %c0_182] : memref<216x512xf32, #tpu.memory_space<vmem>>, vector<8x512xf32>
    tpu.vector_store %arg15[%c200_181, %c0_182], %246 {strides = array<i32>} : memref<216x512xf32, #tpu.memory_space<vmem>>, vector<8x512xf32>,
    %c208_183 = arith.constant 208 : index
    %c0_184 = arith.constant 0 : index
    %277 = vector.load %arg15[%c208_183, %c0_184] : memref<216x512xf32, #tpu.memory_space<vmem>>, vector<8x512xf32>
    tpu.vector_store %arg15[%c208_183, %c0_184], %250 {strides = array<i32>} : memref<216x512xf32, #tpu.memory_space<vmem>>, vector<8x512xf32>,
    %c0_185 = arith.constant 0 : index
    %c0_186 = arith.constant 0 : index
    %278 = vector.load %arg15[%c0_185, %c0_186] : memref<216x512xf32, #tpu.memory_space<vmem>>, vector<216x512xf32>
    %c0_187 = arith.constant 0 : index
    %c0_188 = arith.constant 0 : index
    %279 = vector.load %arg6[%c0_187, %c0_188] : memref<8x216xf32, #tpu.memory_space<vmem>>, vector<8x216xf32>
    %cst_189 = arith.constant dense<0.000000e+00> : vector<8x512xf32>
    %280 = tpu.matmul %279, %278, %cst_189 {dimension_numbers = #tpu.dot_dimension_numbers<[1], [0], [0], [1], [0, 0, 1, 1], [], []>} : vector<8x216xf32>, vector<216x512xf32>, vector<8x512xf32> -> vector<8x512xf32>
    %c0_190 = arith.constant 0 : index
    %c0_191 = arith.constant 0 : index
    %281 = vector.load %arg7[%c0_190, %c0_191] : memref<8x1xf32, #tpu.memory_space<vmem>>, vector<8x1xf32>
    %282 = vector.broadcast %281 : vector<8x1xf32> to vector<8x512xf32>
    %283 = arith.mulf %280, %282 : vector<8x512xf32>
    %c0_192 = arith.constant 0 : index
    %c0_193 = arith.constant 0 : index
    %284 = vector.load %arg8[%c0_192, %c0_193] : memref<8x1xf32, #tpu.memory_space<vmem>>, vector<8x1xf32>
    %285 = vector.broadcast %284 : vector<8x1xf32> to vector<8x512xf32>
    %286 = arith.addf %283, %285 : vector<8x512xf32>
    %cst_194 = arith.constant 0.000000e+00 : f32
    %287 = vector.broadcast %cst_194 : f32 to vector<8x512xf32>
    %288 = arith.cmpf oge, %286, %287 : vector<8x512xf32>
    %cst_195 = arith.constant 0.00999999977 : f32
    %289 = vector.broadcast %cst_195 : f32 to vector<8x512xf32>
    %290 = arith.mulf %289, %286 : vector<8x512xf32>
    %291 = arith.select %288, %286, %290 : vector<8x512xi1>, vector<8x512xf32>
    %c0_196 = arith.constant 0 : index
    %c0_197 = arith.constant 0 : index
    %292 = vector.load %arg10[%c0_196, %c0_197] : memref<8x8xf32, #tpu.memory_space<vmem>>, vector<8x8xf32>
    %cst_198 = arith.constant dense<0.000000e+00> : vector<8x512xf32>
    %293 = tpu.matmul %292, %291, %cst_198 {dimension_numbers = #tpu.dot_dimension_numbers<[1], [0], [0], [1], [0, 0, 1, 1], [], []>} : vector<8x8xf32>, vector<8x512xf32>, vector<8x512xf32> -> vector<8x512xf32>
    %c0_199 = arith.constant 0 : index
    %c0_200 = arith.constant 0 : index
    %294 = vector.load %arg11[%c0_199, %c0_200] : memref<8x1xf32, #tpu.memory_space<vmem>>, vector<8x1xf32>
    %295 = vector.broadcast %294 : vector<8x1xf32> to vector<8x512xf32>
    %296 = arith.mulf %293, %295 : vector<8x512xf32>
    %c0_201 = arith.constant 0 : index
    %c0_202 = arith.constant 0 : index
    %297 = vector.load %arg12[%c0_201, %c0_202] : memref<8x1xf32, #tpu.memory_space<vmem>>, vector<8x1xf32>
    %298 = vector.broadcast %297 : vector<8x1xf32> to vector<8x512xf32>
    %299 = arith.addf %296, %298 : vector<8x512xf32>
    %cst_203 = arith.constant 0.000000e+00 : f32
    %300 = vector.broadcast %cst_203 : f32 to vector<8x512xf32>
    %301 = arith.cmpf oge, %299, %300 : vector<8x512xf32>
    %cst_204 = arith.constant 0.00999999977 : f32
    %302 = vector.broadcast %cst_204 : f32 to vector<8x512xf32>
    %303 = arith.mulf %302, %299 : vector<8x512xf32>
    %304 = arith.select %301, %299, %303 : vector<8x512xi1>, vector<8x512xf32>
    %305 = arith.addf %304, %1 : vector<8x512xf32>
    %cst_205 = arith.constant 0.000000e+00 : f32
    %306 = vector.broadcast %cst_205 : f32 to vector<8x512xf32>
    %307 = arith.cmpf oge, %305, %306 : vector<8x512xf32>
    %cst_206 = arith.constant 0.00999999977 : f32
    %308 = vector.broadcast %cst_206 : f32 to vector<8x512xf32>
    %309 = arith.mulf %308, %305 : vector<8x512xf32>
    %310 = arith.select %307, %305, %309 : vector<8x512xi1>, vector<8x512xf32>
    %c0_207 = arith.constant 0 : index
    %c0_208 = arith.constant 0 : index
    %c0_209 = arith.constant 0 : index
    %311 = vector.load %arg14[%c0_207, %c0_208, %c0_209] : memref<1x8x512xf32, #tpu.memory_space<vmem>>, vector<1x8x512xf32>
    %312 = vector.shape_cast %311 : vector<1x8x512xf32> to vector<8x512xf32>
    %313 = vector.shape_cast %310 : vector<8x512xf32> to vector<1x8x512xf32>
    tpu.vector_store %arg14[%c0_207, %c0_208, %c0_209], %313 {strides = array<i32>} : memref<1x8x512xf32, #tpu.memory_space<vmem>>, vector<1x8x512xf32>,
    return
  }
  func.func @transform_0(%arg0: i32) -> (i32, i32, i32) {
    %c0_i32 = arith.constant 0 : i32
    %c0_i32_0 = arith.constant 0 : i32
    %c0_i32_1 = arith.constant 0 : i32
    return %arg0, %c0_i32, %c0_i32_0 : i32, i32, i32
  }
  func.func @transform_1(%arg0: i32) -> (i32, i32) {
    %c0_i32 = arith.constant 0 : i32
    %c0_i32_0 = arith.constant 0 : i32
    %c0_i32_1 = arith.constant 0 : i32
    return %c0_i32, %c0_i32_0 : i32, i32
  }
  func.func @transform_2(%arg0: i32) -> (i32, i32) {
    %c0_i32 = arith.constant 0 : i32
    %c0_i32_0 = arith.constant 0 : i32
    %c0_i32_1 = arith.constant 0 : i32
    return %c0_i32, %c0_i32_0 : i32, i32
  }
  func.func @transform_3(%arg0: i32) -> (i32, i32) {
    %c0_i32 = arith.constant 0 : i32
    %c0_i32_0 = arith.constant 0 : i32
    %c0_i32_1 = arith.constant 0 : i32
    return %c0_i32, %c0_i32_0 : i32, i32
  }
  func.func @transform_4(%arg0: i32) -> (i32, i32) {
    %c0_i32 = arith.constant 0 : i32
    %c0_i32_0 = arith.constant 0 : i32
    %c0_i32_1 = arith.constant 0 : i32
    return %c0_i32, %c0_i32_0 : i32, i32
  }
  func.func @transform_5(%arg0: i32) -> (i32, i32) {
    %c0_i32 = arith.constant 0 : i32
    %c0_i32_0 = arith.constant 0 : i32
    %c0_i32_1 = arith.constant 0 : i32
    return %c0_i32, %c0_i32_0 : i32, i32
  }
  func.func @transform_6(%arg0: i32) -> (i32, i32) {
    %c0_i32 = arith.constant 0 : i32
    %c0_i32_0 = arith.constant 0 : i32
    %c0_i32_1 = arith.constant 0 : i32
    return %c0_i32, %c0_i32_0 : i32, i32
  }
  func.func @transform_7(%arg0: i32) -> (i32, i32) {
    %c0_i32 = arith.constant 0 : i32
    %c0_i32_0 = arith.constant 0 : i32
    %c0_i32_1 = arith.constant 0 : i32
    return %c0_i32, %c0_i32_0 : i32, i32
  }
  func.func @transform_8(%arg0: i32) -> (i32, i32) {
    %c0_i32 = arith.constant 0 : i32
    %c0_i32_0 = arith.constant 0 : i32
    %c0_i32_1 = arith.constant 0 : i32
    return %c0_i32, %c0_i32_0 : i32, i32
  }
  func.func @transform_9(%arg0: i32) -> (i32, i32) {
    %c0_i32 = arith.constant 0 : i32
    %c0_i32_0 = arith.constant 0 : i32
    %c0_i32_1 = arith.constant 0 : i32
    return %c0_i32, %c0_i32_0 : i32, i32
  }
  func.func @transform_10(%arg0: i32) -> (i32, i32) {
    %c0_i32 = arith.constant 0 : i32
    %c0_i32_0 = arith.constant 0 : i32
    %c0_i32_1 = arith.constant 0 : i32
    return %c0_i32, %c0_i32_0 : i32, i32
  }
  func.func @transform_11(%arg0: i32) -> (i32, i32) {
    %c0_i32 = arith.constant 0 : i32
    %c0_i32_0 = arith.constant 0 : i32
    %c0_i32_1 = arith.constant 0 : i32
    return %c0_i32, %c0_i32_0 : i32, i32
  }
  func.func @transform_12(%arg0: i32) -> (i32, i32) {
    %c0_i32 = arith.constant 0 : i32
    %c0_i32_0 = arith.constant 0 : i32
    %c0_i32_1 = arith.constant 0 : i32
    return %c0_i32, %c0_i32_0 : i32, i32
  }
  func.func @transform_13(%arg0: i32) -> (i32, i32, i32) {
    %c0_i32 = arith.constant 0 : i32
    %c0_i32_0 = arith.constant 0 : i32
    %c0_i32_1 = arith.constant 0 : i32
    return %arg0, %c0_i32, %c0_i32_0 : i32, i32, i32
  }
}

</mosaic_0001>

<llo_original>
// kernel: tpu_custom_call.1
$region0: #{tpu_custom_call.1}
  #allocation0 [shape = 'u32[]', space=smem, size = 0x4, offset = 0x4, fixed_abs, tag = 'smem constant byte address 0x4 - core index']
  #allocation1 [shape = 'u32[144,128]{1,0:T(1,128)}', space=vmem, size = 0x12000, scoped, tag = 'internal scratch']
  #allocation2 [shape = 'f32[216,512]{1,0:T(8,128)}', space=vmem, size = 0x6c000, scoped, tag = 'scratch operand']
  %s0 = inlined_call_operand.hbm [shape: f32[2,8,512], index: 0, kind: input, shape index: {}]
  %s1 = inlined_call_operand.vmem [shape: f32[8,216], index: 1, kind: input, shape index: {}]
  %s2 = inlined_call_operand.vmem [shape: f32[8,1], index: 2, kind: input, shape index: {}]
  %s3 = inlined_call_operand.vmem [shape: f32[8,1], index: 3, kind: input, shape index: {}]
  %s4 = inlined_call_operand.hbm [shape: f32[27,512], index: 4, kind: input, shape index: {}]
  %s5 = inlined_call_operand.vmem [shape: f32[8,216], index: 5, kind: input, shape index: {}]
  %s6 = inlined_call_operand.vmem [shape: f32[8,1], index: 6, kind: input, shape index: {}]
  %s7 = inlined_call_operand.vmem [shape: f32[8,1], index: 7, kind: input, shape index: {}]
  %s8 = inlined_call_operand.hbm [shape: f32[27,512], index: 8, kind: input, shape index: {}]
  %s9 = inlined_call_operand.vmem [shape: f32[8,8], index: 9, kind: input, shape index: {}]
  %s10 = inlined_call_operand.vmem [shape: f32[8,1], index: 10, kind: input, shape index: {}]
  %s11 = inlined_call_operand.vmem [shape: f32[8,1], index: 11, kind: input, shape index: {}]
  %s12 = inlined_call_operand.vmem [shape: f32[1,512], index: 12, kind: input, shape index: {}]
  %s13 = inlined_call_operand.hbm [shape: f32[2,8,512], index: 13, kind: output, shape index: {}]
  %s14 = sld [smem:[#allocation0]]
  $region97: #{tpu_custom_call.1} parent=0
    _
  %s16 = ssub.s32 1, %s14
  %s17 = scalar_select 0, %s16, %s14
  $region1: #{tpu_custom_call.1} parent=0
    #allocation3 [shape = 'u8[32768]{0}', space=vmem, size = 0x8000, scoped, tag = 'input window, operand 0']
    #allocation4 [shape = 's32[2]{0}', space=sflag, size = 0x8, scoped, tag = 'scoped memory for tpu_custom_call.1']
    #allocation5 [shape = 's32[2]{0}', space=sflag, size = 0x8, scoped, tag = 'scoped memory for tpu_custom_call.1']
    #allocation6 [shape = 'u8[65536]{0}', space=vmem, size = 0x10000, scoped, tag = 'input window, operand 4, single buffered']
    #allocation7 [shape = 's32[1]{0}', space=sflag, size = 0x4, scoped, tag = 'scoped memory for tpu_custom_call.1']
    #allocation8 [shape = 'u8[65536]{0}', space=vmem, size = 0x10000, scoped, tag = 'input window, operand 8, single buffered']
    #allocation9 [shape = 'u8[32768]{0}', space=vmem, size = 0x8000, scoped, tag = 'output window, operand 0']
    %18 = vsyncpa [#allocation4], 0
    %s19 = scalar_lea.sflag [#allocation4], 1
    %20 = vsyncpa %s19, 0
    %21 = vsyncpa [#allocation7], 0
    %22 = vsyncpa [#allocation5], 0
    %s23 = scalar_lea.sflag [#allocation5], 1
    %24 = vsyncpa %s23, 0
    loop: start=0, step=1, limit=4
    $region2: #{tpu_custom_call.1} parent=1 // loop_pre_header
      _
    $region3: #{tpu_custom_call.1} parent=1 // loop_header
      %s26 = sphi 0, %s30
      %p27 = scmp.ge.s32.totalorder %s26, 4
      %s36 = sphi 0, %s38
      %s39 = sphi 0, %s36
      %s40 = sphi 0, %s39
      %s56 = sphi 0, %s40
      %s60 = sphi 0, %s60
      %s62 = sphi 0, %s60
      %s63 = sphi 0, %s62
      %s77 = sphi 0, %s63
      %s81 = sphi 0, %s81
      %s83 = sphi 0, %s81
      %s84 = sphi 0, %s83
      %s98 = sphi 0, %s84
      %s102 = sphi 0, %s102
      %s104 = sphi 0, %s102
      %s105 = sphi 0, %s104
      %s119 = sphi 0, %s105
      %s123 = sphi 0, %s123
      %s125 = sphi 0, %s123
      %s126 = sphi 0, %s125
      %s140 = sphi 0, %s126
      %s144 = sphi 0, %s144
      %s146 = sphi 0, %s144
      %s147 = sphi 0, %s146
      %s161 = sphi 0, %s147
      %s165 = sphi 0, %s165
      %s167 = sphi 0, %s165
      %s168 = sphi 0, %s167
      %s182 = sphi 0, %s168
      %s186 = sphi 0, %s186
      %s188 = sphi 0, %s186
      %s189 = sphi 0, %s188
      %s203 = sphi 0, %s189
      %s207 = sphi 0, %s207
      %s209 = sphi 0, %s207
      %s210 = sphi 0, %s209
      %s224 = sphi 0, %s210
      %s228 = sphi 0, %s228
      %s230 = sphi 0, %s228
      %s231 = sphi 0, %s230
      %s245 = sphi 0, %s231
      %s249 = sphi 0, %s249
      %s251 = sphi 0, %s249
      %s252 = sphi 0, %s251
      %s266 = sphi 0, %s252
      %s270 = sphi 0, %s270
      %s272 = sphi 0, %s270
      %s273 = sphi 0, %s272
      %s287 = sphi 0, %s273
      %s291 = sphi 0, %s291
      %s293 = sphi 0, %s291
      %s294 = sphi 0, %s293
      %s308 = sphi 0, %s294
      %s314 = sphi 0, %s316
      %s317 = sphi 0, %s314
      %s318 = sphi 0, %s317
      %s334 = sphi 0, %s318
    $region4: #{tpu_custom_call.1} parent=1 // loop_header_branch
      %29 = sbr.rel (%p27) target = $region8
    $region5: #{tpu_custom_call.1} parent=1 // loop_body
      %s31 = ssub.s32 %s26, 1
      %s32 = ssub.s32 %s26, 2
      %s33 = sadd.s32 %s26, 1
      %s34 = ssub.s32 %s26, %s33
      %p35 = scmp.eq.s32.totalorder %s34, 0
      %s37 = sadd.s32 %s36, 1
      %s38 = scalar_select %p35, %s36, %s37
      %p41 = pneg %p35
      %p42 = scmp.eq.s32.totalorder %s26, 1
      %p43 = por %p41, %p42
      %p44 = scmp.ne.s32.totalorder %s36, %s39
      %p45 = scmp.eq.s32.totalorder %s26, 0
      %p46 = por %p44, %p45
      %p47 = scmp.ne.s32.totalorder %s36, %s39
      %p48 = scmp.eq.s32.totalorder %s31, 1
      %p49 = por %p47, %p48
      %p50 = scmp.ne.s32.totalorder %s39, %s40
      %p51 = scmp.eq.s32.totalorder %s31, 0
      %p52 = por %p50, %p51
      %p53 = scmp.ne.s32.totalorder %s39, %s40
      %p54 = scmp.eq.s32.totalorder %s32, 1
      %p55 = por %p53, %p54
      %p57 = scmp.ne.s32.totalorder %s40, %s56
      %p58 = scmp.eq.s32.totalorder %s32, 0
      %p59 = por %p57, %p58
      %s61 = sadd.s32 %s60, 1
      %p64 = scmp.eq.s32.totalorder %s26, 1
      %p65 = scmp.ne.s32.totalorder %s60, %s62
      %p66 = scmp.eq.s32.totalorder %s26, 0
      %p67 = por %p65, %p66
      %p68 = scmp.ne.s32.totalorder %s60, %s62
      %p69 = scmp.eq.s32.totalorder %s31, 1
      %p70 = por %p68, %p69
      %p71 = scmp.ne.s32.totalorder %s62, %s63
      %p72 = scmp.eq.s32.totalorder %s31, 0
      %p73 = por %p71, %p72
      %p74 = scmp.ne.s32.totalorder %s62, %s63
      %p75 = scmp.eq.s32.totalorder %s32, 1
      %p76 = por %p74, %p75
      %p78 = scmp.ne.s32.totalorder %s63, %s77
      %p79 = scmp.eq.s32.totalorder %s32, 0
      %p80 = por %p78, %p79
      %s82 = sadd.s32 %s81, 1
      %p85 = scmp.eq.s32.totalorder %s26, 1
      %p86 = scmp.ne.s32.totalorder %s81, %s83
      %p87 = scmp.eq.s32.totalorder %s26, 0
      %p88 = por %p86, %p87
      %p89 = scmp.ne.s32.totalorder %s81, %s83
      %p90 = scmp.eq.s32.totalorder %s31, 1
      %p91 = por %p89, %p90
      %p92 = scmp.ne.s32.totalorder %s83, %s84
      %p93 = scmp.eq.s32.totalorder %s31, 0
      %p94 = por %p92, %p93
      %p95 = scmp.ne.s32.totalorder %s83, %s84
      %p96 = scmp.eq.s32.totalorder %s32, 1
      %p97 = por %p95, %p96
      %p99 = scmp.ne.s32.totalorder %s84, %s98
      %p100 = scmp.eq.s32.totalorder %s32, 0
      %p101 = por %p99, %p100
      %s103 = sadd.s32 %s102, 1
      %p106 = scmp.eq.s32.totalorder %s26, 1
      %p107 = scmp.ne.s32.totalorder %s102, %s104
      %p108 = scmp.eq.s32.totalorder %s26, 0
      %p109 = por %p107, %p108
      %p110 = scmp.ne.s32.totalorder %s102, %s104
      %p111 = scmp.eq.s32.totalorder %s31, 1
      %p112 = por %p110, %p111
      %p113 = scmp.ne.s32.totalorder %s104, %s105
      %p114 = scmp.eq.s32.totalorder %s31, 0
      %p115 = por %p113, %p114
      %p116 = scmp.ne.s32.totalorder %s104, %s105
      %p117 = scmp.eq.s32.totalorder %s32, 1
      %p118 = por %p116, %p117
      %p120 = scmp.ne.s32.totalorder %s105, %s119
      %p121 = scmp.eq.s32.totalorder %s32, 0
      %p122 = por %p120, %p121
      %s124 = sadd.s32 %s123, 1
      %p127 = scmp.eq.s32.totalorder %s26, 1
      %p128 = scmp.ne.s32.totalorder %s123, %s125
      %p129 = scmp.eq.s32.totalorder %s26, 0
      %p130 = por %p128, %p129
      %p131 = scmp.ne.s32.totalorder %s123, %s125
      %p132 = scmp.eq.s32.totalorder %s31, 1
      %p133 = por %p131, %p132
      %p134 = scmp.ne.s32.totalorder %s125, %s126
      %p135 = scmp.eq.s32.totalorder %s31, 0
      %p136 = por %p134, %p135
      %p137 = scmp.ne.s32.totalorder %s125, %s126
      %p138 = scmp.eq.s32.totalorder %s32, 1
      %p139 = por %p137, %p138
      %p141 = scmp.ne.s32.totalorder %s126, %s140
      %p142 = scmp.eq.s32.totalorder %s32, 0
      %p143 = por %p141, %p142
      %s145 = sadd.s32 %s144, 1
      %p148 = scmp.eq.s32.totalorder %s26, 1
      %p149 = scmp.ne.s32.totalorder %s144, %s146
      %p150 = scmp.eq.s32.totalorder %s26, 0
      %p151 = por %p149, %p150
      %p152 = scmp.ne.s32.totalorder %s144, %s146
      %p153 = scmp.eq.s32.totalorder %s31, 1
      %p154 = por %p152, %p153
      %p155 = scmp.ne.s32.totalorder %s146, %s147
      %p156 = scmp.eq.s32.totalorder %s31, 0
      %p157 = por %p155, %p156
      %p158 = scmp.ne.s32.totalorder %s146, %s147
      %p159 = scmp.eq.s32.totalorder %s32, 1
      %p160 = por %p158, %p159
      %p162 = scmp.ne.s32.totalorder %s147, %s161
      %p163 = scmp.eq.s32.totalorder %s32, 0
      %p164 = por %p162, %p163
      %s166 = sadd.s32 %s165, 1
      %p169 = scmp.eq.s32.totalorder %s26, 1
      %p170 = scmp.ne.s32.totalorder %s165, %s167
      %p171 = scmp.eq.s32.totalorder %s26, 0
      %p172 = por %p170, %p171
      %p173 = scmp.ne.s32.totalorder %s165, %s167
      %p174 = scmp.eq.s32.totalorder %s31, 1
      %p175 = por %p173, %p174
      %p176 = scmp.ne.s32.totalorder %s167, %s168
      %p177 = scmp.eq.s32.totalorder %s31, 0
      %p178 = por %p176, %p177
      %p179 = scmp.ne.s32.totalorder %s167, %s168
      %p180 = scmp.eq.s32.totalorder %s32, 1
      %p181 = por %p179, %p180
      %p183 = scmp.ne.s32.totalorder %s168, %s182
      %p184 = scmp.eq.s32.totalorder %s32, 0
      %p185 = por %p183, %p184
      %s187 = sadd.s32 %s186, 1
      %p190 = scmp.eq.s32.totalorder %s26, 1
      %p191 = scmp.ne.s32.totalorder %s186, %s188
      %p192 = scmp.eq.s32.totalorder %s26, 0
      %p193 = por %p191, %p192
      %p194 = scmp.ne.s32.totalorder %s186, %s188
      %p195 = scmp.eq.s32.totalorder %s31, 1
      %p196 = por %p194, %p195
      %p197 = scmp.ne.s32.totalorder %s188, %s189
      %p198 = scmp.eq.s32.totalorder %s31, 0
      %p199 = por %p197, %p198
      %p200 = scmp.ne.s32.totalorder %s188, %s189
      %p201 = scmp.eq.s32.totalorder %s32, 1
      %p202 = por %p200, %p201
      %p204 = scmp.ne.s32.totalorder %s189, %s203
      %p205 = scmp.eq.s32.totalorder %s32, 0
      %p206 = por %p204, %p205
      %s208 = sadd.s32 %s207, 1
      %p211 = scmp.eq.s32.totalorder %s26, 1
      %p212 = scmp.ne.s32.totalorder %s207, %s209
      %p213 = scmp.eq.s32.totalorder %s26, 0
      %p214 = por %p212, %p213
      %p215 = scmp.ne.s32.totalorder %s207, %s209
      %p216 = scmp.eq.s32.totalorder %s31, 1
      %p217 = por %p215, %p216
      %p218 = scmp.ne.s32.totalorder %s209, %s210
      %p219 = scmp.eq.s32.totalorder %s31, 0
      %p220 = por %p218, %p219
      %p221 = scmp.ne.s32.totalorder %s209, %s210
      %p222 = scmp.eq.s32.totalorder %s32, 1
      %p223 = por %p221, %p222
      %p225 = scmp.ne.s32.totalorder %s210, %s224
      %p226 = scmp.eq.s32.totalorder %s32, 0
      %p227 = por %p225, %p226
      %s229 = sadd.s32 %s228, 1
      %p232 = scmp.eq.s32.totalorder %s26, 1
      %p233 = scmp.ne.s32.totalorder %s228, %s230
      %p234 = scmp.eq.s32.totalorder %s26, 0
      %p235 = por %p233, %p234
      %p236 = scmp.ne.s32.totalorder %s228, %s230
      %p237 = scmp.eq.s32.totalorder %s31, 1
      %p238 = por %p236, %p237
      %p239 = scmp.ne.s32.totalorder %s230, %s231
      %p240 = scmp.eq.s32.totalorder %s31, 0
      %p241 = por %p239, %p240
      %p242 = scmp.ne.s32.totalorder %s230, %s231
      %p243 = scmp.eq.s32.totalorder %s32, 1
      %p244 = por %p242, %p243
      %p246 = scmp.ne.s32.totalorder %s231, %s245
      %p247 = scmp.eq.s32.totalorder %s32, 0
      %p248 = por %p246, %p247
      %s250 = sadd.s32 %s249, 1
      %p253 = scmp.eq.s32.totalorder %s26, 1
      %p254 = scmp.ne.s32.totalorder %s249, %s251
      %p255 = scmp.eq.s32.totalorder %s26, 0
      %p256 = por %p254, %p255
      %p257 = scmp.ne.s32.totalorder %s249, %s251
      %p258 = scmp.eq.s32.totalorder %s31, 1
      %p259 = por %p257, %p258
      %p260 = scmp.ne.s32.totalorder %s251, %s252
      %p261 = scmp.eq.s32.totalorder %s31, 0
      %p262 = por %p260, %p261
      %p263 = scmp.ne.s32.totalorder %s251, %s252
      %p264 = scmp.eq.s32.totalorder %s32, 1
      %p265 = por %p263, %p264
      %p267 = scmp.ne.s32.totalorder %s252, %s266
      %p268 = scmp.eq.s32.totalorder %s32, 0
      %p269 = por %p267, %p268
      %s271 = sadd.s32 %s270, 1
      %p274 = scmp.eq.s32.totalorder %s26, 1
      %p275 = scmp.ne.s32.totalorder %s270, %s272
      %p276 = scmp.eq.s32.totalorder %s26, 0
      %p277 = por %p275, %p276
      %p278 = scmp.ne.s32.totalorder %s270, %s272
      %p279 = scmp.eq.s32.totalorder %s31, 1
      %p280 = por %p278, %p279
      %p281 = scmp.ne.s32.totalorder %s272, %s273
      %p282 = scmp.eq.s32.totalorder %s31, 0
      %p283 = por %p281, %p282
      %p284 = scmp.ne.s32.totalorder %s272, %s273
      %p285 = scmp.eq.s32.totalorder %s32, 1
      %p286 = por %p284, %p285
      %p288 = scmp.ne.s32.totalorder %s273, %s287
      %p289 = scmp.eq.s32.totalorder %s32, 0
      %p290 = por %p288, %p289
      %s292 = sadd.s32 %s291, 1
      %p295 = scmp.eq.s32.totalorder %s26, 1
      %p296 = scmp.ne.s32.totalorder %s291, %s293
      %p297 = scmp.eq.s32.totalorder %s26, 0
      %p298 = por %p296, %p297
      %p299 = scmp.ne.s32.totalorder %s291, %s293
      %p300 = scmp.eq.s32.totalorder %s31, 1
      %p301 = por %p299, %p300
      %p302 = scmp.ne.s32.totalorder %s293, %s294
      %p303 = scmp.eq.s32.totalorder %s31, 0
      %p304 = por %p302, %p303
      %p305 = scmp.ne.s32.totalorder %s293, %s294
      %p306 = scmp.eq.s32.totalorder %s32, 1
      %p307 = por %p305, %p306
      %p309 = scmp.ne.s32.totalorder %s294, %s308
      %p310 = scmp.eq.s32.totalorder %s32, 0
      %p311 = por %p309, %p310
      %s312 = ssub.s32 %s26, %s33
      %p313 = scmp.eq.s32.totalorder %s312, 0
      %s315 = sadd.s32 %s314, 1
      %s316 = scalar_select %p313, %s314, %s315
      %p319 = pneg %p313
      %p320 = scmp.eq.s32.totalorder %s26, 1
      %p321 = por %p319, %p320
      %p322 = scmp.ne.s32.totalorder %s314, %s317
      %p323 = scmp.eq.s32.totalorder %s26, 0
      %p324 = por %p322, %p323
      %p325 = scmp.ne.s32.totalorder %s314, %s317
      %p326 = scmp.eq.s32.totalorder %s31, 1
      %p327 = por %p325, %p326
      %p328 = scmp.ne.s32.totalorder %s317, %s318
      %p329 = scmp.eq.s32.totalorder %s31, 0
      %p330 = por %p328, %p329
      %p331 = scmp.ne.s32.totalorder %s317, %s318
      %p332 = scmp.eq.s32.totalorder %s32, 1
      %p333 = por %p331, %p332
      %p335 = scmp.ne.s32.totalorder %s318, %s334
      %p336 = scmp.eq.s32.totalorder %s32, 0
      %p337 = por %p335, %p336
      %p338 = scmp.le.s32.totalorder 1, %s26
      %p339 = scmp.lt.s32.totalorder %s26, 3
      %p340 = pnand %p338, %p339
      %p341 = pneg %p340
      // Predicated region
      $region9: #{tpu_custom_call.1} parent=5 // pred_check
        _
      $region10: #{tpu_custom_call.1} parent=5 // pred_check_branch
        %343 = sbr.rel (%p340) target = $region12
      $region11: #{tpu_custom_call.1} parent=5 // pred_region
        %s344 = ssub.s32 %s26, 1
        // Predicated region
        $region13: #{tpu_custom_call.1} parent=11 // pred_check
          %p345 = pneg %p73
        $region14: #{tpu_custom_call.1} parent=11 // pred_check_branch
          %347 = sbr.rel (%p345) target = $region16
        $region15: #{tpu_custom_call.1} parent=11 // pred_region
          _
        $region16: #{tpu_custom_call.1} parent=11 // pred_fallthru
          _
        // Predicated region
        $region17: #{tpu_custom_call.1} parent=11 // pred_check
          %p348 = pneg %p94
        $region18: #{tpu_custom_call.1} parent=11 // pred_check_branch
          %350 = sbr.rel (%p348) target = $region20
        $region19: #{tpu_custom_call.1} parent=11 // pred_region
          _
        $region20: #{tpu_custom_call.1} parent=11 // pred_fallthru
          _
        // Predicated region
        $region21: #{tpu_custom_call.1} parent=11 // pred_check
          %p351 = pneg %p115
        $region22: #{tpu_custom_call.1} parent=11 // pred_check_branch
          %353 = sbr.rel (%p351) target = $region24
        $region23: #{tpu_custom_call.1} parent=11 // pred_region
          _
        $region24: #{tpu_custom_call.1} parent=11 // pred_fallthru
          _
        // Predicated region
        $region25: #{tpu_custom_call.1} parent=11 // pred_check
          %p354 = pneg %p136
        $region26: #{tpu_custom_call.1} parent=11 // pred_check_branch
          %356 = sbr.rel (%p354) target = $region28
        $region27: #{tpu_custom_call.1} parent=11 // pred_region
          %s358 = ssub.s32 2048, 2048
          %359 = vsyncadd [#allocation7], %s358
          %s360 = sshll.u32 [#allocation6], 4
          %s361 = int_to_ptr.vmem [resolvable:$true] %s360
          %366 = dma.hbm_to_vmem [thread:$0]  %s4, 2048, %s361, [#allocation7], 512, 512, 32
        $region28: #{tpu_custom_call.1} parent=11 // pred_fallthru
          _
        // Predicated region
        $region29: #{tpu_custom_call.1} parent=11 // pred_check
          %p367 = pneg %p157
        $region30: #{tpu_custom_call.1} parent=11 // pred_check_branch
          %369 = sbr.rel (%p367) target = $region32
        $region31: #{tpu_custom_call.1} parent=11 // pred_region
          _
        $region32: #{tpu_custom_call.1} parent=11 // pred_fallthru
          _
        // Predicated region
        $region33: #{tpu_custom_call.1} parent=11 // pred_check
          %p370 = pneg %p178
        $region34: #{tpu_custom_call.1} parent=11 // pred_check_branch
          %372 = sbr.rel (%p370) target = $region36
        $region35: #{tpu_custom_call.1} parent=11 // pred_region
          _
        $region36: #{tpu_custom_call.1} parent=11 // pred_fallthru
          _
        // Predicated region
        $region37: #{tpu_custom_call.1} parent=11 // pred_check
          %p373 = pneg %p199
        $region38: #{tpu_custom_call.1} parent=11 // pred_check_branch
          %375 = sbr.rel (%p373) target = $region40
        $region39: #{tpu_custom_call.1} parent=11 // pred_region
          _
        $region40: #{tpu_custom_call.1} parent=11 // pred_fallthru
          _
        // Predicated region
        $region41: #{tpu_custom_call.1} parent=11 // pred_check
          %p376 = pneg %p220
        $region42: #{tpu_custom_call.1} parent=11 // pred_check_branch
          %378 = sbr.rel (%p376) target = $region44
        $region43: #{tpu_custom_call.1} parent=11 // pred_region
          %s380 = ssub.s32 2048, 2048
          %381 = vsyncadd [#allocation7], %s380
          %s382 = sshll.u32 [#allocation8], 4
          %s383 = int_to_ptr.vmem [resolvable:$true] %s382
          %388 = dma.hbm_to_vmem [thread:$0]  %s8, 2048, %s383, [#allocation7], 512, 512, 32
        $region44: #{tpu_custom_call.1} parent=11 // pred_fallthru
          _
        // Predicated region
        $region45: #{tpu_custom_call.1} parent=11 // pred_check
          %p389 = pneg %p241
        $region46: #{tpu_custom_call.1} parent=11 // pred_check_branch
          %391 = sbr.rel (%p389) target = $region48
        $region47: #{tpu_custom_call.1} parent=11 // pred_region
          _
        $region48: #{tpu_custom_call.1} parent=11 // pred_fallthru
          _
        // Predicated region
        $region49: #{tpu_custom_call.1} parent=11 // pred_check
          %p392 = pneg %p262
        $region50: #{tpu_custom_call.1} parent=11 // pred_check_branch
          %394 = sbr.rel (%p392) target = $region52
        $region51: #{tpu_custom_call.1} parent=11 // pred_region
          _
        $region52: #{tpu_custom_call.1} parent=11 // pred_fallthru
          _
        // Predicated region
        $region53: #{tpu_custom_call.1} parent=11 // pred_check
          %p395 = pneg %p283
        $region54: #{tpu_custom_call.1} parent=11 // pred_check_branch
          %397 = sbr.rel (%p395) target = $region56
        $region55: #{tpu_custom_call.1} parent=11 // pred_region
          _
        $region56: #{tpu_custom_call.1} parent=11 // pred_fallthru
          _
        // Predicated region
        $region57: #{tpu_custom_call.1} parent=11 // pred_check
          %p398 = pneg %p304
        $region58: #{tpu_custom_call.1} parent=11 // pred_check_branch
          %400 = sbr.rel (%p398) target = $region60
        $region59: #{tpu_custom_call.1} parent=11 // pred_region
          _
        $region60: #{tpu_custom_call.1} parent=11 // pred_fallthru
          _
      $region12: #{tpu_custom_call.1} parent=5 // pred_fallthru
        _
      %p401 = scmp.lt.s32.totalorder %s26, 2
      // Predicated region
      $region61: #{tpu_custom_call.1} parent=5 // pred_check
        %p402 = pneg %p401
      $region62: #{tpu_custom_call.1} parent=5 // pred_check_branch
        %404 = sbr.rel (%p402) target = $region64
      $region63: #{tpu_custom_call.1} parent=5 // pred_region
        // Predicated region
        $region65: #{tpu_custom_call.1} parent=63 // pred_check
          %p405 = pneg %p46
        $region66: #{tpu_custom_call.1} parent=63 // pred_check_branch
          %407 = sbr.rel (%p405) target = $region68
        $region67: #{tpu_custom_call.1} parent=63 // pred_region
          %s408 = sand.u32 %s36, 1
          %s409 = scalar_lea.sflag [#allocation4], %s408
          %s410 = sand.u32 %s36, 1
          %s411 = smul.addr %s410, 32
          %s412 = scalar_lea.vmem [#allocation3], %s411
          %s414 = ssub.s32 512, 512
          %415 = vsyncadd %s409, %s414
          %s416 = smul.addr %s26, 4
          %s417 = smul.addr %s416, 128
          %s418 = scalar_lea.hbm %s0, %s417
          %s420 = sshll.u32 %s412, 4
          %s421 = int_to_ptr.vmem [resolvable:$true] %s420
          %423 = dma.hbm_to_vmem [thread:$0]  %s418, 512, %s421, %s409
        $region68: #{tpu_custom_call.1} parent=63 // pred_fallthru
          _
      $region64: #{tpu_custom_call.1} parent=5 // pred_fallthru
        _
      %p424 = scmp.le.s32.totalorder 1, %s26
      %p425 = scmp.lt.s32.totalorder %s26, 3
      %p426 = pnand %p424, %p425
      %p427 = pneg %p426
      // Predicated region
      $region69: #{tpu_custom_call.1} parent=5 // pred_check
        _
      $region70: #{tpu_custom_call.1} parent=5 // pred_check_branch
        %429 = sbr.rel (%p426) target = $region72
      $region71: #{tpu_custom_call.1} parent=5 // pred_region
        %s430 = ssub.s32 %s26, 1
        %s431 = sand.u32 %s39, 1
        %s432 = scalar_lea.sflag [#allocation4], %s431
        %s433 = sand.u32 %s39, 1
        %s434 = smul.addr %s433, 32
        %s435 = scalar_lea.vmem [#allocation3], %s434
        // Predicated region
        $region73: #{tpu_custom_call.1} parent=71 // pred_check
          %p436 = pneg %p52
        $region74: #{tpu_custom_call.1} parent=71 // pred_check_branch
          %438 = sbr.rel (%p436) target = $region76
        $region75: #{tpu_custom_call.1} parent=71 // pred_region
          %439 = dma.done %s432, 512
        $region76: #{tpu_custom_call.1} parent=71 // pred_fallthru
          _
        // Predicated region
        $region77: #{tpu_custom_call.1} parent=71 // pred_check
          %p440 = pneg %p136
        $region78: #{tpu_custom_call.1} parent=71 // pred_check_branch
          %442 = sbr.rel (%p440) target = $region80
        $region79: #{tpu_custom_call.1} parent=71 // pred_region
          %443 = dma.done [#allocation7], 2048
        $region80: #{tpu_custom_call.1} parent=71 // pred_fallthru
          _
        // Predicated region
        $region81: #{tpu_custom_call.1} parent=71 // pred_check
          %p444 = pneg %p220
        $region82: #{tpu_custom_call.1} parent=71 // pred_check_branch
          %446 = sbr.rel (%p444) target = $region84
        $region83: #{tpu_custom_call.1} parent=71 // pred_region
          %447 = dma.done [#allocation7], 2048
        $region84: #{tpu_custom_call.1} parent=71 // pred_fallthru
          _
        %s448 = sand.u32 %s39, 1
        %s449 = scalar_lea.sflag [#allocation4], %s448
        %s450 = sand.u32 %s39, 1
        %s451 = smul.addr %s450, 32
        %s452 = scalar_lea.vmem [#allocation3], %s451
        %p453 = pneg %p52
        %p454 = pneg %p49
        %p455 = pneg %p73
        %p456 = pneg %p70
        %p457 = pneg %p94
        %p458 = pneg %p91
        %p459 = pneg %p115
        %p460 = pneg %p112
        %p461 = pneg %p136
        %p462 = pneg %p133
        %p463 = pneg %p157
        %p464 = pneg %p154
        %p465 = pneg %p178
        %p466 = pneg %p175
        %p467 = pneg %p199
        %p468 = pneg %p196
        %p469 = pneg %p220
        %p470 = pneg %p217
        %p471 = pneg %p241
        %p472 = pneg %p238
        %p473 = pneg %p262
        %p474 = pneg %p259
        %p475 = pneg %p283
        %p476 = pneg %p280
        %p477 = pneg %p304
        %p478 = pneg %p301
        %p479 = pneg %p330
        %p480 = pneg %p327
        %s481 = sand.u32 %s317, 1
        %s482 = scalar_lea.sflag [#allocation5], %s481
        %s483 = sand.u32 %s317, 1
        %s484 = smul.addr %s483, 32
        %s485 = scalar_lea.vmem [#allocation9], %s484
        %v486 = vld [vmem:[%s435] sm:$0xff]
        %v487 = vld [vmem:[%s435 + $0x8] sm:$0xff]
        %v488 = vld [vmem:[%s435 + $0x10] sm:$0xff]
        %v489 = vld [vmem:[%s435 + $0x18] sm:$0xff]
        %490 = vrot.lane.b32.xlu0 %v486, 18
        %v491 = vpop.permute.xlu0 %490
        %492 = vrot.lane.b32.xlu0 %v487, 18
        %v493 = vpop.permute.xlu0 %492
        %494 = vrot.lane.b32.xlu0 %v488, 18
        %v495 = vpop.permute.xlu0 %494
        %496 = vrot.lane.b32.xlu0 %v489, 18
        %v497 = vpop.permute.xlu0 %496
        %v498 = vlaneseq
        %v499 = vand.u32 %v498, 127
        %vm500 = vcmp.lt.s32.totalorder %v499, 18
        %v501 = vsel %vm500, %v495, %v497
        %v502 = vsel %vm500, %v493, %v495
        %v503 = vsel %vm500, %v491, %v493
        %v504 = vsel %vm500, %v497, %v491
        %v505 = vld [vmem:[#allocation6] ss:$8 sm:$0xf]
        %v507 = vlaneseq
        %v508 = vshrl.u32 %v507, 7
        %v509 = vsub.s32 0, %v508
        %v510 = vrot.slane %v505, %v509
        %v511 = vlaneseq
        %v512 = vshrl.u32 %v511, 7
        %v513 = vsub.s32 1, %v512
        %v514 = vrot.slane %v505, %v513
        %v515 = vlaneseq
        %v516 = vshrl.u32 %v515, 7
        %v517 = vsub.s32 2, %v516
        %v518 = vrot.slane %v505, %v517
        %v519 = vlaneseq
        %v520 = vshrl.u32 %v519, 7
        %v521 = vsub.s32 3, %v520
        %v522 = vrot.slane %v505, %v521
        %v527 = vmul.f32 %v501, %v510
        %v528 = vmul.f32 %v504, %v514
        %v529 = vmul.f32 %v503, %v518
        %v530 = vmul.f32 %v502, %v522
        %531 = vrot.lane.b32.xlu0 %v486, 16
        %v532 = vpop.permute.xlu0 %531
        %533 = vrot.lane.b32.xlu0 %v487, 16
        %v534 = vpop.permute.xlu0 %533
        %535 = vrot.lane.b32.xlu0 %v488, 16
        %v536 = vpop.permute.xlu0 %535
        %537 = vrot.lane.b32.xlu0 %v489, 16
        %v538 = vpop.permute.xlu0 %537
        %vm539 = vcmp.lt.s32.totalorder %v499, 16
        %v540 = vsel %vm539, %v536, %v538
        %v541 = vsel %vm539, %v534, %v536
        %v542 = vsel %vm539, %v532, %v534
        %v543 = vsel %vm539, %v538, %v532
        %s544 = scalar_lea.vmem [#allocation6], 1
        %v545 = vld [vmem:[%s544] ss:$8 sm:$0xf]
        %v547 = vlaneseq
        %v548 = vshrl.u32 %v547, 7
        %v549 = vsub.s32 0, %v548
        %v550 = vrot.slane %v545, %v549
        %v551 = vlaneseq
        %v552 = vshrl.u32 %v551, 7
        %v553 = vsub.s32 1, %v552
        %v554 = vrot.slane %v545, %v553
        %v555 = vlaneseq
        %v556 = vshrl.u32 %v555, 7
        %v557 = vsub.s32 2, %v556
        %v558 = vrot.slane %v545, %v557
        %v559 = vlaneseq
        %v560 = vshrl.u32 %v559, 7
        %v561 = vsub.s32 3, %v560
        %v562 = vrot.slane %v545, %v561
        %v567 = vmul.f32 %v540, %v550
        %v568 = vmul.f32 %v543, %v554
        %v569 = vmul.f32 %v542, %v558
        %v570 = vmul.f32 %v541, %v562
        %571 = vrot.lane.b32.xlu0 %v486, 14
        %v572 = vpop.permute.xlu0 %571
        %573 = vrot.lane.b32.xlu0 %v487, 14
        %v574 = vpop.permute.xlu0 %573
        %575 = vrot.lane.b32.xlu0 %v488, 14
        %v576 = vpop.permute.xlu0 %575
        %577 = vrot.lane.b32.xlu0 %v489, 14
        %v578 = vpop.permute.xlu0 %577
        %vm579 = vcmp.lt.s32.totalorder %v499, 14
        %v580 = vsel %vm579, %v576, %v578
        %v581 = vsel %vm579, %v574, %v576
        %v582 = vsel %vm579, %v572, %v574
        %v583 = vsel %vm579, %v578, %v572
        %s584 = scalar_lea.vmem [#allocation6], 2
        %v585 = vld [vmem:[%s584] ss:$8 sm:$0xf]
        %v587 = vlaneseq
        %v588 = vshrl.u32 %v587, 7
        %v589 = vsub.s32 0, %v588
        %v590 = vrot.slane %v585, %v589
        %v591 = vlaneseq
        %v592 = vshrl.u32 %v591, 7
        %v593 = vsub.s32 1, %v592
        %v594 = vrot.slane %v585, %v593
        %v595 = vlaneseq
        %v596 = vshrl.u32 %v595, 7
        %v597 = vsub.s32 2, %v596
        %v598 = vrot.slane %v585, %v597
        %v599 = vlaneseq
        %v600 = vshrl.u32 %v599, 7
        %v601 = vsub.s32 3, %v600
        %v602 = vrot.slane %v585, %v601
        %v607 = vmul.f32 %v580, %v590
        %v608 = vmul.f32 %v583, %v594
        %v609 = vmul.f32 %v582, %v598
        %v610 = vmul.f32 %v581, %v602
        %611 = vrot.lane.b32.xlu0 %v486, 2
        %v612 = vpop.permute.xlu0 %611
        %613 = vrot.lane.b32.xlu0 %v487, 2
        %v614 = vpop.permute.xlu0 %613
        %615 = vrot.lane.b32.xlu0 %v488, 2
        %v616 = vpop.permute.xlu0 %615
        %617 = vrot.lane.b32.xlu0 %v489, 2
        %v618 = vpop.permute.xlu0 %617
        %vm619 = vcmp.lt.s32.totalorder %v499, 2
        %v620 = vsel %vm619, %v616, %v618
        %v621 = vsel %vm619, %v614, %v616
        %v622 = vsel %vm619, %v612, %v614
        %v623 = vsel %vm619, %v618, %v612
        %s624 = scalar_lea.vmem [#allocation6], 3
        %v625 = vld [vmem:[%s624] ss:$8 sm:$0xf]
        %v627 = vlaneseq
        %v628 = vshrl.u32 %v627, 7
        %v629 = vsub.s32 0, %v628
        %v630 = vrot.slane %v625, %v629
        %v631 = vlaneseq
        %v632 = vshrl.u32 %v631, 7
        %v633 = vsub.s32 1, %v632
        %v634 = vrot.slane %v625, %v633
        %v635 = vlaneseq
        %v636 = vshrl.u32 %v635, 7
        %v637 = vsub.s32 2, %v636
        %v638 = vrot.slane %v625, %v637
        %v639 = vlaneseq
        %v640 = vshrl.u32 %v639, 7
        %v641 = vsub.s32 3, %v640
        %v642 = vrot.slane %v625, %v641
        %v647 = vmul.f32 %v620, %v630
        %v648 = vmul.f32 %v623, %v634
        %v649 = vmul.f32 %v622, %v638
        %v650 = vmul.f32 %v621, %v642
        %s651 = scalar_lea.vmem [#allocation6], 4
        %v652 = vld [vmem:[%s651] ss:$8 sm:$0xf]
        %v654 = vlaneseq
        %v655 = vshrl.u32 %v654, 7
        %v656 = vsub.s32 0, %v655
        %v657 = vrot.slane %v652, %v656
        %v658 = vlaneseq
        %v659 = vshrl.u32 %v658, 7
        %v660 = vsub.s32 1, %v659
        %v661 = vrot.slane %v652, %v660
        %v662 = vlaneseq
        %v663 = vshrl.u32 %v662, 7
        %v664 = vsub.s32 2, %v663
        %v665 = vrot.slane %v652, %v664
        %v666 = vlaneseq
        %v667 = vshrl.u32 %v666, 7
        %v668 = vsub.s32 3, %v667
        %v669 = vrot.slane %v652, %v668
        %v674 = vmul.f32 %v489, %v657
        %v675 = vmul.f32 %v486, %v661
        %v676 = vmul.f32 %v487, %v665
        %v677 = vmul.f32 %v488, %v669
        %678 = vrot.lane.b32.xlu0 %v486, 126
        %v679 = vpop.permute.xlu0 %678
        %680 = vrot.lane.b32.xlu0 %v487, 126
        %v681 = vpop.permute.xlu0 %680
        %682 = vrot.lane.b32.xlu0 %v488, 126
        %v683 = vpop.permute.xlu0 %682
        %684 = vrot.lane.b32.xlu0 %v489, 126
        %v685 = vpop.permute.xlu0 %684
        %vm686 = vcmp.lt.s32.totalorder %v499, 126
        %v687 = vsel %vm686, %v683, %v685
        %v688 = vsel %vm686, %v681, %v683
        %v689 = vsel %vm686, %v679, %v681
        %v690 = vsel %vm686, %v685, %v679
        %s691 = scalar_lea.vmem [#allocation6], 5
        %v692 = vld [vmem:[%s691] ss:$8 sm:$0xf]
        %v694 = vlaneseq
        %v695 = vshrl.u32 %v694, 7
        %v696 = vsub.s32 0, %v695
        %v697 = vrot.slane %v692, %v696
        %v698 = vlaneseq
        %v699 = vshrl.u32 %v698, 7
        %v700 = vsub.s32 1, %v699
        %v701 = vrot.slane %v692, %v700
        %v702 = vlaneseq
        %v703 = vshrl.u32 %v702, 7
        %v704 = vsub.s32 2, %v703
        %v705 = vrot.slane %v692, %v704
        %v706 = vlaneseq
        %v707 = vshrl.u32 %v706, 7
        %v708 = vsub.s32 3, %v707
        %v709 = vrot.slane %v692, %v708
        %v714 = vmul.f32 %v690, %v697
        %v715 = vmul.f32 %v689, %v701
        %v716 = vmul.f32 %v688, %v705
        %v717 = vmul.f32 %v687, %v709
        %718 = vrot.lane.b32.xlu0 %v486, 114
        %v719 = vpop.permute.xlu0 %718
        %720 = vrot.lane.b32.xlu0 %v487, 114
        %v721 = vpop.permute.xlu0 %720
        %722 = vrot.lane.b32.xlu0 %v488, 114
        %v723 = vpop.permute.xlu0 %722
        %724 = vrot.lane.b32.xlu0 %v489, 114
        %v725 = vpop.permute.xlu0 %724
        %vm726 = vcmp.lt.s32.totalorder %v499, 114
        %v727 = vsel %vm726, %v723, %v725
        %v728 = vsel %vm726, %v721, %v723
        %v729 = vsel %vm726, %v719, %v721
        %v730 = vsel %vm726, %v725, %v719
        %s731 = scalar_lea.vmem [#allocation6], 6
        %v732 = vld [vmem:[%s731] ss:$8 sm:$0xf]
        %v734 = vlaneseq
        %v735 = vshrl.u32 %v734, 7
        %v736 = vsub.s32 0, %v735
        %v737 = vrot.slane %v732, %v736
        %v738 = vlaneseq
        %v739 = vshrl.u32 %v738, 7
        %v740 = vsub.s32 1, %v739
        %v741 = vrot.slane %v732, %v740
        %v742 = vlaneseq
        %v743 = vshrl.u32 %v742, 7
        %v744 = vsub.s32 2, %v743
        %v745 = vrot.slane %v732, %v744
        %v746 = vlaneseq
        %v747 = vshrl.u32 %v746, 7
        %v748 = vsub.s32 3, %v747
        %v749 = vrot.slane %v732, %v748
        %v754 = vmul.f32 %v730, %v737
        %v755 = vmul.f32 %v729, %v741
        %v756 = vmul.f32 %v728, %v745
        %v757 = vmul.f32 %v727, %v749
        %758 = vrot.lane.b32.xlu0 %v486, 112
        %v759 = vpop.permute.xlu0 %758
        %760 = vrot.lane.b32.xlu0 %v487, 112
        %v761 = vpop.permute.xlu0 %760
        %762 = vrot.lane.b32.xlu0 %v488, 112
        %v763 = vpop.permute.xlu0 %762
        %764 = vrot.lane.b32.xlu0 %v489, 112
        %v765 = vpop.permute.xlu0 %764
        %vm766 = vcmp.lt.s32.totalorder %v499, 112
        %v767 = vsel %vm766, %v763, %v765
        %v768 = vsel %vm766, %v761, %v763
        %v769 = vsel %vm766, %v759, %v761
        %v770 = vsel %vm766, %v765, %v759
        %s771 = scalar_lea.vmem [#allocation6], 7
        %v772 = vld [vmem:[%s771] ss:$8 sm:$0xf]
        %v774 = vlaneseq
        %v775 = vshrl.u32 %v774, 7
        %v776 = vsub.s32 0, %v775
        %v777 = vrot.slane %v772, %v776
        %v778 = vlaneseq
        %v779 = vshrl.u32 %v778, 7
        %v780 = vsub.s32 1, %v779
        %v781 = vrot.slane %v772, %v780
        %v782 = vlaneseq
        %v783 = vshrl.u32 %v782, 7
        %v784 = vsub.s32 2, %v783
        %v785 = vrot.slane %v772, %v784
        %v786 = vlaneseq
        %v787 = vshrl.u32 %v786, 7
        %v788 = vsub.s32 3, %v787
        %v789 = vrot.slane %v772, %v788
        %v794 = vmul.f32 %v770, %v777
        %v795 = vmul.f32 %v769, %v781
        %v796 = vmul.f32 %v768, %v785
        %v797 = vmul.f32 %v767, %v789
        %798 = vrot.lane.b32.xlu0 %v486, 110
        %v799 = vpop.permute.xlu0 %798
        %800 = vrot.lane.b32.xlu0 %v487, 110
        %v801 = vpop.permute.xlu0 %800
        %802 = vrot.lane.b32.xlu0 %v488, 110
        %v803 = vpop.permute.xlu0 %802
        %804 = vrot.lane.b32.xlu0 %v489, 110
        %v805 = vpop.permute.xlu0 %804
        %vm806 = vcmp.lt.s32.totalorder %v499, 110
        %v807 = vsel %vm806, %v803, %v805
        %v808 = vsel %vm806, %v801, %v803
        %v809 = vsel %vm806, %v799, %v801
        %v810 = vsel %vm806, %v805, %v799
        %s811 = scalar_lea.vmem [#allocation6], 32
        %v812 = vld [vmem:[%s811] ss:$8 sm:$0xf]
        %v814 = vlaneseq
        %v815 = vshrl.u32 %v814, 7
        %v816 = vsub.s32 0, %v815
        %v817 = vrot.slane %v812, %v816
        %v818 = vlaneseq
        %v819 = vshrl.u32 %v818, 7
        %v820 = vsub.s32 1, %v819
        %v821 = vrot.slane %v812, %v820
        %v822 = vlaneseq
        %v823 = vshrl.u32 %v822, 7
        %v824 = vsub.s32 2, %v823
        %v825 = vrot.slane %v812, %v824
        %v826 = vlaneseq
        %v827 = vshrl.u32 %v826, 7
        %v828 = vsub.s32 3, %v827
        %v829 = vrot.slane %v812, %v828
        %v834 = vmul.f32 %v810, %v817
        %v835 = vmul.f32 %v809, %v821
        %v836 = vmul.f32 %v808, %v825
        %v837 = vmul.f32 %v807, %v829
        %s838 = scalar_lea.vmem [#allocation6], 33
        %v839 = vld [vmem:[%s838] ss:$8 sm:$0xf]
        %v841 = vlaneseq
        %v842 = vshrl.u32 %v841, 7
        %v843 = vsub.s32 0, %v842
        %v844 = vrot.slane %v839, %v843
        %v845 = vlaneseq
        %v846 = vshrl.u32 %v845, 7
        %v847 = vsub.s32 1, %v846
        %v848 = vrot.slane %v839, %v847
        %v849 = vlaneseq
        %v850 = vshrl.u32 %v849, 7
        %v851 = vsub.s32 2, %v850
        %v852 = vrot.slane %v839, %v851
        %v853 = vlaneseq
        %v854 = vshrl.u32 %v853, 7
        %v855 = vsub.s32 3, %v854
        %v856 = vrot.slane %v839, %v855
        %v861 = vmul.f32 %v504, %v844
        %v862 = vmul.f32 %v503, %v848
        %v863 = vmul.f32 %v502, %v852
        %v864 = vmul.f32 %v501, %v856
        %s865 = scalar_lea.vmem [#allocation6], 34
        %v866 = vld [vmem:[%s865] ss:$8 sm:$0xf]
        %v868 = vlaneseq
        %v869 = vshrl.u32 %v868, 7
        %v870 = vsub.s32 0, %v869
        %v871 = vrot.slane %v866, %v870
        %v872 = vlaneseq
        %v873 = vshrl.u32 %v872, 7
        %v874 = vsub.s32 1, %v873
        %v875 = vrot.slane %v866, %v874
        %v876 = vlaneseq
        %v877 = vshrl.u32 %v876, 7
        %v878 = vsub.s32 2, %v877
        %v879 = vrot.slane %v866, %v878
        %v880 = vlaneseq
        %v881 = vshrl.u32 %v880, 7
        %v882 = vsub.s32 3, %v881
        %v883 = vrot.slane %v866, %v882
        %v888 = vmul.f32 %v543, %v871
        %v889 = vmul.f32 %v542, %v875
        %v890 = vmul.f32 %v541, %v879
        %v891 = vmul.f32 %v540, %v883
        %s892 = scalar_lea.vmem [#allocation6], 35
        %v893 = vld [vmem:[%s892] ss:$8 sm:$0xf]
        %v895 = vlaneseq
        %v896 = vshrl.u32 %v895, 7
        %v897 = vsub.s32 0, %v896
        %v898 = vrot.slane %v893, %v897
        %v899 = vlaneseq
        %v900 = vshrl.u32 %v899, 7
        %v901 = vsub.s32 1, %v900
        %v902 = vrot.slane %v893, %v901
        %v903 = vlaneseq
        %v904 = vshrl.u32 %v903, 7
        %v905 = vsub.s32 2, %v904
        %v906 = vrot.slane %v893, %v905
        %v907 = vlaneseq
        %v908 = vshrl.u32 %v907, 7
        %v909 = vsub.s32 3, %v908
        %v910 = vrot.slane %v893, %v909
        %v915 = vmul.f32 %v583, %v898
        %v916 = vmul.f32 %v582, %v902
        %v917 = vmul.f32 %v581, %v906
        %v918 = vmul.f32 %v580, %v910
        %s919 = scalar_lea.vmem [#allocation6], 36
        %v920 = vld [vmem:[%s919] ss:$8 sm:$0xf]
        %v922 = vlaneseq
        %v923 = vshrl.u32 %v922, 7
        %v924 = vsub.s32 0, %v923
        %v925 = vrot.slane %v920, %v924
        %v926 = vlaneseq
        %v927 = vshrl.u32 %v926, 7
        %v928 = vsub.s32 1, %v927
        %v929 = vrot.slane %v920, %v928
        %v930 = vlaneseq
        %v931 = vshrl.u32 %v930, 7
        %v932 = vsub.s32 2, %v931
        %v933 = vrot.slane %v920, %v932
        %v934 = vlaneseq
        %v935 = vshrl.u32 %v934, 7
        %v936 = vsub.s32 3, %v935
        %v937 = vrot.slane %v920, %v936
        %v942 = vmul.f32 %v623, %v925
        %v943 = vmul.f32 %v622, %v929
        %v944 = vmul.f32 %v621, %v933
        %v945 = vmul.f32 %v620, %v937
        %s946 = scalar_lea.vmem [#allocation6], 38
        %v947 = vld [vmem:[%s946] ss:$8 sm:$0xf]
        %v949 = vlaneseq
        %v950 = vshrl.u32 %v949, 7
        %v951 = vsub.s32 0, %v950
        %v952 = vrot.slane %v947, %v951
        %v953 = vlaneseq
        %v954 = vshrl.u32 %v953, 7
        %v955 = vsub.s32 1, %v954
        %v956 = vrot.slane %v947, %v955
        %v957 = vlaneseq
        %v958 = vshrl.u32 %v957, 7
        %v959 = vsub.s32 2, %v958
        %v960 = vrot.slane %v947, %v959
        %v961 = vlaneseq
        %v962 = vshrl.u32 %v961, 7
        %v963 = vsub.s32 3, %v962
        %v964 = vrot.slane %v947, %v963
        %v969 = vmul.f32 %v689, %v952
        %v970 = vmul.f32 %v688, %v956
        %v971 = vmul.f32 %v687, %v960
        %v972 = vmul.f32 %v690, %v964
        %s973 = scalar_lea.vmem [#allocation6], 39
        %v974 = vld [vmem:[%s973] ss:$8 sm:$0xf]
        %v976 = vlaneseq
        %v977 = vshrl.u32 %v976, 7
        %v978 = vsub.s32 0, %v977
        %v979 = vrot.slane %v974, %v978
        %v980 = vlaneseq
        %v981 = vshrl.u32 %v980, 7
        %v982 = vsub.s32 1, %v981
        %v983 = vrot.slane %v974, %v982
        %v984 = vlaneseq
        %v985 = vshrl.u32 %v984, 7
        %v986 = vsub.s32 2, %v985
        %v987 = vrot.slane %v974, %v986
        %v988 = vlaneseq
        %v989 = vshrl.u32 %v988, 7
        %v990 = vsub.s32 3, %v989
        %v991 = vrot.slane %v974, %v990
        %v996 = vmul.f32 %v729, %v979
        %v997 = vmul.f32 %v728, %v983
        %v998 = vmul.f32 %v727, %v987
        %v999 = vmul.f32 %v730, %v991
        %s1000 = scalar_lea.vmem [#allocation6], 64
        %v1001 = vld [vmem:[%s1000] ss:$8 sm:$0xf]
        %v1003 = vlaneseq
        %v1004 = vshrl.u32 %v1003, 7
        %v1005 = vsub.s32 0, %v1004
        %v1006 = vrot.slane %v1001, %v1005
        %v1007 = vlaneseq
        %v1008 = vshrl.u32 %v1007, 7
        %v1009 = vsub.s32 1, %v1008
        %v1010 = vrot.slane %v1001, %v1009
        %v1011 = vlaneseq
        %v1012 = vshrl.u32 %v1011, 7
        %v1013 = vsub.s32 2, %v1012
        %v1014 = vrot.slane %v1001, %v1013
        %v1015 = vlaneseq
        %v1016 = vshrl.u32 %v1015, 7
        %v1017 = vsub.s32 3, %v1016
        %v1018 = vrot.slane %v1001, %v1017
        %v1023 = vmul.f32 %v769, %v1006
        %v1024 = vmul.f32 %v768, %v1010
        %v1025 = vmul.f32 %v767, %v1014
        %v1026 = vmul.f32 %v770, %v1018
        %s1027 = scalar_lea.vmem [#allocation6], 65
        %v1028 = vld [vmem:[%s1027] ss:$8 sm:$0xf]
        %v1030 = vlaneseq
        %v1031 = vshrl.u32 %v1030, 7
        %v1032 = vsub.s32 0, %v1031
        %v1033 = vrot.slane %v1028, %v1032
        %v1034 = vlaneseq
        %v1035 = vshrl.u32 %v1034, 7
        %v1036 = vsub.s32 1, %v1035
        %v1037 = vrot.slane %v1028, %v1036
        %v1038 = vlaneseq
        %v1039 = vshrl.u32 %v1038, 7
        %v1040 = vsub.s32 2, %v1039
        %v1041 = vrot.slane %v1028, %v1040
        %v1042 = vlaneseq
        %v1043 = vshrl.u32 %v1042, 7
        %v1044 = vsub.s32 3, %v1043
        %v1045 = vrot.slane %v1028, %v1044
        %v1050 = vmul.f32 %v809, %v1033
        %v1051 = vmul.f32 %v808, %v1037
        %v1052 = vmul.f32 %v807, %v1041
        %v1053 = vmul.f32 %v810, %v1045
        %s1054 = scalar_lea.vmem [#allocation6], 66
        %v1055 = vld [vmem:[%s1054] ss:$8 sm:$0xf]
        %v1057 = vlaneseq
        %v1058 = vshrl.u32 %v1057, 7
        %v1059 = vsub.s32 0, %v1058
        %v1060 = vrot.slane %v1055, %v1059
        %v1061 = vlaneseq
        %v1062 = vshrl.u32 %v1061, 7
        %v1063 = vsub.s32 1, %v1062
        %v1064 = vrot.slane %v1055, %v1063
        %v1065 = vlaneseq
        %v1066 = vshrl.u32 %v1065, 7
        %v1067 = vsub.s32 2, %v1066
        %v1068 = vrot.slane %v1055, %v1067
        %v1069 = vlaneseq
        %v1070 = vshrl.u32 %v1069, 7
        %v1071 = vsub.s32 3, %v1070
        %v1072 = vrot.slane %v1055, %v1071
        %v1077 = vmul.f32 %v503, %v1060
        %v1078 = vmul.f32 %v502, %v1064
        %v1079 = vmul.f32 %v501, %v1068
        %v1080 = vmul.f32 %v504, %v1072
        %s1081 = scalar_lea.vmem [#allocation6], 67
        %v1082 = vld [vmem:[%s1081] ss:$8 sm:$0xf]
        %v1084 = vlaneseq
        %v1085 = vshrl.u32 %v1084, 7
        %v1086 = vsub.s32 0, %v1085
        %v1087 = vrot.slane %v1082, %v1086
        %v1088 = vlaneseq
        %v1089 = vshrl.u32 %v1088, 7
        %v1090 = vsub.s32 1, %v1089
        %v1091 = vrot.slane %v1082, %v1090
        %v1092 = vlaneseq
        %v1093 = vshrl.u32 %v1092, 7
        %v1094 = vsub.s32 2, %v1093
        %v1095 = vrot.slane %v1082, %v1094
        %v1096 = vlaneseq
        %v1097 = vshrl.u32 %v1096, 7
        %v1098 = vsub.s32 3, %v1097
        %v1099 = vrot.slane %v1082, %v1098
        %v1104 = vmul.f32 %v542, %v1087
        %v1105 = vmul.f32 %v541, %v1091
        %v1106 = vmul.f32 %v540, %v1095
        %v1107 = vmul.f32 %v543, %v1099
        %s1108 = scalar_lea.vmem [#allocation6], 68
        %v1109 = vld [vmem:[%s1108] ss:$8 sm:$0xf]
        %v1111 = vlaneseq
        %v1112 = vshrl.u32 %v1111, 7
        %v1113 = vsub.s32 0, %v1112
        %v1114 = vrot.slane %v1109, %v1113
        %v1115 = vlaneseq
        %v1116 = vshrl.u32 %v1115, 7
        %v1117 = vsub.s32 1, %v1116
        %v1118 = vrot.slane %v1109, %v1117
        %v1119 = vlaneseq
        %v1120 = vshrl.u32 %v1119, 7
        %v1121 = vsub.s32 2, %v1120
        %v1122 = vrot.slane %v1109, %v1121
        %v1123 = vlaneseq
        %v1124 = vshrl.u32 %v1123, 7
        %v1125 = vsub.s32 3, %v1124
        %v1126 = vrot.slane %v1109, %v1125
        %v1131 = vmul.f32 %v582, %v1114
        %v1132 = vmul.f32 %v581, %v1118
        %v1133 = vmul.f32 %v580, %v1122
        %v1134 = vmul.f32 %v583, %v1126
        %s1135 = scalar_lea.vmem [#allocation6], 69
        %v1136 = vld [vmem:[%s1135] ss:$8 sm:$0xf]
        %v1138 = vlaneseq
        %v1139 = vshrl.u32 %v1138, 7
        %v1140 = vsub.s32 0, %v1139
        %v1141 = vrot.slane %v1136, %v1140
        %v1142 = vlaneseq
        %v1143 = vshrl.u32 %v1142, 7
        %v1144 = vsub.s32 1, %v1143
        %v1145 = vrot.slane %v1136, %v1144
        %v1146 = vlaneseq
        %v1147 = vshrl.u32 %v1146, 7
        %v1148 = vsub.s32 2, %v1147
        %v1149 = vrot.slane %v1136, %v1148
        %v1150 = vlaneseq
        %v1151 = vshrl.u32 %v1150, 7
        %v1152 = vsub.s32 3, %v1151
        %v1153 = vrot.slane %v1136, %v1152
        %v1158 = vmul.f32 %v622, %v1141
        %v1159 = vmul.f32 %v621, %v1145
        %v1160 = vmul.f32 %v620, %v1149
        %v1161 = vmul.f32 %v623, %v1153
        %s1162 = scalar_lea.vmem [#allocation6], 70
        %v1163 = vld [vmem:[%s1162] ss:$8 sm:$0xf]
        %v1165 = vlaneseq
        %v1166 = vshrl.u32 %v1165, 7
        %v1167 = vsub.s32 0, %v1166
        %v1168 = vrot.slane %v1163, %v1167
        %v1169 = vlaneseq
        %v1170 = vshrl.u32 %v1169, 7
        %v1171 = vsub.s32 1, %v1170
        %v1172 = vrot.slane %v1163, %v1171
        %v1173 = vlaneseq
        %v1174 = vshrl.u32 %v1173, 7
        %v1175 = vsub.s32 2, %v1174
        %v1176 = vrot.slane %v1163, %v1175
        %v1177 = vlaneseq
        %v1178 = vshrl.u32 %v1177, 7
        %v1179 = vsub.s32 3, %v1178
        %v1180 = vrot.slane %v1163, %v1179
        %v1185 = vmul.f32 %v487, %v1168
        %v1186 = vmul.f32 %v488, %v1172
        %v1187 = vmul.f32 %v489, %v1176
        %v1188 = vmul.f32 %v486, %v1180
        %s1189 = scalar_lea.vmem [#allocation6], 71
        %v1190 = vld [vmem:[%s1189] ss:$8 sm:$0xf]
        %v1192 = vlaneseq
        %v1193 = vshrl.u32 %v1192, 7
        %v1194 = vsub.s32 0, %v1193
        %v1195 = vrot.slane %v1190, %v1194
        %v1196 = vlaneseq
        %v1197 = vshrl.u32 %v1196, 7
        %v1198 = vsub.s32 1, %v1197
        %v1199 = vrot.slane %v1190, %v1198
        %v1200 = vlaneseq
        %v1201 = vshrl.u32 %v1200, 7
        %v1202 = vsub.s32 2, %v1201
        %v1203 = vrot.slane %v1190, %v1202
        %v1204 = vlaneseq
        %v1205 = vshrl.u32 %v1204, 7
        %v1206 = vsub.s32 3, %v1205
        %v1207 = vrot.slane %v1190, %v1206
        %v1212 = vmul.f32 %v688, %v1195
        %v1213 = vmul.f32 %v687, %v1199
        %v1214 = vmul.f32 %v690, %v1203
        %v1215 = vmul.f32 %v689, %v1207
        %s1216 = scalar_lea.vmem [#allocation6], 96
        %v1217 = vld [vmem:[%s1216] ss:$8 sm:$0xf]
        %v1219 = vlaneseq
        %v1220 = vshrl.u32 %v1219, 7
        %v1221 = vsub.s32 0, %v1220
        %v1222 = vrot.slane %v1217, %v1221
        %v1223 = vlaneseq
        %v1224 = vshrl.u32 %v1223, 7
        %v1225 = vsub.s32 1, %v1224
        %v1226 = vrot.slane %v1217, %v1225
        %v1227 = vlaneseq
        %v1228 = vshrl.u32 %v1227, 7
        %v1229 = vsub.s32 2, %v1228
        %v1230 = vrot.slane %v1217, %v1229
        %v1231 = vlaneseq
        %v1232 = vshrl.u32 %v1231, 7
        %v1233 = vsub.s32 3, %v1232
        %v1234 = vrot.slane %v1217, %v1233
        %v1239 = vmul.f32 %v728, %v1222
        %v1240 = vmul.f32 %v727, %v1226
        %v1241 = vmul.f32 %v730, %v1230
        %v1242 = vmul.f32 %v729, %v1234
        %s1243 = scalar_lea.vmem [#allocation6], 97
        %v1244 = vld [vmem:[%s1243] ss:$8 sm:$0xf]
        %v1246 = vlaneseq
        %v1247 = vshrl.u32 %v1246, 7
        %v1248 = vsub.s32 0, %v1247
        %v1249 = vrot.slane %v1244, %v1248
        %v1250 = vlaneseq
        %v1251 = vshrl.u32 %v1250, 7
        %v1252 = vsub.s32 1, %v1251
        %v1253 = vrot.slane %v1244, %v1252
        %v1254 = vlaneseq
        %v1255 = vshrl.u32 %v1254, 7
        %v1256 = vsub.s32 2, %v1255
        %v1257 = vrot.slane %v1244, %v1256
        %v1258 = vlaneseq
        %v1259 = vshrl.u32 %v1258, 7
        %v1260 = vsub.s32 3, %v1259
        %v1261 = vrot.slane %v1244, %v1260
        %v1266 = vmul.f32 %v768, %v1249
        %v1267 = vmul.f32 %v767, %v1253
        %v1268 = vmul.f32 %v770, %v1257
        %v1269 = vmul.f32 %v769, %v1261
        %s1270 = scalar_lea.vmem [#allocation6], 98
        %v1271 = vld [vmem:[%s1270] ss:$8 sm:$0xf]
        %v1273 = vlaneseq
        %v1274 = vshrl.u32 %v1273, 7
        %v1275 = vsub.s32 0, %v1274
        %v1276 = vrot.slane %v1271, %v1275
        %v1277 = vlaneseq
        %v1278 = vshrl.u32 %v1277, 7
        %v1279 = vsub.s32 1, %v1278
        %v1280 = vrot.slane %v1271, %v1279
        %v1281 = vlaneseq
        %v1282 = vshrl.u32 %v1281, 7
        %v1283 = vsub.s32 2, %v1282
        %v1284 = vrot.slane %v1271, %v1283
        %v1285 = vlaneseq
        %v1286 = vshrl.u32 %v1285, 7
        %v1287 = vsub.s32 3, %v1286
        %v1288 = vrot.slane %v1271, %v1287
        %v1293 = vmul.f32 %v808, %v1276
        %v1294 = vmul.f32 %v807, %v1280
        %v1295 = vmul.f32 %v810, %v1284
        %v1296 = vmul.f32 %v809, %v1288
        %1297 = vst [vmem:[#allocation2] sm:$0xff] %v527
        %1298 = vst [vmem:[#allocation2 + $0x8] sm:$0xff] %v528
        %1299 = vst [vmem:[#allocation2 + $0x10] sm:$0xff] %v529
        %1300 = vst [vmem:[#allocation2 + $0x18] sm:$0xff] %v530
        %1301 = vst [vmem:[#allocation2 + $0x20] sm:$0xff] %v567
        %1302 = vst [vmem:[#allocation2 + $0x28] sm:$0xff] %v568
        %1303 = vst [vmem:[#allocation2 + $0x30] sm:$0xff] %v569
        %1304 = vst [vmem:[#allocation2 + $0x38] sm:$0xff] %v570
        %1305 = vst [vmem:[#allocation2 + $0x40] sm:$0xff] %v607
        %1306 = vst [vmem:[#allocation2 + $0x48] sm:$0xff] %v608
        %1307 = vst [vmem:[#allocation2 + $0x50] sm:$0xff] %v609
        %1308 = vst [vmem:[#allocation2 + $0x58] sm:$0xff] %v610
        %1309 = vst [vmem:[#allocation2 + $0x60] sm:$0xff] %v647
        %1310 = vst [vmem:[#allocation2 + $0x68] sm:$0xff] %v648
        %1311 = vst [vmem:[#allocation2 + $0x70] sm:$0xff] %v649
        %1312 = vst [vmem:[#allocation2 + $0x78] sm:$0xff] %v650
        %1313 = vst [vmem:[#allocation2 + $0x80] sm:$0xff] %v674
        %1314 = vst [vmem:[#allocation2 + $0x88] sm:$0xff] %v675
        %1315 = vst [vmem:[#allocation2 + $0x90] sm:$0xff] %v676
        %1316 = vst [vmem:[#allocation2 + $0x98] sm:$0xff] %v677
        %1317 = vst [vmem:[#allocation2 + $0xa0] sm:$0xff] %v714
        %1318 = vst [vmem:[#allocation2 + $0xa8] sm:$0xff] %v715
        %1319 = vst [vmem:[#allocation2 + $0xb0] sm:$0xff] %v716
        %1320 = vst [vmem:[#allocation2 + $0xb8] sm:$0xff] %v717
        %1321 = vst [vmem:[#allocation2 + $0xc0] sm:$0xff] %v754
        %1322 = vst [vmem:[#allocation2 + $0xc8] sm:$0xff] %v755
        %1323 = vst [vmem:[#allocation2 + $0xd0] sm:$0xff] %v756
        %1324 = vst [vmem:[#allocation2 + $0xd8] sm:$0xff] %v757
        %1325 = vst [vmem:[#allocation2 + $0xe0] sm:$0xff] %v794
        %1326 = vst [vmem:[#allocation2 + $0xe8] sm:$0xff] %v795
        %1327 = vst [vmem:[#allocation2 + $0xf0] sm:$0xff] %v796
        %1328 = vst [vmem:[#allocation2 + $0xf8] sm:$0xff] %v797
        %1329 = vst [vmem:[#allocation2 + $0x100] sm:$0xff] %v834
        %1330 = vst [vmem:[#allocation2 + $0x108] sm:$0xff] %v835
        %1331 = vst [vmem:[#allocation2 + $0x110] sm:$0xff] %v836
        %1332 = vst [vmem:[#allocation2 + $0x118] sm:$0xff] %v837
        %1333 = vst [vmem:[#allocation2 + $0x120] sm:$0xff] %v861
        %1334 = vst [vmem:[#allocation2 + $0x128] sm:$0xff] %v862
        %1335 = vst [vmem:[#allocation2 + $0x130] sm:$0xff] %v863
        %1336 = vst [vmem:[#allocation2 + $0x138] sm:$0xff] %v864
        %1337 = vst [vmem:[#allocation2 + $0x140] sm:$0xff] %v888
        %1338 = vst [vmem:[#allocation2 + $0x148] sm:$0xff] %v889
        %1339 = vst [vmem:[#allocation2 + $0x150] sm:$0xff] %v890
        %1340 = vst [vmem:[#allocation2 + $0x158] sm:$0xff] %v891
        %1341 = vst [vmem:[#allocation2 + $0x160] sm:$0xff] %v915
        %1342 = vst [vmem:[#allocation2 + $0x168] sm:$0xff] %v916
        %1343 = vst [vmem:[#allocation2 + $0x170] sm:$0xff] %v917
        %1344 = vst [vmem:[#allocation2 + $0x178] sm:$0xff] %v918
        %1345 = vst [vmem:[#allocation2 + $0x180] sm:$0xff] %v942
        %1346 = vst [vmem:[#allocation2 + $0x188] sm:$0xff] %v943
        %1347 = vst [vmem:[#allocation2 + $0x190] sm:$0xff] %v944
        %1348 = vst [vmem:[#allocation2 + $0x198] sm:$0xff] %v945
        %1349 = vst [vmem:[#allocation2 + $0x1a0] sm:$0xff] %v486
        %1350 = vst [vmem:[#allocation2 + $0x1a8] sm:$0xff] %v487
        %1351 = vst [vmem:[#allocation2 + $0x1b0] sm:$0xff] %v488
        %1352 = vst [vmem:[#allocation2 + $0x1b8] sm:$0xff] %v489
        %1353 = vst [vmem:[#allocation2 + $0x1c0] sm:$0xff] %v969
        %1354 = vst [vmem:[#allocation2 + $0x1c8] sm:$0xff] %v970
        %1355 = vst [vmem:[#allocation2 + $0x1d0] sm:$0xff] %v971
        %1356 = vst [vmem:[#allocation2 + $0x1d8] sm:$0xff] %v972
        %1357 = vst [vmem:[#allocation2 + $0x1e0] sm:$0xff] %v996
        %1358 = vst [vmem:[#allocation2 + $0x1e8] sm:$0xff] %v997
        %1359 = vst [vmem:[#allocation2 + $0x1f0] sm:$0xff] %v998
        %1360 = vst [vmem:[#allocation2 + $0x1f8] sm:$0xff] %v999
        %1361 = vst [vmem:[#allocation2 + $0x200] sm:$0xff] %v1023
        %1362 = vst [vmem:[#allocation2 + $0x208] sm:$0xff] %v1024
        %1363 = vst [vmem:[#allocation2 + $0x210] sm:$0xff] %v1025
        %1364 = vst [vmem:[#allocation2 + $0x218] sm:$0xff] %v1026
        %1365 = vst [vmem:[#allocation2 + $0x220] sm:$0xff] %v1050
        %1366 = vst [vmem:[#allocation2 + $0x228] sm:$0xff] %v1051
        %1367 = vst [vmem:[#allocation2 + $0x230] sm:$0xff] %v1052
        %1368 = vst [vmem:[#allocation2 + $0x238] sm:$0xff] %v1053
        %1369 = vst [vmem:[#allocation2 + $0x240] sm:$0xff] %v1077
        %1370 = vst [vmem:[#allocation2 + $0x248] sm:$0xff] %v1078
        %1371 = vst [vmem:[#allocation2 + $0x250] sm:$0xff] %v1079
        %1372 = vst [vmem:[#allocation2 + $0x258] sm:$0xff] %v1080
        %1373 = vst [vmem:[#allocation2 + $0x260] sm:$0xff] %v1104
        %1374 = vst [vmem:[#allocation2 + $0x268] sm:$0xff] %v1105
        %1375 = vst [vmem:[#allocation2 + $0x270] sm:$0xff] %v1106
        %1376 = vst [vmem:[#allocation2 + $0x278] sm:$0xff] %v1107
        %1377 = vst [vmem:[#allocation2 + $0x280] sm:$0xff] %v1131
        %1378 = vst [vmem:[#allocation2 + $0x288] sm:$0xff] %v1132
        %1379 = vst [vmem:[#allocation2 + $0x290] sm:$0xff] %v1133
        %1380 = vst [vmem:[#allocation2 + $0x298] sm:$0xff] %v1134
        %1381 = vst [vmem:[#allocation2 + $0x2a0] sm:$0xff] %v1158
        %1382 = vst [vmem:[#allocation2 + $0x2a8] sm:$0xff] %v1159
        %1383 = vst [vmem:[#allocation2 + $0x2b0] sm:$0xff] %v1160
        %1384 = vst [vmem:[#allocation2 + $0x2b8] sm:$0xff] %v1161
        %1385 = vst [vmem:[#allocation2 + $0x2c0] sm:$0xff] %v1185
        %1386 = vst [vmem:[#allocation2 + $0x2c8] sm:$0xff] %v1186
        %1387 = vst [vmem:[#allocation2 + $0x2d0] sm:$0xff] %v1187
        %1388 = vst [vmem:[#allocation2 + $0x2d8] sm:$0xff] %v1188
        %1389 = vst [vmem:[#allocation2 + $0x2e0] sm:$0xff] %v1212
        %1390 = vst [vmem:[#allocation2 + $0x2e8] sm:$0xff] %v1213
        %1391 = vst [vmem:[#allocation2 + $0x2f0] sm:$0xff] %v1214
        %1392 = vst [vmem:[#allocation2 + $0x2f8] sm:$0xff] %v1215
        %1393 = vst [vmem:[#allocation2 + $0x300] sm:$0xff] %v1239
        %1394 = vst [vmem:[#allocation2 + $0x308] sm:$0xff] %v1240
        %1395 = vst [vmem:[#allocation2 + $0x310] sm:$0xff] %v1241
        %1396 = vst [vmem:[#allocation2 + $0x318] sm:$0xff] %v1242
        %1397 = vst [vmem:[#allocation2 + $0x320] sm:$0xff] %v1266
        %1398 = vst [vmem:[#allocation2 + $0x328] sm:$0xff] %v1267
        %1399 = vst [vmem:[#allocation2 + $0x330] sm:$0xff] %v1268
        %1400 = vst [vmem:[#allocation2 + $0x338] sm:$0xff] %v1269
        %1401 = vst [vmem:[#allocation2 + $0x340] sm:$0xff] %v1293
        %1402 = vst [vmem:[#allocation2 + $0x348] sm:$0xff] %v1294
        %1403 = vst [vmem:[#allocation2 + $0x350] sm:$0xff] %v1295
        %1404 = vst [vmem:[#allocation2 + $0x358] sm:$0xff] %v1296
        %v1405 = vld [vmem:[#allocation2] sm:$0xff]
        %v1406 = vld [vmem:[#allocation2 + $0x8] sm:$0xff]
        %v1407 = vld [vmem:[#allocation2 + $0x10] sm:$0xff]
        %v1408 = vld [vmem:[#allocation2 + $0x18] sm:$0xff]
        %v1409 = vld [vmem:[#allocation2 + $0x20] sm:$0xff]
        %v1410 = vld [vmem:[#allocation2 + $0x28] sm:$0xff]
        %v1411 = vld [vmem:[#allocation2 + $0x30] sm:$0xff]
        %v1412 = vld [vmem:[#allocation2 + $0x38] sm:$0xff]
        %v1413 = vld [vmem:[#allocation2 + $0x40] sm:$0xff]
        %v1414 = vld [vmem:[#allocation2 + $0x48] sm:$0xff]
        %v1415 = vld [vmem:[#allocation2 + $0x50] sm:$0xff]
        %v1416 = vld [vmem:[#allocation2 + $0x58] sm:$0xff]
        %v1417 = vld [vmem:[#allocation2 + $0x60] sm:$0xff]
        %v1418 = vld [vmem:[#allocation2 + $0x68] sm:$0xff]
        %v1419 = vld [vmem:[#allocation2 + $0x70] sm:$0xff]
        %v1420 = vld [vmem:[#allocation2 + $0x78] sm:$0xff]
        %v1421 = vld [vmem:[#allocation2 + $0x80] sm:$0xff]
        %v1422 = vld [vmem:[#allocation2 + $0x88] sm:$0xff]
        %v1423 = vld [vmem:[#allocation2 + $0x90] sm:$0xff]
        %v1424 = vld [vmem:[#allocation2 + $0x98] sm:$0xff]
        %v1425 = vld [vmem:[#allocation2 + $0xa0] sm:$0xff]
        %v1426 = vld [vmem:[#allocation2 + $0xa8] sm:$0xff]
        %v1427 = vld [vmem:[#allocation2 + $0xb0] sm:$0xff]
        %v1428 = vld [vmem:[#allocation2 + $0xb8] sm:$0xff]
        %v1429 = vld [vmem:[#allocation2 + $0xc0] sm:$0xff]
        %v1430 = vld [vmem:[#allocation2 + $0xc8] sm:$0xff]
        %v1431 = vld [vmem:[#allocation2 + $0xd0] sm:$0xff]
        %v1432 = vld [vmem:[#allocation2 + $0xd8] sm:$0xff]
        %v1433 = vld [vmem:[#allocation2 + $0xe0] sm:$0xff]
        %v1434 = vld [vmem:[#allocation2 + $0xe8] sm:$0xff]
        %v1435 = vld [vmem:[#allocation2 + $0xf0] sm:$0xff]
        %v1436 = vld [vmem:[#allocation2 + $0xf8] sm:$0xff]
        %v1437 = vld [vmem:[#allocation2 + $0x100] sm:$0xff]
        %v1438 = vld [vmem:[#allocation2 + $0x108] sm:$0xff]
        %v1439 = vld [vmem:[#allocation2 + $0x110] sm:$0xff]
        %v1440 = vld [vmem:[#allocation2 + $0x118] sm:$0xff]
        %v1441 = vld [vmem:[#allocation2 + $0x120] sm:$0xff]
        %v1442 = vld [vmem:[#allocation2 + $0x128] sm:$0xff]
        %v1443 = vld [vmem:[#allocation2 + $0x130] sm:$0xff]
        %v1444 = vld [vmem:[#allocation2 + $0x138] sm:$0xff]
        %v1445 = vld [vmem:[#allocation2 + $0x140] sm:$0xff]
        %v1446 = vld [vmem:[#allocation2 + $0x148] sm:$0xff]
        %v1447 = vld [vmem:[#allocation2 + $0x150] sm:$0xff]
        %v1448 = vld [vmem:[#allocation2 + $0x158] sm:$0xff]
        %v1449 = vld [vmem:[#allocation2 + $0x160] sm:$0xff]
        %v1450 = vld [vmem:[#allocation2 + $0x168] sm:$0xff]
        %v1451 = vld [vmem:[#allocation2 + $0x170] sm:$0xff]
        %v1452 = vld [vmem:[#allocation2 + $0x178] sm:$0xff]
        %v1453 = vld [vmem:[#allocation2 + $0x180] sm:$0xff]
        %v1454 = vld [vmem:[#allocation2 + $0x188] sm:$0xff]
        %v1455 = vld [vmem:[#allocation2 + $0x190] sm:$0xff]
        %v1456 = vld [vmem:[#allocation2 + $0x198] sm:$0xff]
        %v1457 = vld [vmem:[#allocation2 + $0x1a0] sm:$0xff]
        %v1458 = vld [vmem:[#allocation2 + $0x1a8] sm:$0xff]
        %v1459 = vld [vmem:[#allocation2 + $0x1b0] sm:$0xff]
        %v1460 = vld [vmem:[#allocation2 + $0x1b8] sm:$0xff]
        %v1461 = vld [vmem:[#allocation2 + $0x1c0] sm:$0xff]
        %v1462 = vld [vmem:[#allocation2 + $0x1c8] sm:$0xff]
        %v1463 = vld [vmem:[#allocation2 + $0x1d0] sm:$0xff]
        %v1464 = vld [vmem:[#allocation2 + $0x1d8] sm:$0xff]
        %v1465 = vld [vmem:[#allocation2 + $0x1e0] sm:$0xff]
        %v1466 = vld [vmem:[#allocation2 + $0x1e8] sm:$0xff]
        %v1467 = vld [vmem:[#allocation2 + $0x1f0] sm:$0xff]
        %v1468 = vld [vmem:[#allocation2 + $0x1f8] sm:$0xff]
        %v1469 = vld [vmem:[#allocation2 + $0x200] sm:$0xff]
        %v1470 = vld [vmem:[#allocation2 + $0x208] sm:$0xff]
        %v1471 = vld [vmem:[#allocation2 + $0x210] sm:$0xff]
        %v1472 = vld [vmem:[#allocation2 + $0x218] sm:$0xff]
        %v1473 = vld [vmem:[#allocation2 + $0x220] sm:$0xff]
        %v1474 = vld [vmem:[#allocation2 + $0x228] sm:$0xff]
        %v1475 = vld [vmem:[#allocation2 + $0x230] sm:$0xff]
        %v1476 = vld [vmem:[#allocation2 + $0x238] sm:$0xff]
        %v1477 = vld [vmem:[#allocation2 + $0x240] sm:$0xff]
        %v1478 = vld [vmem:[#allocation2 + $0x248] sm:$0xff]
        %v1479 = vld [vmem:[#allocation2 + $0x250] sm:$0xff]
        %v1480 = vld [vmem:[#allocation2 + $0x258] sm:$0xff]
        %v1481 = vld [vmem:[#allocation2 + $0x260] sm:$0xff]
        %v1482 = vld [vmem:[#allocation2 + $0x268] sm:$0xff]
        %v1483 = vld [vmem:[#allocation2 + $0x270] sm:$0xff]
        %v1484 = vld [vmem:[#allocation2 + $0x278] sm:$0xff]
        %v1485 = vld [vmem:[#allocation2 + $0x280] sm:$0xff]
        %v1486 = vld [vmem:[#allocation2 + $0x288] sm:$0xff]
        %v1487 = vld [vmem:[#allocation2 + $0x290] sm:$0xff]
        %v1488 = vld [vmem:[#allocation2 + $0x298] sm:$0xff]
        %v1489 = vld [vmem:[#allocation2 + $0x2a0] sm:$0xff]
        %v1490 = vld [vmem:[#allocation2 + $0x2a8] sm:$0xff]
        %v1491 = vld [vmem:[#allocation2 + $0x2b0] sm:$0xff]
        %v1492 = vld [vmem:[#allocation2 + $0x2b8] sm:$0xff]
        %v1493 = vld [vmem:[#allocation2 + $0x2c0] sm:$0xff]
        %v1494 = vld [vmem:[#allocation2 + $0x2c8] sm:$0xff]
        %v1495 = vld [vmem:[#allocation2 + $0x2d0] sm:$0xff]
        %v1496 = vld [vmem:[#allocation2 + $0x2d8] sm:$0xff]
        %v1497 = vld [vmem:[#allocation2 + $0x2e0] sm:$0xff]
        %v1498 = vld [vmem:[#allocation2 + $0x2e8] sm:$0xff]
        %v1499 = vld [vmem:[#allocation2 + $0x2f0] sm:$0xff]
        %v1500 = vld [vmem:[#allocation2 + $0x2f8] sm:$0xff]
        %v1501 = vld [vmem:[#allocation2 + $0x300] sm:$0xff]
        %v1502 = vld [vmem:[#allocation2 + $0x308] sm:$0xff]
        %v1503 = vld [vmem:[#allocation2 + $0x310] sm:$0xff]
        %v1504 = vld [vmem:[#allocation2 + $0x318] sm:$0xff]
        %v1505 = vld [vmem:[#allocation2 + $0x320] sm:$0xff]
        %v1506 = vld [vmem:[#allocation2 + $0x328] sm:$0xff]
        %v1507 = vld [vmem:[#allocation2 + $0x330] sm:$0xff]
        %v1508 = vld [vmem:[#allocation2 + $0x338] sm:$0xff]
        %v1509 = vld [vmem:[#allocation2 + $0x340] sm:$0xff]
        %v1510 = vld [vmem:[#allocation2 + $0x348] sm:$0xff]
        %v1511 = vld [vmem:[#allocation2 + $0x350] sm:$0xff]
        %v1512 = vld [vmem:[#allocation2 + $0x358] sm:$0xff]
        %v1513 = vld [vmem:[%s1] sm:$0xff]
        %v1514 = vld [vmem:[%s1 + $0x8] sm:$0xff]
        %vm1515 = vcmask 719872
        %v1517 = vsel %vm1515, %v1514, 0
        %1519 = vmatprep.subr.mxu0 %v1406
        %1520 = vmatpush1.msra.mxu0 %v1405
        %1521 = vmatprep.subr.mxu0 %v1410
        %1522 = vmatpush1.msra.mxu0 %v1409
        %1523 = vmatprep.subr.mxu0 %v1414
        %1524 = vmatpush1.msra.mxu0 %v1413
        %1525 = vmatprep.subr.mxu0 %v1418
        %1526 = vmatpush1.msra.mxu0 %v1417
        %1527 = vmatprep.subr.mxu0 %v1422
        %1528 = vmatpush1.msra.mxu0 %v1421
        %1529 = vmatprep.subr.mxu0 %v1426
        %1530 = vmatpush1.msra.mxu0 %v1425
        %1531 = vmatprep.subr.mxu0 %v1430
        %1532 = vmatpush1.msra.mxu0 %v1429
        %1533 = vmatprep.subr.mxu0 %v1434
        %1534 = vmatpush1.msra.mxu0 %v1433
        %1535 = vmatprep.subr.mxu0 %v1438
        %1536 = vmatpush1.msra.mxu0 %v1437
        %1537 = vmatprep.subr.mxu0 %v1442
        %1538 = vmatpush1.msra.mxu0 %v1441
        %1539 = vmatprep.subr.mxu0 %v1446
        %1540 = vmatpush1.msra.mxu0 %v1445
        %1541 = vmatprep.subr.mxu0 %v1450
        %1542 = vmatpush1.msra.mxu0 %v1449
        %1543 = vmatprep.subr.mxu0 %v1454
        %1544 = vmatpush1.msra.mxu0 %v1453
        %1545 = vmatprep.subr.mxu0 %v1458
        %1546 = vmatpush1.msra.mxu0 %v1457
        %1547 = vmatprep.subr.mxu0 %v1462
        %1548 = vmatpush1.msra.mxu0 %v1461
        %1549 = vmatprep.subr.mxu0 %v1466
        %1550 = vmatpush1.msra.mxu0 %v1465
        %1551 = vmatprep.subr.mxu0 %v1470
        %1552 = vmatpush1.msra.mxu0 %v1469
        %1553 = vmatprep.subr.mxu0 %v1474
        %1554 = vmatpush1.msra.mxu0 %v1473
        %1555 = vmatprep.subr.mxu0 %v1478
        %1556 = vmatpush1.msra.mxu0 %v1477
        %1557 = vmatprep.subr.mxu0 %v1482
        %1558 = vmatpush1.msra.mxu0 %v1481
        %1559 = vmatprep.subr.mxu0 %v1486
        %1560 = vmatpush1.msra.mxu0 %v1485
        %1561 = vmatprep.subr.mxu0 %v1490
        %1562 = vmatpush1.msra.mxu0 %v1489
        %1563 = vmatprep.subr.mxu0 %v1494
        %1564 = vmatpush1.msra.mxu0 %v1493
        %1565 = vmatprep.subr.mxu0 %v1498
        %1566 = vmatpush1.msra.mxu0 %v1497
        %1567 = vmatprep.subr.mxu0 %v1502
        %1568 = vmatpush1.msra.mxu0 %v1501
        %1569 = vmatprep.subr.mxu0 %v1506
        %1570 = vmatpush1.msra.mxu0 %v1505
        %1571 = vmatprep.subr.mxu0 %v1510
        %1572 = vmatpush1.msra.mxu0 %v1509
        %1573 = vmatprep.subr.mxu0 0.0
        %1574 = vmatpush1.msra.mxu0 0.0
        %1575 = vmatprep.subr.mxu0 0.0
        %1576 = vmatpush1.msra.mxu0 0.0
        %1577 = vmatprep.subr.mxu0 0.0
        %1578 = vmatpush1.msra.mxu0 0.0
        %1579 = vmatprep.subr.mxu0 0.0
        %1580 = vmatpush1.msra.mxu0 0.0
        %1581 = vmatprep.subr.mxu0 0.0
        %1582 = vmatpush1.msra.mxu0 0.0
        %1583 = vmatprep.mubr.f32.mxu0 %v1517
        %1584 = vmatmul.mubr.f32.gmra.mrb[0].mxu0 %v1513
        %v1585 = vpop.f32.mrb[0].mxu0
        %v1586 = vadd.f32 0.0, %v1585
        %v1587 = vpop.f32.mrb[0].mxu0
        %v1588 = vadd.f32 0.0, %v1587
        %1589 = vdwg.mxu0
        %1590 = vmatprep.subr.mxu0 %v1408
        %1591 = vmatpush1.msra.mxu0 %v1407
        %1592 = vmatprep.subr.mxu0 %v1412
        %1593 = vmatpush1.msra.mxu0 %v1411
        %1594 = vmatprep.subr.mxu0 %v1416
        %1595 = vmatpush1.msra.mxu0 %v1415
        %1596 = vmatprep.subr.mxu0 %v1420
        %1597 = vmatpush1.msra.mxu0 %v1419
        %1598 = vmatprep.subr.mxu0 %v1424
        %1599 = vmatpush1.msra.mxu0 %v1423
        %1600 = vmatprep.subr.mxu0 %v1428
        %1601 = vmatpush1.msra.mxu0 %v1427
        %1602 = vmatprep.subr.mxu0 %v1432
        %1603 = vmatpush1.msra.mxu0 %v1431
        %1604 = vmatprep.subr.mxu0 %v1436
        %1605 = vmatpush1.msra.mxu0 %v1435
        %1606 = vmatprep.subr.mxu0 %v1440
        %1607 = vmatpush1.msra.mxu0 %v1439
        %1608 = vmatprep.subr.mxu0 %v1444
        %1609 = vmatpush1.msra.mxu0 %v1443
        %1610 = vmatprep.subr.mxu0 %v1448
        %1611 = vmatpush1.msra.mxu0 %v1447
        %1612 = vmatprep.subr.mxu0 %v1452
        %1613 = vmatpush1.msra.mxu0 %v1451
        %1614 = vmatprep.subr.mxu0 %v1456
        %1615 = vmatpush1.msra.mxu0 %v1455
        %1616 = vmatprep.subr.mxu0 %v1460
        %1617 = vmatpush1.msra.mxu0 %v1459
        %1618 = vmatprep.subr.mxu0 %v1464
        %1619 = vmatpush1.msra.mxu0 %v1463
        %1620 = vmatprep.subr.mxu0 %v1468
        %1621 = vmatpush1.msra.mxu0 %v1467
        %1622 = vmatprep.subr.mxu0 %v1472
        %1623 = vmatpush1.msra.mxu0 %v1471
        %1624 = vmatprep.subr.mxu0 %v1476
        %1625 = vmatpush1.msra.mxu0 %v1475
        %1626 = vmatprep.subr.mxu0 %v1480
        %1627 = vmatpush1.msra.mxu0 %v1479
        %1628 = vmatprep.subr.mxu0 %v1484
        %1629 = vmatpush1.msra.mxu0 %v1483
        %1630 = vmatprep.subr.mxu0 %v1488
        %1631 = vmatpush1.msra.mxu0 %v1487
        %1632 = vmatprep.subr.mxu0 %v1492
        %1633 = vmatpush1.msra.mxu0 %v1491
        %1634 = vmatprep.subr.mxu0 %v1496
        %1635 = vmatpush1.msra.mxu0 %v1495
        %1636 = vmatprep.subr.mxu0 %v1500
        %1637 = vmatpush1.msra.mxu0 %v1499
        %1638 = vmatprep.subr.mxu0 %v1504
        %1639 = vmatpush1.msra.mxu0 %v1503
        %1640 = vmatprep.subr.mxu0 %v1508
        %1641 = vmatpush1.msra.mxu0 %v1507
        %1642 = vmatprep.subr.mxu0 %v1512
        %1643 = vmatpush1.msra.mxu0 %v1511
        %1644 = vmatprep.subr.mxu0 0.0
        %1645 = vmatpush1.msra.mxu0 0.0
        %1646 = vmatprep.subr.mxu0 0.0
        %1647 = vmatpush1.msra.mxu0 0.0
        %1648 = vmatprep.subr.mxu0 0.0
        %1649 = vmatpush1.msra.mxu0 0.0
        %1650 = vmatprep.subr.mxu0 0.0
        %1651 = vmatpush1.msra.mxu0 0.0
        %1652 = vmatprep.subr.mxu0 0.0
        %1653 = vmatpush1.msra.mxu0 0.0
        %1654 = vmatprep.mubr.f32.mxu0 %v1517
        %1655 = vmatmul.mubr.f32.gmra.mrb[0].mxu0 %v1513
        %v1656 = vpop.f32.mrb[0].mxu0
        %v1657 = vadd.f32 0.0, %v1656
        %v1658 = vpop.f32.mrb[0].mxu0
        %v1659 = vadd.f32 0.0, %v1658
        %1660 = vdwg.mxu0
        %v1661 = vld [vmem:[%s2] sm:$0xff]
        %1663 = vset.pattern.permute.xlu0 0
        %1664 = vperm.xlu0 %1663, %v1661
        %v1665 = vpop.permute.xlu0 %1664
        %v1667 = vmul.f32 %v1586, %v1665
        %v1668 = vmul.f32 %v1588, %v1665
        %v1669 = vmul.f32 %v1657, %v1665
        %v1670 = vmul.f32 %v1659, %v1665
        %v1671 = vld [vmem:[%s3] sm:$0xff]
        %1673 = vset.pattern.permute.xlu0 0
        %1674 = vperm.xlu0 %1673, %v1671
        %v1675 = vpop.permute.xlu0 %1674
        %v1677 = vadd.f32 %v1667, %v1675
        %v1678 = vadd.f32 %v1668, %v1675
        %v1679 = vadd.f32 %v1669, %v1675
        %v1680 = vadd.f32 %v1670, %v1675
        %vm1681 = vcmp.ge.f32.partialorder %v1677, 0.0
        %vm1682 = vcmp.ge.f32.partialorder %v1678, 0.0
        %vm1683 = vcmp.ge.f32.partialorder %v1679, 0.0
        %vm1684 = vcmp.ge.f32.partialorder %v1680, 0.0
        %v1685 = vmul.f32 %v1677, 0.01
        %v1686 = vmul.f32 %v1678, 0.01
        %v1687 = vmul.f32 %v1679, 0.01
        %v1688 = vmul.f32 %v1680, 0.01
        %v1689 = vsel %vm1681, %v1677, %v1685
        %v1690 = vsel %vm1682, %v1678, %v1686
        %v1691 = vsel %vm1683, %v1679, %v1687
        %v1692 = vsel %vm1684, %v1680, %v1688
        %1693 = vrot.lane.b32.xlu0 %v1689, 36
        %v1694 = vpop.permute.xlu0 %1693
        %1695 = vrot.lane.b32.xlu0 %v1690, 36
        %v1696 = vpop.permute.xlu0 %1695
        %1697 = vrot.lane.b32.xlu0 %v1691, 36
        %v1698 = vpop.permute.xlu0 %1697
        %1699 = vrot.lane.b32.xlu0 %v1692, 36
        %v1700 = vpop.permute.xlu0 %1699
        %vm1701 = vcmp.lt.s32.totalorder %v499, 36
        %v1702 = vsel %vm1701, %v1698, %v1700
        %v1703 = vsel %vm1701, %v1696, %v1698
        %v1704 = vsel %vm1701, %v1694, %v1696
        %v1705 = vsel %vm1701, %v1700, %v1694
        %v1706 = vld [vmem:[#allocation8] ss:$8 sm:$0xf]
        %v1708 = vlaneseq
        %v1709 = vshrl.u32 %v1708, 7
        %v1710 = vsub.s32 0, %v1709
        %v1711 = vrot.slane %v1706, %v1710
        %v1712 = vlaneseq
        %v1713 = vshrl.u32 %v1712, 7
        %v1714 = vsub.s32 1, %v1713
        %v1715 = vrot.slane %v1706, %v1714
        %v1716 = vlaneseq
        %v1717 = vshrl.u32 %v1716, 7
        %v1718 = vsub.s32 2, %v1717
        %v1719 = vrot.slane %v1706, %v1718
        %v1720 = vlaneseq
        %v1721 = vshrl.u32 %v1720, 7
        %v1722 = vsub.s32 3, %v1721
        %v1723 = vrot.slane %v1706, %v1722
        %v1728 = vmul.f32 %v1703, %v1711
        %v1729 = vmul.f32 %v1702, %v1715
        %v1730 = vmul.f32 %v1705, %v1719
        %v1731 = vmul.f32 %v1704, %v1723
        %1732 = vrot.lane.b32.xlu0 %v1689, 32
        %v1733 = vpop.permute.xlu0 %1732
        %1734 = vrot.lane.b32.xlu0 %v1690, 32
        %v1735 = vpop.permute.xlu0 %1734
        %1736 = vrot.lane.b32.xlu0 %v1691, 32
        %v1737 = vpop.permute.xlu0 %1736
        %1738 = vrot.lane.b32.xlu0 %v1692, 32
        %v1739 = vpop.permute.xlu0 %1738
        %vm1740 = vcmp.lt.s32.totalorder %v499, 32
        %v1741 = vsel %vm1740, %v1737, %v1739
        %v1742 = vsel %vm1740, %v1735, %v1737
        %v1743 = vsel %vm1740, %v1733, %v1735
        %v1744 = vsel %vm1740, %v1739, %v1733
        %s1745 = scalar_lea.vmem [#allocation8], 1
        %v1746 = vld [vmem:[%s1745] ss:$8 sm:$0xf]
        %v1748 = vlaneseq
        %v1749 = vshrl.u32 %v1748, 7
        %v1750 = vsub.s32 0, %v1749
        %v1751 = vrot.slane %v1746, %v1750
        %v1752 = vlaneseq
        %v1753 = vshrl.u32 %v1752, 7
        %v1754 = vsub.s32 1, %v1753
        %v1755 = vrot.slane %v1746, %v1754
        %v1756 = vlaneseq
        %v1757 = vshrl.u32 %v1756, 7
        %v1758 = vsub.s32 2, %v1757
        %v1759 = vrot.slane %v1746, %v1758
        %v1760 = vlaneseq
        %v1761 = vshrl.u32 %v1760, 7
        %v1762 = vsub.s32 3, %v1761
        %v1763 = vrot.slane %v1746, %v1762
        %v1768 = vmul.f32 %v1742, %v1751
        %v1769 = vmul.f32 %v1741, %v1755
        %v1770 = vmul.f32 %v1744, %v1759
        %v1771 = vmul.f32 %v1743, %v1763
        %1772 = vrot.lane.b32.xlu0 %v1689, 28
        %v1773 = vpop.permute.xlu0 %1772
        %1774 = vrot.lane.b32.xlu0 %v1690, 28
        %v1775 = vpop.permute.xlu0 %1774
        %1776 = vrot.lane.b32.xlu0 %v1691, 28
        %v1777 = vpop.permute.xlu0 %1776
        %1778 = vrot.lane.b32.xlu0 %v1692, 28
        %v1779 = vpop.permute.xlu0 %1778
        %vm1780 = vcmp.lt.s32.totalorder %v499, 28
        %v1781 = vsel %vm1780, %v1777, %v1779
        %v1782 = vsel %vm1780, %v1775, %v1777
        %v1783 = vsel %vm1780, %v1773, %v1775
        %v1784 = vsel %vm1780, %v1779, %v1773
        %s1785 = scalar_lea.vmem [#allocation8], 2
        %v1786 = vld [vmem:[%s1785] ss:$8 sm:$0xf]
        %v1788 = vlaneseq
        %v1789 = vshrl.u32 %v1788, 7
        %v1790 = vsub.s32 0, %v1789
        %v1791 = vrot.slane %v1786, %v1790
        %v1792 = vlaneseq
        %v1793 = vshrl.u32 %v1792, 7
        %v1794 = vsub.s32 1, %v1793
        %v1795 = vrot.slane %v1786, %v1794
        %v1796 = vlaneseq
        %v1797 = vshrl.u32 %v1796, 7
        %v1798 = vsub.s32 2, %v1797
        %v1799 = vrot.slane %v1786, %v1798
        %v1800 = vlaneseq
        %v1801 = vshrl.u32 %v1800, 7
        %v1802 = vsub.s32 3, %v1801
        %v1803 = vrot.slane %v1786, %v1802
        %v1808 = vmul.f32 %v1782, %v1791
        %v1809 = vmul.f32 %v1781, %v1795
        %v1810 = vmul.f32 %v1784, %v1799
        %v1811 = vmul.f32 %v1783, %v1803
        %1812 = vrot.lane.b32.xlu0 %v1689, 4
        %v1813 = vpop.permute.xlu0 %1812
        %1814 = vrot.lane.b32.xlu0 %v1690, 4
        %v1815 = vpop.permute.xlu0 %1814
        %1816 = vrot.lane.b32.xlu0 %v1691, 4
        %v1817 = vpop.permute.xlu0 %1816
        %1818 = vrot.lane.b32.xlu0 %v1692, 4
        %v1819 = vpop.permute.xlu0 %1818
        %vm1820 = vcmp.lt.s32.totalorder %v499, 4
        %v1821 = vsel %vm1820, %v1817, %v1819
        %v1822 = vsel %vm1820, %v1815, %v1817
        %v1823 = vsel %vm1820, %v1813, %v1815
        %v1824 = vsel %vm1820, %v1819, %v1813
        %s1825 = scalar_lea.vmem [#allocation8], 3
        %v1826 = vld [vmem:[%s1825] ss:$8 sm:$0xf]
        %v1828 = vlaneseq
        %v1829 = vshrl.u32 %v1828, 7
        %v1830 = vsub.s32 0, %v1829
        %v1831 = vrot.slane %v1826, %v1830
        %v1832 = vlaneseq
        %v1833 = vshrl.u32 %v1832, 7
        %v1834 = vsub.s32 1, %v1833
        %v1835 = vrot.slane %v1826, %v1834
        %v1836 = vlaneseq
        %v1837 = vshrl.u32 %v1836, 7
        %v1838 = vsub.s32 2, %v1837
        %v1839 = vrot.slane %v1826, %v1838
        %v1840 = vlaneseq
        %v1841 = vshrl.u32 %v1840, 7
        %v1842 = vsub.s32 3, %v1841
        %v1843 = vrot.slane %v1826, %v1842
        %v1848 = vmul.f32 %v1822, %v1831
        %v1849 = vmul.f32 %v1821, %v1835
        %v1850 = vmul.f32 %v1824, %v1839
        %v1851 = vmul.f32 %v1823, %v1843
        %s1852 = scalar_lea.vmem [#allocation8], 4
        %v1853 = vld [vmem:[%s1852] ss:$8 sm:$0xf]
        %v1855 = vlaneseq
        %v1856 = vshrl.u32 %v1855, 7
        %v1857 = vsub.s32 0, %v1856
        %v1858 = vrot.slane %v1853, %v1857
        %v1859 = vlaneseq
        %v1860 = vshrl.u32 %v1859, 7
        %v1861 = vsub.s32 1, %v1860
        %v1862 = vrot.slane %v1853, %v1861
        %v1863 = vlaneseq
        %v1864 = vshrl.u32 %v1863, 7
        %v1865 = vsub.s32 2, %v1864
        %v1866 = vrot.slane %v1853, %v1865
        %v1867 = vlaneseq
        %v1868 = vshrl.u32 %v1867, 7
        %v1869 = vsub.s32 3, %v1868
        %v1870 = vrot.slane %v1853, %v1869
        %v1875 = vmul.f32 %v1691, %v1858
        %v1876 = vmul.f32 %v1692, %v1862
        %v1877 = vmul.f32 %v1689, %v1866
        %v1878 = vmul.f32 %v1690, %v1870
        %1879 = vrot.lane.b32.xlu0 %v1689, 124
        %v1880 = vpop.permute.xlu0 %1879
        %1881 = vrot.lane.b32.xlu0 %v1690, 124
        %v1882 = vpop.permute.xlu0 %1881
        %1883 = vrot.lane.b32.xlu0 %v1691, 124
        %v1884 = vpop.permute.xlu0 %1883
        %1885 = vrot.lane.b32.xlu0 %v1692, 124
        %v1886 = vpop.permute.xlu0 %1885
        %vm1887 = vcmp.lt.s32.totalorder %v499, 124
        %v1888 = vsel %vm1887, %v1884, %v1886
        %v1889 = vsel %vm1887, %v1882, %v1884
        %v1890 = vsel %vm1887, %v1880, %v1882
        %v1891 = vsel %vm1887, %v1886, %v1880
        %s1892 = scalar_lea.vmem [#allocation8], 5
        %v1893 = vld [vmem:[%s1892] ss:$8 sm:$0xf]
        %v1895 = vlaneseq
        %v1896 = vshrl.u32 %v1895, 7
        %v1897 = vsub.s32 0, %v1896
        %v1898 = vrot.slane %v1893, %v1897
        %v1899 = vlaneseq
        %v1900 = vshrl.u32 %v1899, 7
        %v1901 = vsub.s32 1, %v1900
        %v1902 = vrot.slane %v1893, %v1901
        %v1903 = vlaneseq
        %v1904 = vshrl.u32 %v1903, 7
        %v1905 = vsub.s32 2, %v1904
        %v1906 = vrot.slane %v1893, %v1905
        %v1907 = vlaneseq
        %v1908 = vshrl.u32 %v1907, 7
        %v1909 = vsub.s32 3, %v1908
        %v1910 = vrot.slane %v1893, %v1909
        %v1915 = vmul.f32 %v1888, %v1898
        %v1916 = vmul.f32 %v1891, %v1902
        %v1917 = vmul.f32 %v1890, %v1906
        %v1918 = vmul.f32 %v1889, %v1910
        %1919 = vrot.lane.b32.xlu0 %v1689, 100
        %v1920 = vpop.permute.xlu0 %1919
        %1921 = vrot.lane.b32.xlu0 %v1690, 100
        %v1922 = vpop.permute.xlu0 %1921
        %1923 = vrot.lane.b32.xlu0 %v1691, 100
        %v1924 = vpop.permute.xlu0 %1923
        %1925 = vrot.lane.b32.xlu0 %v1692, 100
        %v1926 = vpop.permute.xlu0 %1925
        %vm1927 = vcmp.lt.s32.totalorder %v499, 100
        %v1928 = vsel %vm1927, %v1924, %v1926
        %v1929 = vsel %vm1927, %v1922, %v1924
        %v1930 = vsel %vm1927, %v1920, %v1922
        %v1931 = vsel %vm1927, %v1926, %v1920
        %s1932 = scalar_lea.vmem [#allocation8], 6
        %v1933 = vld [vmem:[%s1932] ss:$8 sm:$0xf]
        %v1935 = vlaneseq
        %v1936 = vshrl.u32 %v1935, 7
        %v1937 = vsub.s32 0, %v1936
        %v1938 = vrot.slane %v1933, %v1937
        %v1939 = vlaneseq
        %v1940 = vshrl.u32 %v1939, 7
        %v1941 = vsub.s32 1, %v1940
        %v1942 = vrot.slane %v1933, %v1941
        %v1943 = vlaneseq
        %v1944 = vshrl.u32 %v1943, 7
        %v1945 = vsub.s32 2, %v1944
        %v1946 = vrot.slane %v1933, %v1945
        %v1947 = vlaneseq
        %v1948 = vshrl.u32 %v1947, 7
        %v1949 = vsub.s32 3, %v1948
        %v1950 = vrot.slane %v1933, %v1949
        %v1955 = vmul.f32 %v1928, %v1938
        %v1956 = vmul.f32 %v1931, %v1942
        %v1957 = vmul.f32 %v1930, %v1946
        %v1958 = vmul.f32 %v1929, %v1950
        %1959 = vrot.lane.b32.xlu0 %v1689, 96
        %v1960 = vpop.permute.xlu0 %1959
        %1961 = vrot.lane.b32.xlu0 %v1690, 96
        %v1962 = vpop.permute.xlu0 %1961
        %1963 = vrot.lane.b32.xlu0 %v1691, 96
        %v1964 = vpop.permute.xlu0 %1963
        %1965 = vrot.lane.b32.xlu0 %v1692, 96
        %v1966 = vpop.permute.xlu0 %1965
        %vm1967 = vcmp.lt.s32.totalorder %v499, 96
        %v1968 = vsel %vm1967, %v1964, %v1966
        %v1969 = vsel %vm1967, %v1962, %v1964
        %v1970 = vsel %vm1967, %v1960, %v1962
        %v1971 = vsel %vm1967, %v1966, %v1960
        %s1972 = scalar_lea.vmem [#allocation8], 7
        %v1973 = vld [vmem:[%s1972] ss:$8 sm:$0xf]
        %v1975 = vlaneseq
        %v1976 = vshrl.u32 %v1975, 7
        %v1977 = vsub.s32 0, %v1976
        %v1978 = vrot.slane %v1973, %v1977
        %v1979 = vlaneseq
        %v1980 = vshrl.u32 %v1979, 7
        %v1981 = vsub.s32 1, %v1980
        %v1982 = vrot.slane %v1973, %v1981
        %v1983 = vlaneseq
        %v1984 = vshrl.u32 %v1983, 7
        %v1985 = vsub.s32 2, %v1984
        %v1986 = vrot.slane %v1973, %v1985
        %v1987 = vlaneseq
        %v1988 = vshrl.u32 %v1987, 7
        %v1989 = vsub.s32 3, %v1988
        %v1990 = vrot.slane %v1973, %v1989
        %v1995 = vmul.f32 %v1968, %v1978
        %v1996 = vmul.f32 %v1971, %v1982
        %v1997 = vmul.f32 %v1970, %v1986
        %v1998 = vmul.f32 %v1969, %v1990
        %1999 = vrot.lane.b32.xlu0 %v1689, 92
        %v2000 = vpop.permute.xlu0 %1999
        %2001 = vrot.lane.b32.xlu0 %v1690, 92
        %v2002 = vpop.permute.xlu0 %2001
        %2003 = vrot.lane.b32.xlu0 %v1691, 92
        %v2004 = vpop.permute.xlu0 %2003
        %2005 = vrot.lane.b32.xlu0 %v1692, 92
        %v2006 = vpop.permute.xlu0 %2005
        %vm2007 = vcmp.lt.s32.totalorder %v499, 92
        %v2008 = vsel %vm2007, %v2004, %v2006
        %v2009 = vsel %vm2007, %v2002, %v2004
        %v2010 = vsel %vm2007, %v2000, %v2002
        %v2011 = vsel %vm2007, %v2006, %v2000
        %s2012 = scalar_lea.vmem [#allocation8], 32
        %v2013 = vld [vmem:[%s2012] ss:$8 sm:$0xf]
        %v2015 = vlaneseq
        %v2016 = vshrl.u32 %v2015, 7
        %v2017 = vsub.s32 0, %v2016
        %v2018 = vrot.slane %v2013, %v2017
        %v2019 = vlaneseq
        %v2020 = vshrl.u32 %v2019, 7
        %v2021 = vsub.s32 1, %v2020
        %v2022 = vrot.slane %v2013, %v2021
        %v2023 = vlaneseq
        %v2024 = vshrl.u32 %v2023, 7
        %v2025 = vsub.s32 2, %v2024
        %v2026 = vrot.slane %v2013, %v2025
        %v2027 = vlaneseq
        %v2028 = vshrl.u32 %v2027, 7
        %v2029 = vsub.s32 3, %v2028
        %v2030 = vrot.slane %v2013, %v2029
        %v2035 = vmul.f32 %v2008, %v2018
        %v2036 = vmul.f32 %v2011, %v2022
        %v2037 = vmul.f32 %v2010, %v2026
        %v2038 = vmul.f32 %v2009, %v2030
        %s2039 = scalar_lea.vmem [#allocation8], 33
        %v2040 = vld [vmem:[%s2039] ss:$8 sm:$0xf]
        %v2042 = vlaneseq
        %v2043 = vshrl.u32 %v2042, 7
        %v2044 = vsub.s32 0, %v2043
        %v2045 = vrot.slane %v2040, %v2044
        %v2046 = vlaneseq
        %v2047 = vshrl.u32 %v2046, 7
        %v2048 = vsub.s32 1, %v2047
        %v2049 = vrot.slane %v2040, %v2048
        %v2050 = vlaneseq
        %v2051 = vshrl.u32 %v2050, 7
        %v2052 = vsub.s32 2, %v2051
        %v2053 = vrot.slane %v2040, %v2052
        %v2054 = vlaneseq
        %v2055 = vshrl.u32 %v2054, 7
        %v2056 = vsub.s32 3, %v2055
        %v2057 = vrot.slane %v2040, %v2056
        %v2062 = vmul.f32 %v1705, %v2045
        %v2063 = vmul.f32 %v1704, %v2049
        %v2064 = vmul.f32 %v1703, %v2053
        %v2065 = vmul.f32 %v1702, %v2057
        %s2066 = scalar_lea.vmem [#allocation8], 34
        %v2067 = vld [vmem:[%s2066] ss:$8 sm:$0xf]
        %v2069 = vlaneseq
        %v2070 = vshrl.u32 %v2069, 7
        %v2071 = vsub.s32 0, %v2070
        %v2072 = vrot.slane %v2067, %v2071
        %v2073 = vlaneseq
        %v2074 = vshrl.u32 %v2073, 7
        %v2075 = vsub.s32 1, %v2074
        %v2076 = vrot.slane %v2067, %v2075
        %v2077 = vlaneseq
        %v2078 = vshrl.u32 %v2077, 7
        %v2079 = vsub.s32 2, %v2078
        %v2080 = vrot.slane %v2067, %v2079
        %v2081 = vlaneseq
        %v2082 = vshrl.u32 %v2081, 7
        %v2083 = vsub.s32 3, %v2082
        %v2084 = vrot.slane %v2067, %v2083
        %v2089 = vmul.f32 %v1744, %v2072
        %v2090 = vmul.f32 %v1743, %v2076
        %v2091 = vmul.f32 %v1742, %v2080
        %v2092 = vmul.f32 %v1741, %v2084
        %s2093 = scalar_lea.vmem [#allocation8], 35
        %v2094 = vld [vmem:[%s2093] ss:$8 sm:$0xf]
        %v2096 = vlaneseq
        %v2097 = vshrl.u32 %v2096, 7
        %v2098 = vsub.s32 0, %v2097
        %v2099 = vrot.slane %v2094, %v2098
        %v2100 = vlaneseq
        %v2101 = vshrl.u32 %v2100, 7
        %v2102 = vsub.s32 1, %v2101
        %v2103 = vrot.slane %v2094, %v2102
        %v2104 = vlaneseq
        %v2105 = vshrl.u32 %v2104, 7
        %v2106 = vsub.s32 2, %v2105
        %v2107 = vrot.slane %v2094, %v2106
        %v2108 = vlaneseq
        %v2109 = vshrl.u32 %v2108, 7
        %v2110 = vsub.s32 3, %v2109
        %v2111 = vrot.slane %v2094, %v2110
        %v2116 = vmul.f32 %v1784, %v2099
        %v2117 = vmul.f32 %v1783, %v2103
        %v2118 = vmul.f32 %v1782, %v2107
        %v2119 = vmul.f32 %v1781, %v2111
        %s2120 = scalar_lea.vmem [#allocation8], 36
        %v2121 = vld [vmem:[%s2120] ss:$8 sm:$0xf]
        %v2123 = vlaneseq
        %v2124 = vshrl.u32 %v2123, 7
        %v2125 = vsub.s32 0, %v2124
        %v2126 = vrot.slane %v2121, %v2125
        %v2127 = vlaneseq
        %v2128 = vshrl.u32 %v2127, 7
        %v2129 = vsub.s32 1, %v2128
        %v2130 = vrot.slane %v2121, %v2129
        %v2131 = vlaneseq
        %v2132 = vshrl.u32 %v2131, 7
        %v2133 = vsub.s32 2, %v2132
        %v2134 = vrot.slane %v2121, %v2133
        %v2135 = vlaneseq
        %v2136 = vshrl.u32 %v2135, 7
        %v2137 = vsub.s32 3, %v2136
        %v2138 = vrot.slane %v2121, %v2137
        %v2143 = vmul.f32 %v1824, %v2126
        %v2144 = vmul.f32 %v1823, %v2130
        %v2145 = vmul.f32 %v1822, %v2134
        %v2146 = vmul.f32 %v1821, %v2138
        %s2147 = scalar_lea.vmem [#allocation8], 38
        %v2148 = vld [vmem:[%s2147] ss:$8 sm:$0xf]
        %v2150 = vlaneseq
        %v2151 = vshrl.u32 %v2150, 7
        %v2152 = vsub.s32 0, %v2151
        %v2153 = vrot.slane %v2148, %v2152
        %v2154 = vlaneseq
        %v2155 = vshrl.u32 %v2154, 7
        %v2156 = vsub.s32 1, %v2155
        %v2157 = vrot.slane %v2148, %v2156
        %v2158 = vlaneseq
        %v2159 = vshrl.u32 %v2158, 7
        %v2160 = vsub.s32 2, %v2159
        %v2161 = vrot.slane %v2148, %v2160
        %v2162 = vlaneseq
        %v2163 = vshrl.u32 %v2162, 7
        %v2164 = vsub.s32 3, %v2163
        %v2165 = vrot.slane %v2148, %v2164
        %v2170 = vmul.f32 %v1890, %v2153
        %v2171 = vmul.f32 %v1889, %v2157
        %v2172 = vmul.f32 %v1888, %v2161
        %v2173 = vmul.f32 %v1891, %v2165
        %s2174 = scalar_lea.vmem [#allocation8], 39
        %v2175 = vld [vmem:[%s2174] ss:$8 sm:$0xf]
        %v2177 = vlaneseq
        %v2178 = vshrl.u32 %v2177, 7
        %v2179 = vsub.s32 0, %v2178
        %v2180 = vrot.slane %v2175, %v2179
        %v2181 = vlaneseq
        %v2182 = vshrl.u32 %v2181, 7
        %v2183 = vsub.s32 1, %v2182
        %v2184 = vrot.slane %v2175, %v2183
        %v2185 = vlaneseq
        %v2186 = vshrl.u32 %v2185, 7
        %v2187 = vsub.s32 2, %v2186
        %v2188 = vrot.slane %v2175, %v2187
        %v2189 = vlaneseq
        %v2190 = vshrl.u32 %v2189, 7
        %v2191 = vsub.s32 3, %v2190
        %v2192 = vrot.slane %v2175, %v2191
        %v2197 = vmul.f32 %v1930, %v2180
        %v2198 = vmul.f32 %v1929, %v2184
        %v2199 = vmul.f32 %v1928, %v2188
        %v2200 = vmul.f32 %v1931, %v2192
        %s2201 = scalar_lea.vmem [#allocation8], 64
        %v2202 = vld [vmem:[%s2201] ss:$8 sm:$0xf]
        %v2204 = vlaneseq
        %v2205 = vshrl.u32 %v2204, 7
        %v2206 = vsub.s32 0, %v2205
        %v2207 = vrot.slane %v2202, %v2206
        %v2208 = vlaneseq
        %v2209 = vshrl.u32 %v2208, 7
        %v2210 = vsub.s32 1, %v2209
        %v2211 = vrot.slane %v2202, %v2210
        %v2212 = vlaneseq
        %v2213 = vshrl.u32 %v2212, 7
        %v2214 = vsub.s32 2, %v2213
        %v2215 = vrot.slane %v2202, %v2214
        %v2216 = vlaneseq
        %v2217 = vshrl.u32 %v2216, 7
        %v2218 = vsub.s32 3, %v2217
        %v2219 = vrot.slane %v2202, %v2218
        %v2224 = vmul.f32 %v1970, %v2207
        %v2225 = vmul.f32 %v1969, %v2211
        %v2226 = vmul.f32 %v1968, %v2215
        %v2227 = vmul.f32 %v1971, %v2219
        %s2228 = scalar_lea.vmem [#allocation8], 65
        %v2229 = vld [vmem:[%s2228] ss:$8 sm:$0xf]
        %v2231 = vlaneseq
        %v2232 = vshrl.u32 %v2231, 7
        %v2233 = vsub.s32 0, %v2232
        %v2234 = vrot.slane %v2229, %v2233
        %v2235 = vlaneseq
        %v2236 = vshrl.u32 %v2235, 7
        %v2237 = vsub.s32 1, %v2236
        %v2238 = vrot.slane %v2229, %v2237
        %v2239 = vlaneseq
        %v2240 = vshrl.u32 %v2239, 7
        %v2241 = vsub.s32 2, %v2240
        %v2242 = vrot.slane %v2229, %v2241
        %v2243 = vlaneseq
        %v2244 = vshrl.u32 %v2243, 7
        %v2245 = vsub.s32 3, %v2244
        %v2246 = vrot.slane %v2229, %v2245
        %v2251 = vmul.f32 %v2010, %v2234
        %v2252 = vmul.f32 %v2009, %v2238
        %v2253 = vmul.f32 %v2008, %v2242
        %v2254 = vmul.f32 %v2011, %v2246
        %s2255 = scalar_lea.vmem [#allocation8], 66
        %v2256 = vld [vmem:[%s2255] ss:$8 sm:$0xf]
        %v2258 = vlaneseq
        %v2259 = vshrl.u32 %v2258, 7
        %v2260 = vsub.s32 0, %v2259
        %v2261 = vrot.slane %v2256, %v2260
        %v2262 = vlaneseq
        %v2263 = vshrl.u32 %v2262, 7
        %v2264 = vsub.s32 1, %v2263
        %v2265 = vrot.slane %v2256, %v2264
        %v2266 = vlaneseq
        %v2267 = vshrl.u32 %v2266, 7
        %v2268 = vsub.s32 2, %v2267
        %v2269 = vrot.slane %v2256, %v2268
        %v2270 = vlaneseq
        %v2271 = vshrl.u32 %v2270, 7
        %v2272 = vsub.s32 3, %v2271
        %v2273 = vrot.slane %v2256, %v2272
        %v2278 = vmul.f32 %v1703, %v2261
        %v2279 = vmul.f32 %v1702, %v2265
        %v2280 = vmul.f32 %v1705, %v2269
        %v2281 = vmul.f32 %v1704, %v2273
        %s2282 = scalar_lea.vmem [#allocation8], 67
        %v2283 = vld [vmem:[%s2282] ss:$8 sm:$0xf]
        %v2285 = vlaneseq
        %v2286 = vshrl.u32 %v2285, 7
        %v2287 = vsub.s32 0, %v2286
        %v2288 = vrot.slane %v2283, %v2287
        %v2289 = vlaneseq
        %v2290 = vshrl.u32 %v2289, 7
        %v2291 = vsub.s32 1, %v2290
        %v2292 = vrot.slane %v2283, %v2291
        %v2293 = vlaneseq
        %v2294 = vshrl.u32 %v2293, 7
        %v2295 = vsub.s32 2, %v2294
        %v2296 = vrot.slane %v2283, %v2295
        %v2297 = vlaneseq
        %v2298 = vshrl.u32 %v2297, 7
        %v2299 = vsub.s32 3, %v2298
        %v2300 = vrot.slane %v2283, %v2299
        %v2305 = vmul.f32 %v1742, %v2288
        %v2306 = vmul.f32 %v1741, %v2292
        %v2307 = vmul.f32 %v1744, %v2296
        %v2308 = vmul.f32 %v1743, %v2300
        %s2309 = scalar_lea.vmem [#allocation8], 68
        %v2310 = vld [vmem:[%s2309] ss:$8 sm:$0xf]
        %v2312 = vlaneseq
        %v2313 = vshrl.u32 %v2312, 7
        %v2314 = vsub.s32 0, %v2313
        %v2315 = vrot.slane %v2310, %v2314
        %v2316 = vlaneseq
        %v2317 = vshrl.u32 %v2316, 7
        %v2318 = vsub.s32 1, %v2317
        %v2319 = vrot.slane %v2310, %v2318
        %v2320 = vlaneseq
        %v2321 = vshrl.u32 %v2320, 7
        %v2322 = vsub.s32 2, %v2321
        %v2323 = vrot.slane %v2310, %v2322
        %v2324 = vlaneseq
        %v2325 = vshrl.u32 %v2324, 7
        %v2326 = vsub.s32 3, %v2325
        %v2327 = vrot.slane %v2310, %v2326
        %v2332 = vmul.f32 %v1782, %v2315
        %v2333 = vmul.f32 %v1781, %v2319
        %v2334 = vmul.f32 %v1784, %v2323
        %v2335 = vmul.f32 %v1783, %v2327
        %s2336 = scalar_lea.vmem [#allocation8], 69
        %v2337 = vld [vmem:[%s2336] ss:$8 sm:$0xf]
        %v2339 = vlaneseq
        %v2340 = vshrl.u32 %v2339, 7
        %v2341 = vsub.s32 0, %v2340
        %v2342 = vrot.slane %v2337, %v2341
        %v2343 = vlaneseq
        %v2344 = vshrl.u32 %v2343, 7
        %v2345 = vsub.s32 1, %v2344
        %v2346 = vrot.slane %v2337, %v2345
        %v2347 = vlaneseq
        %v2348 = vshrl.u32 %v2347, 7
        %v2349 = vsub.s32 2, %v2348
        %v2350 = vrot.slane %v2337, %v2349
        %v2351 = vlaneseq
        %v2352 = vshrl.u32 %v2351, 7
        %v2353 = vsub.s32 3, %v2352
        %v2354 = vrot.slane %v2337, %v2353
        %v2359 = vmul.f32 %v1822, %v2342
        %v2360 = vmul.f32 %v1821, %v2346
        %v2361 = vmul.f32 %v1824, %v2350
        %v2362 = vmul.f32 %v1823, %v2354
        %s2363 = scalar_lea.vmem [#allocation8], 70
        %v2364 = vld [vmem:[%s2363] ss:$8 sm:$0xf]
        %v2366 = vlaneseq
        %v2367 = vshrl.u32 %v2366, 7
        %v2368 = vsub.s32 0, %v2367
        %v2369 = vrot.slane %v2364, %v2368
        %v2370 = vlaneseq
        %v2371 = vshrl.u32 %v2370, 7
        %v2372 = vsub.s32 1, %v2371
        %v2373 = vrot.slane %v2364, %v2372
        %v2374 = vlaneseq
        %v2375 = vshrl.u32 %v2374, 7
        %v2376 = vsub.s32 2, %v2375
        %v2377 = vrot.slane %v2364, %v2376
        %v2378 = vlaneseq
        %v2379 = vshrl.u32 %v2378, 7
        %v2380 = vsub.s32 3, %v2379
        %v2381 = vrot.slane %v2364, %v2380
        %v2386 = vmul.f32 %v1691, %v2369
        %v2387 = vmul.f32 %v1692, %v2373
        %v2388 = vmul.f32 %v1689, %v2377
        %v2389 = vmul.f32 %v1690, %v2381
        %s2390 = scalar_lea.vmem [#allocation8], 71
        %v2391 = vld [vmem:[%s2390] ss:$8 sm:$0xf]
        %v2393 = vlaneseq
        %v2394 = vshrl.u32 %v2393, 7
        %v2395 = vsub.s32 0, %v2394
        %v2396 = vrot.slane %v2391, %v2395
        %v2397 = vlaneseq
        %v2398 = vshrl.u32 %v2397, 7
        %v2399 = vsub.s32 1, %v2398
        %v2400 = vrot.slane %v2391, %v2399
        %v2401 = vlaneseq
        %v2402 = vshrl.u32 %v2401, 7
        %v2403 = vsub.s32 2, %v2402
        %v2404 = vrot.slane %v2391, %v2403
        %v2405 = vlaneseq
        %v2406 = vshrl.u32 %v2405, 7
        %v2407 = vsub.s32 3, %v2406
        %v2408 = vrot.slane %v2391, %v2407
        %v2413 = vmul.f32 %v1888, %v2396
        %v2414 = vmul.f32 %v1891, %v2400
        %v2415 = vmul.f32 %v1890, %v2404
        %v2416 = vmul.f32 %v1889, %v2408
        %s2417 = scalar_lea.vmem [#allocation8], 96
        %v2418 = vld [vmem:[%s2417] ss:$8 sm:$0xf]
        %v2420 = vlaneseq
        %v2421 = vshrl.u32 %v2420, 7
        %v2422 = vsub.s32 0, %v2421
        %v2423 = vrot.slane %v2418, %v2422
        %v2424 = vlaneseq
        %v2425 = vshrl.u32 %v2424, 7
        %v2426 = vsub.s32 1, %v2425
        %v2427 = vrot.slane %v2418, %v2426
        %v2428 = vlaneseq
        %v2429 = vshrl.u32 %v2428, 7
        %v2430 = vsub.s32 2, %v2429
        %v2431 = vrot.slane %v2418, %v2430
        %v2432 = vlaneseq
        %v2433 = vshrl.u32 %v2432, 7
        %v2434 = vsub.s32 3, %v2433
        %v2435 = vrot.slane %v2418, %v2434
        %v2440 = vmul.f32 %v1928, %v2423
        %v2441 = vmul.f32 %v1931, %v2427
        %v2442 = vmul.f32 %v1930, %v2431
        %v2443 = vmul.f32 %v1929, %v2435
        %s2444 = scalar_lea.vmem [#allocation8], 97
        %v2445 = vld [vmem:[%s2444] ss:$8 sm:$0xf]
        %v2447 = vlaneseq
        %v2448 = vshrl.u32 %v2447, 7
        %v2449 = vsub.s32 0, %v2448
        %v2450 = vrot.slane %v2445, %v2449
        %v2451 = vlaneseq
        %v2452 = vshrl.u32 %v2451, 7
        %v2453 = vsub.s32 1, %v2452
        %v2454 = vrot.slane %v2445, %v2453
        %v2455 = vlaneseq
        %v2456 = vshrl.u32 %v2455, 7
        %v2457 = vsub.s32 2, %v2456
        %v2458 = vrot.slane %v2445, %v2457
        %v2459 = vlaneseq
        %v2460 = vshrl.u32 %v2459, 7
        %v2461 = vsub.s32 3, %v2460
        %v2462 = vrot.slane %v2445, %v2461
        %v2467 = vmul.f32 %v1968, %v2450
        %v2468 = vmul.f32 %v1971, %v2454
        %v2469 = vmul.f32 %v1970, %v2458
        %v2470 = vmul.f32 %v1969, %v2462
        %s2471 = scalar_lea.vmem [#allocation8], 98
        %v2472 = vld [vmem:[%s2471] ss:$8 sm:$0xf]
        %v2474 = vlaneseq
        %v2475 = vshrl.u32 %v2474, 7
        %v2476 = vsub.s32 0, %v2475
        %v2477 = vrot.slane %v2472, %v2476
        %v2478 = vlaneseq
        %v2479 = vshrl.u32 %v2478, 7
        %v2480 = vsub.s32 1, %v2479
        %v2481 = vrot.slane %v2472, %v2480
        %v2482 = vlaneseq
        %v2483 = vshrl.u32 %v2482, 7
        %v2484 = vsub.s32 2, %v2483
        %v2485 = vrot.slane %v2472, %v2484
        %v2486 = vlaneseq
        %v2487 = vshrl.u32 %v2486, 7
        %v2488 = vsub.s32 3, %v2487
        %v2489 = vrot.slane %v2472, %v2488
        %v2494 = vmul.f32 %v2008, %v2477
        %v2495 = vmul.f32 %v2011, %v2481
        %v2496 = vmul.f32 %v2010, %v2485
        %v2497 = vmul.f32 %v2009, %v2489
        %2498 = vst [vmem:[#allocation2] sm:$0xff] %v1728
        %2499 = vst [vmem:[#allocation2 + $0x8] sm:$0xff] %v1729
        %2500 = vst [vmem:[#allocation2 + $0x10] sm:$0xff] %v1730
        %2501 = vst [vmem:[#allocation2 + $0x18] sm:$0xff] %v1731
        %2502 = vst [vmem:[#allocation2 + $0x20] sm:$0xff] %v1768
        %2503 = vst [vmem:[#allocation2 + $0x28] sm:$0xff] %v1769
        %2504 = vst [vmem:[#allocation2 + $0x30] sm:$0xff] %v1770
        %2505 = vst [vmem:[#allocation2 + $0x38] sm:$0xff] %v1771
        %2506 = vst [vmem:[#allocation2 + $0x40] sm:$0xff] %v1808
        %2507 = vst [vmem:[#allocation2 + $0x48] sm:$0xff] %v1809
        %2508 = vst [vmem:[#allocation2 + $0x50] sm:$0xff] %v1810
        %2509 = vst [vmem:[#allocation2 + $0x58] sm:$0xff] %v1811
        %2510 = vst [vmem:[#allocation2 + $0x60] sm:$0xff] %v1848
        %2511 = vst [vmem:[#allocation2 + $0x68] sm:$0xff] %v1849
        %2512 = vst [vmem:[#allocation2 + $0x70] sm:$0xff] %v1850
        %2513 = vst [vmem:[#allocation2 + $0x78] sm:$0xff] %v1851
        %2514 = vst [vmem:[#allocation2 + $0x80] sm:$0xff] %v1875
        %2515 = vst [vmem:[#allocation2 + $0x88] sm:$0xff] %v1876
        %2516 = vst [vmem:[#allocation2 + $0x90] sm:$0xff] %v1877
        %2517 = vst [vmem:[#allocation2 + $0x98] sm:$0xff] %v1878
        %2518 = vst [vmem:[#allocation2 + $0xa0] sm:$0xff] %v1915
        %2519 = vst [vmem:[#allocation2 + $0xa8] sm:$0xff] %v1916
        %2520 = vst [vmem:[#allocation2 + $0xb0] sm:$0xff] %v1917
        %2521 = vst [vmem:[#allocation2 + $0xb8] sm:$0xff] %v1918
        %2522 = vst [vmem:[#allocation2 + $0xc0] sm:$0xff] %v1955
        %2523 = vst [vmem:[#allocation2 + $0xc8] sm:$0xff] %v1956
        %2524 = vst [vmem:[#allocation2 + $0xd0] sm:$0xff] %v1957
        %2525 = vst [vmem:[#allocation2 + $0xd8] sm:$0xff] %v1958
        %2526 = vst [vmem:[#allocation2 + $0xe0] sm:$0xff] %v1995
        %2527 = vst [vmem:[#allocation2 + $0xe8] sm:$0xff] %v1996
        %2528 = vst [vmem:[#allocation2 + $0xf0] sm:$0xff] %v1997
        %2529 = vst [vmem:[#allocation2 + $0xf8] sm:$0xff] %v1998
        %2530 = vst [vmem:[#allocation2 + $0x100] sm:$0xff] %v2035
        %2531 = vst [vmem:[#allocation2 + $0x108] sm:$0xff] %v2036
        %2532 = vst [vmem:[#allocation2 + $0x110] sm:$0xff] %v2037
        %2533 = vst [vmem:[#allocation2 + $0x118] sm:$0xff] %v2038
        %2534 = vst [vmem:[#allocation2 + $0x120] sm:$0xff] %v2062
        %2535 = vst [vmem:[#allocation2 + $0x128] sm:$0xff] %v2063
        %2536 = vst [vmem:[#allocation2 + $0x130] sm:$0xff] %v2064
        %2537 = vst [vmem:[#allocation2 + $0x138] sm:$0xff] %v2065
        %2538 = vst [vmem:[#allocation2 + $0x140] sm:$0xff] %v2089
        %2539 = vst [vmem:[#allocation2 + $0x148] sm:$0xff] %v2090
        %2540 = vst [vmem:[#allocation2 + $0x150] sm:$0xff] %v2091
        %2541 = vst [vmem:[#allocation2 + $0x158] sm:$0xff] %v2092
        %2542 = vst [vmem:[#allocation2 + $0x160] sm:$0xff] %v2116
        %2543 = vst [vmem:[#allocation2 + $0x168] sm:$0xff] %v2117
        %2544 = vst [vmem:[#allocation2 + $0x170] sm:$0xff] %v2118
        %2545 = vst [vmem:[#allocation2 + $0x178] sm:$0xff] %v2119
        %2546 = vst [vmem:[#allocation2 + $0x180] sm:$0xff] %v2143
        %2547 = vst [vmem:[#allocation2 + $0x188] sm:$0xff] %v2144
        %2548 = vst [vmem:[#allocation2 + $0x190] sm:$0xff] %v2145
        %2549 = vst [vmem:[#allocation2 + $0x198] sm:$0xff] %v2146
        %2550 = vst [vmem:[#allocation2 + $0x1a0] sm:$0xff] %v1689
        %2551 = vst [vmem:[#allocation2 + $0x1a8] sm:$0xff] %v1690
        %2552 = vst [vmem:[#allocation2 + $0x1b0] sm:$0xff] %v1691
        %2553 = vst [vmem:[#allocation2 + $0x1b8] sm:$0xff] %v1692
        %2554 = vst [vmem:[#allocation2 + $0x1c0] sm:$0xff] %v2170
        %2555 = vst [vmem:[#allocation2 + $0x1c8] sm:$0xff] %v2171
        %2556 = vst [vmem:[#allocation2 + $0x1d0] sm:$0xff] %v2172
        %2557 = vst [vmem:[#allocation2 + $0x1d8] sm:$0xff] %v2173
        %2558 = vst [vmem:[#allocation2 + $0x1e0] sm:$0xff] %v2197
        %2559 = vst [vmem:[#allocation2 + $0x1e8] sm:$0xff] %v2198
        %2560 = vst [vmem:[#allocation2 + $0x1f0] sm:$0xff] %v2199
        %2561 = vst [vmem:[#allocation2 + $0x1f8] sm:$0xff] %v2200
        %2562 = vst [vmem:[#allocation2 + $0x200] sm:$0xff] %v2224
        %2563 = vst [vmem:[#allocation2 + $0x208] sm:$0xff] %v2225
        %2564 = vst [vmem:[#allocation2 + $0x210] sm:$0xff] %v2226
        %2565 = vst [vmem:[#allocation2 + $0x218] sm:$0xff] %v2227
        %2566 = vst [vmem:[#allocation2 + $0x220] sm:$0xff] %v2251
        %2567 = vst [vmem:[#allocation2 + $0x228] sm:$0xff] %v2252
        %2568 = vst [vmem:[#allocation2 + $0x230] sm:$0xff] %v2253
        %2569 = vst [vmem:[#allocation2 + $0x238] sm:$0xff] %v2254
        %2570 = vst [vmem:[#allocation2 + $0x240] sm:$0xff] %v2278
        %2571 = vst [vmem:[#allocation2 + $0x248] sm:$0xff] %v2279
        %2572 = vst [vmem:[#allocation2 + $0x250] sm:$0xff] %v2280
        %2573 = vst [vmem:[#allocation2 + $0x258] sm:$0xff] %v2281
        %2574 = vst [vmem:[#allocation2 + $0x260] sm:$0xff] %v2305
        %2575 = vst [vmem:[#allocation2 + $0x268] sm:$0xff] %v2306
        %2576 = vst [vmem:[#allocation2 + $0x270] sm:$0xff] %v2307
        %2577 = vst [vmem:[#allocation2 + $0x278] sm:$0xff] %v2308
        %2578 = vst [vmem:[#allocation2 + $0x280] sm:$0xff] %v2332
        %2579 = vst [vmem:[#allocation2 + $0x288] sm:$0xff] %v2333
        %2580 = vst [vmem:[#allocation2 + $0x290] sm:$0xff] %v2334
        %2581 = vst [vmem:[#allocation2 + $0x298] sm:$0xff] %v2335
        %2582 = vst [vmem:[#allocation2 + $0x2a0] sm:$0xff] %v2359
        %2583 = vst [vmem:[#allocation2 + $0x2a8] sm:$0xff] %v2360
        %2584 = vst [vmem:[#allocation2 + $0x2b0] sm:$0xff] %v2361
        %2585 = vst [vmem:[#allocation2 + $0x2b8] sm:$0xff] %v2362
        %2586 = vst [vmem:[#allocation2 + $0x2c0] sm:$0xff] %v2386
        %2587 = vst [vmem:[#allocation2 + $0x2c8] sm:$0xff] %v2387
        %2588 = vst [vmem:[#allocation2 + $0x2d0] sm:$0xff] %v2388
        %2589 = vst [vmem:[#allocation2 + $0x2d8] sm:$0xff] %v2389
        %2590 = vst [vmem:[#allocation2 + $0x2e0] sm:$0xff] %v2413
        %2591 = vst [vmem:[#allocation2 + $0x2e8] sm:$0xff] %v2414
        %2592 = vst [vmem:[#allocation2 + $0x2f0] sm:$0xff] %v2415
        %2593 = vst [vmem:[#allocation2 + $0x2f8] sm:$0xff] %v2416
        %2594 = vst [vmem:[#allocation2 + $0x300] sm:$0xff] %v2440
        %2595 = vst [vmem:[#allocation2 + $0x308] sm:$0xff] %v2441
        %2596 = vst [vmem:[#allocation2 + $0x310] sm:$0xff] %v2442
        %2597 = vst [vmem:[#allocation2 + $0x318] sm:$0xff] %v2443
        %2598 = vst [vmem:[#allocation2 + $0x320] sm:$0xff] %v2467
        %2599 = vst [vmem:[#allocation2 + $0x328] sm:$0xff] %v2468
        %2600 = vst [vmem:[#allocation2 + $0x330] sm:$0xff] %v2469
        %2601 = vst [vmem:[#allocation2 + $0x338] sm:$0xff] %v2470
        %2602 = vst [vmem:[#allocation2 + $0x340] sm:$0xff] %v2494
        %2603 = vst [vmem:[#allocation2 + $0x348] sm:$0xff] %v2495
        %2604 = vst [vmem:[#allocation2 + $0x350] sm:$0xff] %v2496
        %2605 = vst [vmem:[#allocation2 + $0x358] sm:$0xff] %v2497
        %v2606 = vld [vmem:[#allocation2] sm:$0xff]
        %v2607 = vld [vmem:[#allocation2 + $0x8] sm:$0xff]
        %v2608 = vld [vmem:[#allocation2 + $0x10] sm:$0xff]
        %v2609 = vld [vmem:[#allocation2 + $0x18] sm:$0xff]
        %v2610 = vld [vmem:[#allocation2 + $0x20] sm:$0xff]
        %v2611 = vld [vmem:[#allocation2 + $0x28] sm:$0xff]
        %v2612 = vld [vmem:[#allocation2 + $0x30] sm:$0xff]
        %v2613 = vld [vmem:[#allocation2 + $0x38] sm:$0xff]
        %v2614 = vld [vmem:[#allocation2 + $0x40] sm:$0xff]
        %v2615 = vld [vmem:[#allocation2 + $0x48] sm:$0xff]
        %v2616 = vld [vmem:[#allocation2 + $0x50] sm:$0xff]
        %v2617 = vld [vmem:[#allocation2 + $0x58] sm:$0xff]
        %v2618 = vld [vmem:[#allocation2 + $0x60] sm:$0xff]
        %v2619 = vld [vmem:[#allocation2 + $0x68] sm:$0xff]
        %v2620 = vld [vmem:[#allocation2 + $0x70] sm:$0xff]
        %v2621 = vld [vmem:[#allocation2 + $0x78] sm:$0xff]
        %v2622 = vld [vmem:[#allocation2 + $0x80] sm:$0xff]
        %v2623 = vld [vmem:[#allocation2 + $0x88] sm:$0xff]
        %v2624 = vld [vmem:[#allocation2 + $0x90] sm:$0xff]
        %v2625 = vld [vmem:[#allocation2 + $0x98] sm:$0xff]
        %v2626 = vld [vmem:[#allocation2 + $0xa0] sm:$0xff]
        %v2627 = vld [vmem:[#allocation2 + $0xa8] sm:$0xff]
        %v2628 = vld [vmem:[#allocation2 + $0xb0] sm:$0xff]
        %v2629 = vld [vmem:[#allocation2 + $0xb8] sm:$0xff]
        %v2630 = vld [vmem:[#allocation2 + $0xc0] sm:$0xff]
        %v2631 = vld [vmem:[#allocation2 + $0xc8] sm:$0xff]
        %v2632 = vld [vmem:[#allocation2 + $0xd0] sm:$0xff]
        %v2633 = vld [vmem:[#allocation2 + $0xd8] sm:$0xff]
        %v2634 = vld [vmem:[#allocation2 + $0xe0] sm:$0xff]
        %v2635 = vld [vmem:[#allocation2 + $0xe8] sm:$0xff]
        %v2636 = vld [vmem:[#allocation2 + $0xf0] sm:$0xff]
        %v2637 = vld [vmem:[#allocation2 + $0xf8] sm:$0xff]
        %v2638 = vld [vmem:[#allocation2 + $0x100] sm:$0xff]
        %v2639 = vld [vmem:[#allocation2 + $0x108] sm:$0xff]
        %v2640 = vld [vmem:[#allocation2 + $0x110] sm:$0xff]
        %v2641 = vld [vmem:[#allocation2 + $0x118] sm:$0xff]
        %v2642 = vld [vmem:[#allocation2 + $0x120] sm:$0xff]
        %v2643 = vld [vmem:[#allocation2 + $0x128] sm:$0xff]
        %v2644 = vld [vmem:[#allocation2 + $0x130] sm:$0xff]
        %v2645 = vld [vmem:[#allocation2 + $0x138] sm:$0xff]
        %v2646 = vld [vmem:[#allocation2 + $0x140] sm:$0xff]
        %v2647 = vld [vmem:[#allocation2 + $0x148] sm:$0xff]
        %v2648 = vld [vmem:[#allocation2 + $0x150] sm:$0xff]
        %v2649 = vld [vmem:[#allocation2 + $0x158] sm:$0xff]
        %v2650 = vld [vmem:[#allocation2 + $0x160] sm:$0xff]
        %v2651 = vld [vmem:[#allocation2 + $0x168] sm:$0xff]
        %v2652 = vld [vmem:[#allocation2 + $0x170] sm:$0xff]
        %v2653 = vld [vmem:[#allocation2 + $0x178] sm:$0xff]
        %v2654 = vld [vmem:[#allocation2 + $0x180] sm:$0xff]
        %v2655 = vld [vmem:[#allocation2 + $0x188] sm:$0xff]
        %v2656 = vld [vmem:[#allocation2 + $0x190] sm:$0xff]
        %v2657 = vld [vmem:[#allocation2 + $0x198] sm:$0xff]
        %v2658 = vld [vmem:[#allocation2 + $0x1a0] sm:$0xff]
        %v2659 = vld [vmem:[#allocation2 + $0x1a8] sm:$0xff]
        %v2660 = vld [vmem:[#allocation2 + $0x1b0] sm:$0xff]
        %v2661 = vld [vmem:[#allocation2 + $0x1b8] sm:$0xff]
        %v2662 = vld [vmem:[#allocation2 + $0x1c0] sm:$0xff]
        %v2663 = vld [vmem:[#allocation2 + $0x1c8] sm:$0xff]
        %v2664 = vld [vmem:[#allocation2 + $0x1d0] sm:$0xff]
        %v2665 = vld [vmem:[#allocation2 + $0x1d8] sm:$0xff]
        %v2666 = vld [vmem:[#allocation2 + $0x1e0] sm:$0xff]
        %v2667 = vld [vmem:[#allocation2 + $0x1e8] sm:$0xff]
        %v2668 = vld [vmem:[#allocation2 + $0x1f0] sm:$0xff]
        %v2669 = vld [vmem:[#allocation2 + $0x1f8] sm:$0xff]
        %v2670 = vld [vmem:[#allocation2 + $0x200] sm:$0xff]
        %v2671 = vld [vmem:[#allocation2 + $0x208] sm:$0xff]
        %v2672 = vld [vmem:[#allocation2 + $0x210] sm:$0xff]
        %v2673 = vld [vmem:[#allocation2 + $0x218] sm:$0xff]
        %v2674 = vld [vmem:[#allocation2 + $0x220] sm:$0xff]
        %v2675 = vld [vmem:[#allocation2 + $0x228] sm:$0xff]
        %v2676 = vld [vmem:[#allocation2 + $0x230] sm:$0xff]
        %v2677 = vld [vmem:[#allocation2 + $0x238] sm:$0xff]
        %v2678 = vld [vmem:[#allocation2 + $0x240] sm:$0xff]
        %v2679 = vld [vmem:[#allocation2 + $0x248] sm:$0xff]
        %v2680 = vld [vmem:[#allocation2 + $0x250] sm:$0xff]
        %v2681 = vld [vmem:[#allocation2 + $0x258] sm:$0xff]
        %v2682 = vld [vmem:[#allocation2 + $0x260] sm:$0xff]
        %v2683 = vld [vmem:[#allocation2 + $0x268] sm:$0xff]
        %v2684 = vld [vmem:[#allocation2 + $0x270] sm:$0xff]
        %v2685 = vld [vmem:[#allocation2 + $0x278] sm:$0xff]
        %v2686 = vld [vmem:[#allocation2 + $0x280] sm:$0xff]
        %v2687 = vld [vmem:[#allocation2 + $0x288] sm:$0xff]
        %v2688 = vld [vmem:[#allocation2 + $0x290] sm:$0xff]
        %v2689 = vld [vmem:[#allocation2 + $0x298] sm:$0xff]
        %v2690 = vld [vmem:[#allocation2 + $0x2a0] sm:$0xff]
        %v2691 = vld [vmem:[#allocation2 + $0x2a8] sm:$0xff]
        %v2692 = vld [vmem:[#allocation2 + $0x2b0] sm:$0xff]
        %v2693 = vld [vmem:[#allocation2 + $0x2b8] sm:$0xff]
        %v2694 = vld [vmem:[#allocation2 + $0x2c0] sm:$0xff]
        %v2695 = vld [vmem:[#allocation2 + $0x2c8] sm:$0xff]
        %v2696 = vld [vmem:[#allocation2 + $0x2d0] sm:$0xff]
        %v2697 = vld [vmem:[#allocation2 + $0x2d8] sm:$0xff]
        %v2698 = vld [vmem:[#allocation2 + $0x2e0] sm:$0xff]
        %v2699 = vld [vmem:[#allocation2 + $0x2e8] sm:$0xff]
        %v2700 = vld [vmem:[#allocation2 + $0x2f0] sm:$0xff]
        %v2701 = vld [vmem:[#allocation2 + $0x2f8] sm:$0xff]
        %v2702 = vld [vmem:[#allocation2 + $0x300] sm:$0xff]
        %v2703 = vld [vmem:[#allocation2 + $0x308] sm:$0xff]
        %v2704 = vld [vmem:[#allocation2 + $0x310] sm:$0xff]
        %v2705 = vld [vmem:[#allocation2 + $0x318] sm:$0xff]
        %v2706 = vld [vmem:[#allocation2 + $0x320] sm:$0xff]
        %v2707 = vld [vmem:[#allocation2 + $0x328] sm:$0xff]
        %v2708 = vld [vmem:[#allocation2 + $0x330] sm:$0xff]
        %v2709 = vld [vmem:[#allocation2 + $0x338] sm:$0xff]
        %v2710 = vld [vmem:[#allocation2 + $0x340] sm:$0xff]
        %v2711 = vld [vmem:[#allocation2 + $0x348] sm:$0xff]
        %v2712 = vld [vmem:[#allocation2 + $0x350] sm:$0xff]
        %v2713 = vld [vmem:[#allocation2 + $0x358] sm:$0xff]
        %v2714 = vld [vmem:[%s5] sm:$0xff]
        %v2715 = vld [vmem:[%s5 + $0x8] sm:$0xff]
        %v2717 = vsel %vm1515, %v2715, 0
        %2719 = vmatprep.subr.mxu0 %v2607
        %2720 = vmatpush1.msra.mxu0 %v2606
        %2721 = vmatprep.subr.mxu0 %v2611
        %2722 = vmatpush1.msra.mxu0 %v2610
        %2723 = vmatprep.subr.mxu0 %v2615
        %2724 = vmatpush1.msra.mxu0 %v2614
        %2725 = vmatprep.subr.mxu0 %v2619
        %2726 = vmatpush1.msra.mxu0 %v2618
        %2727 = vmatprep.subr.mxu0 %v2623
        %2728 = vmatpush1.msra.mxu0 %v2622
        %2729 = vmatprep.subr.mxu0 %v2627
        %2730 = vmatpush1.msra.mxu0 %v2626
        %2731 = vmatprep.subr.mxu0 %v2631
        %2732 = vmatpush1.msra.mxu0 %v2630
        %2733 = vmatprep.subr.mxu0 %v2635
        %2734 = vmatpush1.msra.mxu0 %v2634
        %2735 = vmatprep.subr.mxu0 %v2639
        %2736 = vmatpush1.msra.mxu0 %v2638
        %2737 = vmatprep.subr.mxu0 %v2643
        %2738 = vmatpush1.msra.mxu0 %v2642
        %2739 = vmatprep.subr.mxu0 %v2647
        %2740 = vmatpush1.msra.mxu0 %v2646
        %2741 = vmatprep.subr.mxu0 %v2651
        %2742 = vmatpush1.msra.mxu0 %v2650
        %2743 = vmatprep.subr.mxu0 %v2655
        %2744 = vmatpush1.msra.mxu0 %v2654
        %2745 = vmatprep.subr.mxu0 %v2659
        %2746 = vmatpush1.msra.mxu0 %v2658
        %2747 = vmatprep.subr.mxu0 %v2663
        %2748 = vmatpush1.msra.mxu0 %v2662
        %2749 = vmatprep.subr.mxu0 %v2667
        %2750 = vmatpush1.msra.mxu0 %v2666
        %2751 = vmatprep.subr.mxu0 %v2671
        %2752 = vmatpush1.msra.mxu0 %v2670
        %2753 = vmatprep.subr.mxu0 %v2675
        %2754 = vmatpush1.msra.mxu0 %v2674
        %2755 = vmatprep.subr.mxu0 %v2679
        %2756 = vmatpush1.msra.mxu0 %v2678
        %2757 = vmatprep.subr.mxu0 %v2683
        %2758 = vmatpush1.msra.mxu0 %v2682
        %2759 = vmatprep.subr.mxu0 %v2687
        %2760 = vmatpush1.msra.mxu0 %v2686
        %2761 = vmatprep.subr.mxu0 %v2691
        %2762 = vmatpush1.msra.mxu0 %v2690
        %2763 = vmatprep.subr.mxu0 %v2695
        %2764 = vmatpush1.msra.mxu0 %v2694
        %2765 = vmatprep.subr.mxu0 %v2699
        %2766 = vmatpush1.msra.mxu0 %v2698
        %2767 = vmatprep.subr.mxu0 %v2703
        %2768 = vmatpush1.msra.mxu0 %v2702
        %2769 = vmatprep.subr.mxu0 %v2707
        %2770 = vmatpush1.msra.mxu0 %v2706
        %2771 = vmatprep.subr.mxu0 %v2711
        %2772 = vmatpush1.msra.mxu0 %v2710
        %2773 = vmatprep.subr.mxu0 0.0
        %2774 = vmatpush1.msra.mxu0 0.0
        %2775 = vmatprep.subr.mxu0 0.0
        %2776 = vmatpush1.msra.mxu0 0.0
        %2777 = vmatprep.subr.mxu0 0.0
        %2778 = vmatpush1.msra.mxu0 0.0
        %2779 = vmatprep.subr.mxu0 0.0
        %2780 = vmatpush1.msra.mxu0 0.0
        %2781 = vmatprep.subr.mxu0 0.0
        %2782 = vmatpush1.msra.mxu0 0.0
        %2783 = vmatprep.mubr.f32.mxu0 %v2717
        %2784 = vmatmul.mubr.f32.gmra.mrb[0].mxu0 %v2714
        %v2785 = vpop.f32.mrb[0].mxu0
        %v2786 = vadd.f32 0.0, %v2785
        %v2787 = vpop.f32.mrb[0].mxu0
        %v2788 = vadd.f32 0.0, %v2787
        %2789 = vdwg.mxu0
        %2790 = vmatprep.subr.mxu0 %v2609
        %2791 = vmatpush1.msra.mxu0 %v2608
        %2792 = vmatprep.subr.mxu0 %v2613
        %2793 = vmatpush1.msra.mxu0 %v2612
        %2794 = vmatprep.subr.mxu0 %v2617
        %2795 = vmatpush1.msra.mxu0 %v2616
        %2796 = vmatprep.subr.mxu0 %v2621
        %2797 = vmatpush1.msra.mxu0 %v2620
        %2798 = vmatprep.subr.mxu0 %v2625
        %2799 = vmatpush1.msra.mxu0 %v2624
        %2800 = vmatprep.subr.mxu0 %v2629
        %2801 = vmatpush1.msra.mxu0 %v2628
        %2802 = vmatprep.subr.mxu0 %v2633
        %2803 = vmatpush1.msra.mxu0 %v2632
        %2804 = vmatprep.subr.mxu0 %v2637
        %2805 = vmatpush1.msra.mxu0 %v2636
        %2806 = vmatprep.subr.mxu0 %v2641
        %2807 = vmatpush1.msra.mxu0 %v2640
        %2808 = vmatprep.subr.mxu0 %v2645
        %2809 = vmatpush1.msra.mxu0 %v2644
        %2810 = vmatprep.subr.mxu0 %v2649
        %2811 = vmatpush1.msra.mxu0 %v2648
        %2812 = vmatprep.subr.mxu0 %v2653
        %2813 = vmatpush1.msra.mxu0 %v2652
        %2814 = vmatprep.subr.mxu0 %v2657
        %2815 = vmatpush1.msra.mxu0 %v2656
        %2816 = vmatprep.subr.mxu0 %v2661
        %2817 = vmatpush1.msra.mxu0 %v2660
        %2818 = vmatprep.subr.mxu0 %v2665
        %2819 = vmatpush1.msra.mxu0 %v2664
        %2820 = vmatprep.subr.mxu0 %v2669
        %2821 = vmatpush1.msra.mxu0 %v2668
        %2822 = vmatprep.subr.mxu0 %v2673
        %2823 = vmatpush1.msra.mxu0 %v2672
        %2824 = vmatprep.subr.mxu0 %v2677
        %2825 = vmatpush1.msra.mxu0 %v2676
        %2826 = vmatprep.subr.mxu0 %v2681
        %2827 = vmatpush1.msra.mxu0 %v2680
        %2828 = vmatprep.subr.mxu0 %v2685
        %2829 = vmatpush1.msra.mxu0 %v2684
        %2830 = vmatprep.subr.mxu0 %v2689
        %2831 = vmatpush1.msra.mxu0 %v2688
        %2832 = vmatprep.subr.mxu0 %v2693
        %2833 = vmatpush1.msra.mxu0 %v2692
        %2834 = vmatprep.subr.mxu0 %v2697
        %2835 = vmatpush1.msra.mxu0 %v2696
        %2836 = vmatprep.subr.mxu0 %v2701
        %2837 = vmatpush1.msra.mxu0 %v2700
        %2838 = vmatprep.subr.mxu0 %v2705
        %2839 = vmatpush1.msra.mxu0 %v2704
        %2840 = vmatprep.subr.mxu0 %v2709
        %2841 = vmatpush1.msra.mxu0 %v2708
        %2842 = vmatprep.subr.mxu0 %v2713
        %2843 = vmatpush1.msra.mxu0 %v2712
        %2844 = vmatprep.subr.mxu0 0.0
        %2845 = vmatpush1.msra.mxu0 0.0
        %2846 = vmatprep.subr.mxu0 0.0
        %2847 = vmatpush1.msra.mxu0 0.0
        %2848 = vmatprep.subr.mxu0 0.0
        %2849 = vmatpush1.msra.mxu0 0.0
        %2850 = vmatprep.subr.mxu0 0.0
        %2851 = vmatpush1.msra.mxu0 0.0
        %2852 = vmatprep.subr.mxu0 0.0
        %2853 = vmatpush1.msra.mxu0 0.0
        %2854 = vmatprep.mubr.f32.mxu0 %v2717
        %2855 = vmatmul.mubr.f32.gmra.mrb[0].mxu0 %v2714
        %v2856 = vpop.f32.mrb[0].mxu0
        %v2857 = vadd.f32 0.0, %v2856
        %v2858 = vpop.f32.mrb[0].mxu0
        %v2859 = vadd.f32 0.0, %v2858
        %2860 = vdwg.mxu0
        %v2861 = vld [vmem:[%s6] sm:$0xff]
        %2863 = vset.pattern.permute.xlu0 0
        %2864 = vperm.xlu0 %2863, %v2861
        %v2865 = vpop.permute.xlu0 %2864
        %v2867 = vmul.f32 %v2786, %v2865
        %v2868 = vmul.f32 %v2788, %v2865
        %v2869 = vmul.f32 %v2857, %v2865
        %v2870 = vmul.f32 %v2859, %v2865
        %v2871 = vld [vmem:[%s7] sm:$0xff]
        %2873 = vset.pattern.permute.xlu0 0
        %2874 = vperm.xlu0 %2873, %v2871
        %v2875 = vpop.permute.xlu0 %2874
        %v2877 = vadd.f32 %v2867, %v2875
        %v2878 = vadd.f32 %v2868, %v2875
        %v2879 = vadd.f32 %v2869, %v2875
        %v2880 = vadd.f32 %v2870, %v2875
        %vm2881 = vcmp.ge.f32.partialorder %v2877, 0.0
        %vm2882 = vcmp.ge.f32.partialorder %v2878, 0.0
        %vm2883 = vcmp.ge.f32.partialorder %v2879, 0.0
        %vm2884 = vcmp.ge.f32.partialorder %v2880, 0.0
        %v2885 = vmul.f32 %v2877, 0.01
        %v2886 = vmul.f32 %v2878, 0.01
        %v2887 = vmul.f32 %v2879, 0.01
        %v2888 = vmul.f32 %v2880, 0.01
        %v2889 = vsel %vm2881, %v2877, %v2885
        %v2890 = vsel %vm2882, %v2878, %v2886
        %v2891 = vsel %vm2883, %v2879, %v2887
        %v2892 = vsel %vm2884, %v2880, %v2888
        %v2893 = vld [vmem:[%s9] sm:$0xff]
        %vm2894 = vcmask 64512
        %v2896 = vsel %vm2894, %v2893, 0
        %2898 = vmatprep.subr.mxu0 %v2890
        %2899 = vmatpush1.msra.mxu0 %v2889
        %2900 = vmatprep.subr.mxu0 0.0
        %2901 = vmatpush1.msra.mxu0 0.0
        %2902 = vmatprep.subr.mxu0 0.0
        %2903 = vmatpush1.msra.mxu0 0.0
        %2904 = vmatprep.subr.mxu0 0.0
        %2905 = vmatpush1.msra.mxu0 0.0
        %2906 = vmatprep.subr.mxu0 0.0
        %2907 = vmatpush1.msra.mxu0 0.0
        %2908 = vmatprep.subr.mxu0 0.0
        %2909 = vmatpush1.msra.mxu0 0.0
        %2910 = vmatprep.subr.mxu0 0.0
        %2911 = vmatpush1.msra.mxu0 0.0
        %2912 = vmatprep.subr.mxu0 0.0
        %2913 = vmatpush1.msra.mxu0 0.0
        %2914 = vmatprep.subr.mxu0 0.0
        %2915 = vmatpush1.msra.mxu0 0.0
        %2916 = vmatprep.subr.mxu0 0.0
        %2917 = vmatpush1.msra.mxu0 0.0
        %2918 = vmatprep.subr.mxu0 0.0
        %2919 = vmatpush1.msra.mxu0 0.0
        %2920 = vmatprep.subr.mxu0 0.0
        %2921 = vmatpush1.msra.mxu0 0.0
        %2922 = vmatprep.subr.mxu0 0.0
        %2923 = vmatpush1.msra.mxu0 0.0
        %2924 = vmatprep.subr.mxu0 0.0
        %2925 = vmatpush1.msra.mxu0 0.0
        %2926 = vmatprep.subr.mxu0 0.0
        %2927 = vmatpush1.msra.mxu0 0.0
        %2928 = vmatprep.subr.mxu0 0.0
        %2929 = vmatpush1.msra.mxu0 0.0
        %2930 = vmatprep.subr.mxu0 0.0
        %2931 = vmatpush1.msra.mxu0 0.0
        %2932 = vmatprep.subr.mxu0 0.0
        %2933 = vmatpush1.msra.mxu0 0.0
        %2934 = vmatprep.subr.mxu0 0.0
        %2935 = vmatpush1.msra.mxu0 0.0
        %2936 = vmatprep.subr.mxu0 0.0
        %2937 = vmatpush1.msra.mxu0 0.0
        %2938 = vmatprep.subr.mxu0 0.0
        %2939 = vmatpush1.msra.mxu0 0.0
        %2940 = vmatprep.subr.mxu0 0.0
        %2941 = vmatpush1.msra.mxu0 0.0
        %2942 = vmatprep.subr.mxu0 0.0
        %2943 = vmatpush1.msra.mxu0 0.0
        %2944 = vmatprep.subr.mxu0 0.0
        %2945 = vmatpush1.msra.mxu0 0.0
        %2946 = vmatprep.subr.mxu0 0.0
        %2947 = vmatpush1.msra.mxu0 0.0
        %2948 = vmatprep.subr.mxu0 0.0
        %2949 = vmatpush1.msra.mxu0 0.0
        %2950 = vmatprep.subr.mxu0 0.0
        %2951 = vmatpush1.msra.mxu0 0.0
        %2952 = vmatprep.subr.mxu0 0.0
        %2953 = vmatpush1.msra.mxu0 0.0
        %2954 = vmatprep.subr.mxu0 0.0
        %2955 = vmatpush1.msra.mxu0 0.0
        %2956 = vmatprep.subr.mxu0 0.0
        %2957 = vmatpush1.msra.mxu0 0.0
        %2958 = vmatprep.subr.mxu0 0.0
        %2959 = vmatpush1.msra.mxu0 0.0
        %2960 = vmatprep.subr.mxu0 0.0
        %2961 = vmatpush1.msra.mxu0 0.0
        %2962 = vmatprep.mubr.f32.mxu0 0.0
        %2963 = vmatmul.mubr.f32.gmra.mrb[0].mxu0 %v2896
        %v2964 = vpop.f32.mrb[0].mxu0
        %v2965 = vadd.f32 0.0, %v2964
        %v2966 = vpop.f32.mrb[0].mxu0
        %v2967 = vadd.f32 0.0, %v2966
        %2968 = vdwg.mxu0
        %2969 = vmatprep.subr.mxu0 %v2892
        %2970 = vmatpush1.msra.mxu0 %v2891
        %2971 = vmatprep.subr.mxu0 0.0
        %2972 = vmatpush1.msra.mxu0 0.0
        %2973 = vmatprep.subr.mxu0 0.0
        %2974 = vmatpush1.msra.mxu0 0.0
        %2975 = vmatprep.subr.mxu0 0.0
        %2976 = vmatpush1.msra.mxu0 0.0
        %2977 = vmatprep.subr.mxu0 0.0
        %2978 = vmatpush1.msra.mxu0 0.0
        %2979 = vmatprep.subr.mxu0 0.0
        %2980 = vmatpush1.msra.mxu0 0.0
        %2981 = vmatprep.subr.mxu0 0.0
        %2982 = vmatpush1.msra.mxu0 0.0
        %2983 = vmatprep.subr.mxu0 0.0
        %2984 = vmatpush1.msra.mxu0 0.0
        %2985 = vmatprep.subr.mxu0 0.0
        %2986 = vmatpush1.msra.mxu0 0.0
        %2987 = vmatprep.subr.mxu0 0.0
        %2988 = vmatpush1.msra.mxu0 0.0
        %2989 = vmatprep.subr.mxu0 0.0
        %2990 = vmatpush1.msra.mxu0 0.0
        %2991 = vmatprep.subr.mxu0 0.0
        %2992 = vmatpush1.msra.mxu0 0.0
        %2993 = vmatprep.subr.mxu0 0.0
        %2994 = vmatpush1.msra.mxu0 0.0
        %2995 = vmatprep.subr.mxu0 0.0
        %2996 = vmatpush1.msra.mxu0 0.0
        %2997 = vmatprep.subr.mxu0 0.0
        %2998 = vmatpush1.msra.mxu0 0.0
        %2999 = vmatprep.subr.mxu0 0.0
        %3000 = vmatpush1.msra.mxu0 0.0
        %3001 = vmatprep.subr.mxu0 0.0
        %3002 = vmatpush1.msra.mxu0 0.0
        %3003 = vmatprep.subr.mxu0 0.0
        %3004 = vmatpush1.msra.mxu0 0.0
        %3005 = vmatprep.subr.mxu0 0.0
        %3006 = vmatpush1.msra.mxu0 0.0
        %3007 = vmatprep.subr.mxu0 0.0
        %3008 = vmatpush1.msra.mxu0 0.0
        %3009 = vmatprep.subr.mxu0 0.0
        %3010 = vmatpush1.msra.mxu0 0.0
        %3011 = vmatprep.subr.mxu0 0.0
        %3012 = vmatpush1.msra.mxu0 0.0
        %3013 = vmatprep.subr.mxu0 0.0
        %3014 = vmatpush1.msra.mxu0 0.0
        %3015 = vmatprep.subr.mxu0 0.0
        %3016 = vmatpush1.msra.mxu0 0.0
        %3017 = vmatprep.subr.mxu0 0.0
        %3018 = vmatpush1.msra.mxu0 0.0
        %3019 = vmatprep.subr.mxu0 0.0
        %3020 = vmatpush1.msra.mxu0 0.0
        %3021 = vmatprep.subr.mxu0 0.0
        %3022 = vmatpush1.msra.mxu0 0.0
        %3023 = vmatprep.subr.mxu0 0.0
        %3024 = vmatpush1.msra.mxu0 0.0
        %3025 = vmatprep.subr.mxu0 0.0
        %3026 = vmatpush1.msra.mxu0 0.0
        %3027 = vmatprep.subr.mxu0 0.0
        %3028 = vmatpush1.msra.mxu0 0.0
        %3029 = vmatprep.subr.mxu0 0.0
        %3030 = vmatpush1.msra.mxu0 0.0
        %3031 = vmatprep.subr.mxu0 0.0
        %3032 = vmatpush1.msra.mxu0 0.0
        %3033 = vmatprep.mubr.f32.mxu0 0.0
        %3034 = vmatmul.mubr.f32.gmra.mrb[0].mxu0 %v2896
        %v3035 = vpop.f32.mrb[0].mxu0
        %v3036 = vadd.f32 0.0, %v3035
        %v3037 = vpop.f32.mrb[0].mxu0
        %v3038 = vadd.f32 0.0, %v3037
        %3039 = vdwg.mxu0
        %v3040 = vld [vmem:[%s10] sm:$0xff]
        %3042 = vset.pattern.permute.xlu0 0
        %3043 = vperm.xlu0 %3042, %v3040
        %v3044 = vpop.permute.xlu0 %3043
        %v3046 = vmul.f32 %v2965, %v3044
        %v3047 = vmul.f32 %v2967, %v3044
        %v3048 = vmul.f32 %v3036, %v3044
        %v3049 = vmul.f32 %v3038, %v3044
        %v3050 = vld [vmem:[%s11] sm:$0xff]
        %3052 = vset.pattern.permute.xlu0 0
        %3053 = vperm.xlu0 %3052, %v3050
        %v3054 = vpop.permute.xlu0 %3053
        %v3056 = vadd.f32 %v3046, %v3054
        %v3057 = vadd.f32 %v3047, %v3054
        %v3058 = vadd.f32 %v3048, %v3054
        %v3059 = vadd.f32 %v3049, %v3054
        %vm3060 = vcmp.ge.f32.partialorder %v3056, 0.0
        %vm3061 = vcmp.ge.f32.partialorder %v3057, 0.0
        %vm3062 = vcmp.ge.f32.partialorder %v3058, 0.0
        %vm3063 = vcmp.ge.f32.partialorder %v3059, 0.0
        %v3064 = vmul.f32 %v3056, 0.01
        %v3065 = vmul.f32 %v3057, 0.01
        %v3066 = vmul.f32 %v3058, 0.01
        %v3067 = vmul.f32 %v3059, 0.01
        %v3068 = vsel %vm3060, %v3056, %v3064
        %v3069 = vsel %vm3061, %v3057, %v3065
        %v3070 = vsel %vm3062, %v3058, %v3066
        %v3071 = vsel %vm3063, %v3059, %v3067
        %v3072 = vadd.f32 %v3068, %v486
        %v3073 = vadd.f32 %v3069, %v487
        %v3074 = vadd.f32 %v3070, %v488
        %v3075 = vadd.f32 %v3071, %v489
        %vm3076 = vcmp.ge.f32.partialorder %v3072, 0.0
        %vm3077 = vcmp.ge.f32.partialorder %v3073, 0.0
        %vm3078 = vcmp.ge.f32.partialorder %v3074, 0.0
        %vm3079 = vcmp.ge.f32.partialorder %v3075, 0.0
        %v3080 = vmul.f32 %v3072, 0.01
        %v3081 = vmul.f32 %v3073, 0.01
        %v3082 = vmul.f32 %v3074, 0.01
        %v3083 = vmul.f32 %v3075, 0.01
        %v3084 = vsel %vm3076, %v3072, %v3080
        %v3085 = vsel %vm3077, %v3073, %v3081
        %v3086 = vsel %vm3078, %v3074, %v3082
        %v3087 = vsel %vm3079, %v3075, %v3083
        %3088 = vst [vmem:[%s485] sm:$0xff] %v3084
        %3089 = vst [vmem:[%s485 + $0x8] sm:$0xff] %v3085
        %3090 = vst [vmem:[%s485 + $0x10] sm:$0xff] %v3086
        %3091 = vst [vmem:[%s485 + $0x18] sm:$0xff] %v3087
        %s3092 = sand.u32 %s317, 1
        %s3093 = scalar_lea.sflag [#allocation5], %s3092
        %s3094 = sand.u32 %s317, 1
        %s3095 = smul.addr %s3094, 32
        %s3096 = scalar_lea.vmem [#allocation9], %s3095
        // Predicated region
        $region85: #{tpu_custom_call.1} parent=71 // pred_check
          %p3097 = pneg %p327
        $region86: #{tpu_custom_call.1} parent=71 // pred_check_branch
          %3099 = sbr.rel (%p3097) target = $region88
        $region87: #{tpu_custom_call.1} parent=71 // pred_region
          %s3101 = ssub.s32 512, 512
          %3102 = vsyncadd %s3093, %s3101
          %s3103 = smul.addr %s31, 4
          %s3104 = smul.addr %s3103, 128
          %s3105 = scalar_lea.hbm %s13, %s3104
          %s3107 = sshll.u32 %s3096, 4
          %s3108 = int_to_ptr.vmem [resolvable:$true] %s3107
          %3110 = dma.vmem_to_hbm [thread:$0]  %s3108, 512, %s3105, %s3093
        $region88: #{tpu_custom_call.1} parent=71 // pred_fallthru
          _
      $region72: #{tpu_custom_call.1} parent=5 // pred_fallthru
        _
      %p3111 = scmp.le.s32.totalorder 2, %s26
      // Predicated region
      $region89: #{tpu_custom_call.1} parent=5 // pred_check
        %p3112 = pneg %p3111
      $region90: #{tpu_custom_call.1} parent=5 // pred_check_branch
        %3114 = sbr.rel (%p3112) target = $region92
      $region91: #{tpu_custom_call.1} parent=5 // pred_region
        %s3115 = ssub.s32 %s26, 2
        // Predicated region
        $region93: #{tpu_custom_call.1} parent=91 // pred_check
          %p3116 = pneg %p333
        $region94: #{tpu_custom_call.1} parent=91 // pred_check_branch
          %3118 = sbr.rel (%p3116) target = $region96
        $region95: #{tpu_custom_call.1} parent=91 // pred_region
          %s3119 = sand.u32 %s318, 1
          %s3120 = scalar_lea.sflag [#allocation5], %s3119
          %s3121 = sand.u32 %s318, 1
          %s3122 = smul.addr %s3121, 32
          %s3123 = scalar_lea.vmem [#allocation9], %s3122
          %3124 = dma.done %s3120, 512
        $region96: #{tpu_custom_call.1} parent=91 // pred_fallthru
          _
      $region92: #{tpu_custom_call.1} parent=5 // pred_fallthru
        _
    $region6: #{tpu_custom_call.1} parent=1 // loop_footer
      %s30 = sadd.s32 1, %s26
    $region7: #{tpu_custom_call.1} parent=1 // loop_footer_branch
      %25 = sbr.rel target = $region3
    $region8: #{tpu_custom_call.1} parent=1 // loop_exit
      _
    %3125 = vsyncpa [#allocation4], 1
    %s3126 = scalar_lea.sflag [#allocation4], 1
    %3127 = vsyncpa %s3126, 1
    %3128 = vsyncpa [#allocation7], 1
    %3129 = vsyncpa [#allocation5], 1
    %s3130 = scalar_lea.sflag [#allocation5], 1
    %3131 = vsyncpa %s3130, 1

</llo_original>
